<compile_context>
chip_gen: v5e
topology: v5e:2x2
jax: 0.10.0
libtpu: 0.0.40
codegen_flags: <defaults>
</compile_context>

<pallas_src>
import functools
import math

import jax
import jax.numpy as jnp
from jax.experimental import pallas as pl
from jax.experimental.pallas import tpu as pltpu


# ----------------------------------------------------------------------------
# Hardware-derived VMEM budget / tiling
# ----------------------------------------------------------------------------

def _vmem_capacity_bytes():
    try:
        info = pltpu.get_tpu_info()
        for name in ("vmem_capacity_bytes", "vmem_size_bytes", "vmem_bytes"):
            v = getattr(info, name, None)
            if v:
                return int(v)
    except Exception:
        pass
    return None


_VMEM_CAP = _vmem_capacity_bytes()
if _VMEM_CAP is None:
    # Unknown chip: conservative settings that also fit v7x's 64 MiB VMEM.
    _VMEM_LIMIT = 48 * 1024 * 1024
    _MAX_SLAB_ROWS = 512
else:
    # ~48 MiB / 512-row slabs on v7x (64 MiB physical VMEM),
    # ~96 MiB / 1024-row slabs on v5e / v6e (128 MiB physical VMEM).
    _VMEM_LIMIT = min(_VMEM_CAP * 3 // 4, 100 * 1024 * 1024)
    _MAX_SLAB_ROWS = 512 if _VMEM_CAP <= 64 * 1024 * 1024 else 1024

_CPARAMS = pltpu.CompilerParams(
    dimension_semantics=("parallel",),   # shards grid steps across v7x's 2 TCs
    vmem_limit_bytes=_VMEM_LIMIT,
)


def _probe_weight_pipeline_mode():
    """pl.Buffered(1) if this jax build accepts it (single-buffer weights)."""
    try:
        mode = pl.Buffered(1)
        pl.BlockSpec((8, 128), lambda i: (0, 0), pipeline_mode=mode)
        return mode
    except Exception:
        return None


_WEIGHT_PIPELINE_MODE = _probe_weight_pipeline_mode()


def _rep_spec(arr):
    """Full-array block, same block at every grid step (replicated weights).

    Single-buffered when supported: the index_map never changes, so
    double-buffering these blocks is pure VMEM waste (matters on v7x)."""
    r = arr.ndim
    index_map = lambda *i, _r=r: (0,) * _r
    if _WEIGHT_PIPELINE_MODE is not None:
        return pl.BlockSpec(arr.shape, index_map,
                            pipeline_mode=_WEIGHT_PIPELINE_MODE)
    return pl.BlockSpec(arr.shape, index_map)


def _pick_nb(n, t, max_rows, min_steps=2):
    """Largest divisor nb of n such that 2-D (nb, ...) blocks satisfy the
    (8, 128) rule (nb % 8 == 0 or nb == n), the slab stays <= max_rows rows,
    and the grid keeps >= min_steps steps (double-buffering + v7x dual-TC).
    Falls back gracefully when n is too small."""
    cands = [nb for nb in range(1, n + 1)
             if n % nb == 0 and (nb % 8 == 0 or nb == n)]
    good = [nb for nb in cands if nb * t <= max_rows and n // nb >= min_steps]
    if good:
        return max(good)
    fitting = [nb for nb in cands if nb * t <= max_rows]
    if fitting:
        return max(fitting)
    return min(cands)


# ----------------------------------------------------------------------------
# Shared multi-head attention core (operates on values already in VMEM)
# ----------------------------------------------------------------------------

def _mha_core(x2, add_mask, bias, wq, bq, wk, bk, wv, bv, wo, bo,
              nb, T, num_heads):
    """BERT-style MHA over a slab of nb segments.

    x2:        (nb*T, d) bf16 rows
    add_mask:  (nb, 1, T) f32 additive mask
    bias:      (H, T, T) bf16 position bias, or None
    wq/wk/wv/wo: (d, d) bf16 ("x @ W" layout), bq/bk/bv/bo: (1, d) f32
    Returns (nb*T, d) f32.
    """
    d = x2.shape[-1]
    H = num_heads
    dh = d // H
    scale = 1.0 / math.sqrt(dh)

    # Fused projections: three full-width (nb*T, d) @ (d, d) MXU matmuls.
    q = (jnp.dot(x2, wq, preferred_element_type=jnp.float32) + bq
         ).astype(jnp.bfloat16).reshape(nb, T, d)
    k = (jnp.dot(x2, wk, preferred_element_type=jnp.float32) + bk
         ).astype(jnp.bfloat16).reshape(nb, T, d)
    v = (jnp.dot(x2, wv, preferred_element_type=jnp.float32) + bv
         ).astype(jnp.bfloat16).reshape(nb, T, d)

    # Per-head scores/softmax/context only; heads are static lane slices of the
    # fused projections and the contexts are re-assembled along the lane axis
    # so the output projection is ONE (nb*T, d) @ (d, d) matmul.
    # TODO(synk): switch to lax.fori_loop over a stacked head axis if the
    # unrolled loop shows vreg spills at H=12 (BERT scale).
    ctx_heads = []
    for h in range(H):
        qh = q[:, :, h * dh:(h + 1) * dh]                 # (nb, T, dh)
        kh = k[:, :, h * dh:(h + 1) * dh]
        vh = v[:, :, h * dh:(h + 1) * dh]
        s = jnp.einsum("nqc,nkc->nqk", qh, kh,
                       preferred_element_type=jnp.float32) * scale
        s = s + add_mask                                   # (nb, 1, T) broadcast
        if bias is not None:
            s = s + bias[h].astype(jnp.float32)            # (T, T) broadcast
        s = s - jnp.max(s, axis=-1, keepdims=True)
        p = jnp.exp(s)
        p = p * pl.reciprocal(jnp.sum(p, axis=-1, keepdims=True), approx=True)
        ctx_heads.append(jnp.einsum("nqk,nkc->nqc", p.astype(jnp.bfloat16), vh,
                                    preferred_element_type=jnp.float32))

    ctx = jnp.concatenate(ctx_heads, axis=-1).reshape(nb * T, d)
    out = jnp.dot(ctx.astype(jnp.bfloat16), wo,
                  preferred_element_type=jnp.float32) + bo
    return out


# ----------------------------------------------------------------------------
# Kernels
# ----------------------------------------------------------------------------

def _token_attn_pool_kernel(x_ref, mrow_ref, mcol_ref, bias_ref,
                            wq_ref, bq_ref, wk_ref, bk_ref, wv_ref, bv_ref,
                            wo_ref, bo_ref, wp_ref, bp_ref,
                            tok_out_ref, pool_out_ref, *, num_heads):
    """Token-level MHA fused with the SegmentPooler for a slab of nb segments."""
    nb, T, d = x_ref.shape
    x2 = x_ref[...].reshape(nb * T, d).astype(jnp.bfloat16)
    add_mask = (1.0 - mrow_ref[...]) * (-10000.0)            # (nb, 1, T)

    tok = _mha_core(x2, add_mask, bias_ref[...],
                    wq_ref[...], bq_ref[...], wk_ref[...], bk_ref[...],
                    wv_ref[...], bv_ref[...], wo_ref[...], bo_ref[...],
                    nb, T, num_heads).reshape(nb, T, d)       # f32
    tok_out_ref[...] = tok.astype(tok_out_ref.dtype)

    # --- SegmentPooler (token_states still resident in VMEM) ---
    mc = mcol_ref[...]                                        # (nb, T, 1) raw 0/1
    denom = 1e-6 + jnp.sum(mc, axis=1, keepdims=True)         # (nb, 1, 1)
    avg = jnp.sum(mc * tok, axis=1, keepdims=True) / denom    # (nb, 1, d)

    scores = jnp.sum(tok * avg, axis=-1, keepdims=True) * (1.0 / math.sqrt(d))
    scores = scores + mc             # faithful: the reference adds the RAW mask
    scores = scores - jnp.max(scores, axis=1, keepdims=True)
    p = jnp.exp(scores)
    p = p / jnp.sum(p, axis=1, keepdims=True)                 # exact (tiny)

    utt = jnp.sum(tok * p, axis=1, keepdims=True).reshape(nb, d)
    pool_out_ref[...] = (jnp.dot(utt.astype(jnp.bfloat16), wp_ref[...],
                                 preferred_element_type=jnp.float32)
                         + bp_ref[...]).astype(pool_out_ref.dtype)


def _utt_attn_kernel(x_ref, mrow_ref,
                     wq_ref, bq_ref, wk_ref, bk_ref, wv_ref, bv_ref,
                     wo_ref, bo_ref, o_ref, *, num_heads):
    """Plain MHA (utterance level, no position bias)."""
    nb, S, d = x_ref.shape
    x2 = x_ref[...].reshape(nb * S, d).astype(jnp.bfloat16)
    add_mask = (1.0 - mrow_ref[...]) * (-10000.0)             # (nb, 1, S)
    out = _mha_core(x2, add_mask, None,
                    wq_ref[...], bq_ref[...], wk_ref[...], bk_ref[...],
                    wv_ref[...], bv_ref[...], wo_ref[...], bo_ref[...],
                    nb, S, num_heads)
    o_ref[...] = out.reshape(nb, S, d).astype(o_ref.dtype)


def _update_ffn_kernel(u_ref, tok_ref, mcol_ref, ln1g_ref, ln1b_ref,
                       w1_ref, b1_ref, w2_ref, b2_ref, ln2g_ref, ln2b_ref,
                       o_ref, *, eps, ffn_chunk):
    """SegmentUpdater + LayerNorm + FFN (Intermediate/Output) for nb segments."""
    nb, T, d = tok_ref.shape
    tok = tok_ref[...].astype(jnp.float32)                    # (nb, T, d)
    u = u_ref[...].astype(jnp.float32)                        # (nb, 1, d)
    mc = mcol_ref[...]                                        # (nb, T, 1) raw 0/1

    # --- SegmentUpdater ---
    scores = jnp.sum(tok * u, axis=-1, keepdims=True) * (1.0 / math.sqrt(d))
    # faithful to the reference: adds exp((1-mask)*-1e5) = 1 unmasked, ~0 masked
    scores = scores + jnp.exp((1.0 - mc) * (-100000.0))
    scores = scores - jnp.max(scores, axis=1, keepdims=True)
    p = jnp.exp(scores)
    p = p / jnp.sum(p, axis=1, keepdims=True)                 # exact (tiny)
    h = tok + p * u                                           # (nb, T, d)

    # --- LayerNorm (attention block) ---
    mu = jnp.mean(h, axis=-1, keepdims=True)
    var = jnp.mean(jnp.square(h - mu), axis=-1, keepdims=True)
    h = (h - mu) * jax.lax.rsqrt(var + eps) * ln1g_ref[...] + ln1b_ref[...]

    # --- FFN: Intermediate (GELU) + Output (dense + residual + LayerNorm) ---
    h2 = h.reshape(nb * T, d)
    h2b = h2.astype(jnp.bfloat16)
    inter_total = w1_ref.shape[-1]
    acc = jnp.zeros((nb * T, d), jnp.float32)
    # K-tile the intermediate dim so the f32 inter slab stays small (one chunk
    # at small scale; matters at BERT scale on v7x's 64 MiB VMEM).
    for c0 in range(0, inter_total, ffn_chunk):
        c1 = min(c0 + ffn_chunk, inter_total)
        inter = (jnp.dot(h2b, w1_ref[:, c0:c1],
                         preferred_element_type=jnp.float32) + b1_ref[:, c0:c1])
        # TODO(synk): erf-GELU if the original config uses exact "gelu".
        inter = jax.nn.gelu(inter, approximate=True)
        acc = acc + jnp.dot(inter.astype(jnp.bfloat16), w2_ref[c0:c1, :],
                            preferred_element_type=jnp.float32)

    out = acc + b2_ref[...] + h2            # residual (dropout = identity in eval)
    mu2 = jnp.mean(out, axis=-1, keepdims=True)
    var2 = jnp.mean(jnp.square(out - mu2), axis=-1, keepdims=True)
    out = (out - mu2) * jax.lax.rsqrt(var2 + eps) * ln2g_ref[...] + ln2b_ref[...]
    o_ref[...] = out.reshape(nb, T, d).astype(o_ref.dtype)


# ----------------------------------------------------------------------------
# Wrappers (pallas_call plumbing)
# ----------------------------------------------------------------------------

def token_attn_pool(x, mask_row, mask_col, pos_bias, ap, pp, *, num_heads, nb):
    """x: (N, T, d) bf16, mask_row: (N, 1, T), mask_col: (N, T, 1),
    pos_bias: (H, T, T) bf16 -> (token_states bf16 (N, T, d), pooled f32 (N, d))."""
    N, T, d = x.shape
    kernel = functools.partial(_token_attn_pool_kernel, num_heads=num_heads)
    return pl.pallas_call(
        kernel,
        out_shape=(jax.ShapeDtypeStruct((N, T, d), jnp.bfloat16),
                   jax.ShapeDtypeStruct((N, d), jnp.float32)),
        grid=(N // nb,),
        in_specs=[
            pl.BlockSpec((nb, T, d), lambda i: (i, 0, 0)),
            pl.BlockSpec((nb, 1, T), lambda i: (i, 0, 0)),
            pl.BlockSpec((nb, T, 1), lambda i: (i, 0, 0)),
            _rep_spec(pos_bias),
            _rep_spec(ap["wq"]), _rep_spec(ap["bq"]),
            _rep_spec(ap["wk"]), _rep_spec(ap["bk"]),
            _rep_spec(ap["wv"]), _rep_spec(ap["bv"]),
            _rep_spec(ap["wo"]), _rep_spec(ap["bo"]),
            _rep_spec(pp["w"]), _rep_spec(pp["b"]),
        ],
        out_specs=(pl.BlockSpec((nb, T, d), lambda i: (i, 0, 0)),
                   pl.BlockSpec((nb, d), lambda i: (i, 0))),
        compiler_params=_CPARAMS,
    )(x, mask_row, mask_col, pos_bias,
      ap["wq"], ap["bq"], ap["wk"], ap["bk"], ap["wv"], ap["bv"],
      ap["wo"], ap["bo"], pp["w"], pp["b"])


def utterance_attn(x, mask_row, ap, *, num_heads, nb):
    """x: (B, S, d) f32, mask_row: (B, 1, S) -> (B, S, d) f32."""
    B, S, d = x.shape
    kernel = functools.partial(_utt_attn_kernel, num_heads=num_heads)
    return pl.pallas_call(
        kernel,
        out_shape=jax.ShapeDtypeStruct((B, S, d), jnp.float32),
        grid=(B // nb,),
        in_specs=[
            pl.BlockSpec((nb, S, d), lambda i: (i, 0, 0)),
            pl.BlockSpec((nb, 1, S), lambda i: (i, 0, 0)),
            _rep_spec(ap["wq"]), _rep_spec(ap["bq"]),
            _rep_spec(ap["wk"]), _rep_spec(ap["bk"]),
            _rep_spec(ap["wv"]), _rep_spec(ap["bv"]),
            _rep_spec(ap["wo"]), _rep_spec(ap["bo"]),
        ],
        out_specs=pl.BlockSpec((nb, S, d), lambda i: (i, 0, 0)),
        compiler_params=_CPARAMS,
    )(x, mask_row, ap["wq"], ap["bq"], ap["wk"], ap["bk"],
      ap["wv"], ap["bv"], ap["wo"], ap["bo"])


def update_ffn(utt, tok, mask_col, ln1_g, ln1_b, fp, *, eps, nb):
    """utt: (N, 1, d) f32, tok: (N, T, d) bf16, mask_col: (N, T, 1) -> (N, T, d) f32."""
    N, T, d = tok.shape
    inter = fp["w1"].shape[1]
    ffn_chunk = min(inter, 1024)
    kernel = functools.partial(_update_ffn_kernel, eps=eps, ffn_chunk=ffn_chunk)
    return pl.pallas_call(
        kernel,
        out_shape=jax.ShapeDtypeStruct((N, T, d), jnp.float32),
        grid=(N // nb,),
        in_specs=[
            pl.BlockSpec((nb, 1, d), lambda i: (i, 0, 0)),
            pl.BlockSpec((nb, T, d), lambda i: (i, 0, 0)),
            pl.BlockSpec((nb, T, 1), lambda i: (i, 0, 0)),
            _rep_spec(ln1_g), _rep_spec(ln1_b),
            _rep_spec(fp["w1"]), _rep_spec(fp["b1"]),
            _rep_spec(fp["w2"]), _rep_spec(fp["b2"]),
            _rep_spec(fp["ln_g"]), _rep_spec(fp["ln_b"]),
        ],
        out_specs=pl.BlockSpec((nb, T, d), lambda i: (i, 0, 0)),
        compiler_params=_CPARAMS,
    )(utt, tok, mask_col, ln1_g, ln1_b,
      fp["w1"], fp["b1"], fp["w2"], fp["b2"], fp["ln_g"], fp["ln_b"])


# ----------------------------------------------------------------------------
# HSSALayer forward (glue)
# ----------------------------------------------------------------------------

def hssa_layer_forward(params, hidden_states, attention_mask, max_dia_len,
                       utterance_mask, position_bias, *, num_heads, eps):
    """hidden_states: (B*S, T, d), attention_mask: (B*S, T),
    utterance_mask: (B, S), position_bias: (1, H, T, T)."""
    BS, T, d = hidden_states.shape
    H = num_heads
    S = max_dia_len
    B = BS // S

    nb_tok = _pick_nb(BS, T, _MAX_SLAB_ROWS)    # segments per step (token level)
    nb_dia = _pick_nb(B, S, _MAX_SLAB_ROWS)     # dialogues per step (utterance level)

    # bf16 across HBM for the big activation round-trips; masks stay f32.
    x = hidden_states.astype(jnp.bfloat16)
    pos_bias = position_bias.reshape(H, T, T).astype(jnp.bfloat16)
    am = attention_mask.astype(jnp.float32)
    attn_mask_row = am.reshape(BS, 1, T)
    attn_mask_col = am.reshape(BS, T, 1)
    utt_mask_row = utterance_mask.astype(jnp.float32).reshape(B, 1, S)

    # 1) token-level MHA fused with SegmentPooler
    token_states, utt = token_attn_pool(
        x, attn_mask_row, attn_mask_col, pos_bias,
        params["attn"], params["pooler"], num_heads=H, nb=nb_tok)

    # 2) utterance-level MHA (shares the SelfAttention weights, no position bias)
    utt = utt.reshape(B, S, d)
    utt_states = utterance_attn(utt, utt_mask_row, params["attn"],
                                num_heads=H, nb=nb_dia)
    utt_states = utt_states.reshape(BS, 1, d)

    # 3) SegmentUpdater + LayerNorm + FFN + LayerNorm (fused)
    return update_ffn(utt_states, token_states, attn_mask_col,
                      params["ln1_g"], params["ln1_b"], params["ffn"],
                      eps=eps, nb=nb_tok)


def init_params(key, d, inter, num_heads):
    ks = list(jax.random.split(key, 8))
    # weights stored "x @ W" (i.e. transposed PyTorch Linear weight), bf16 for
    # the MXU; biases / LayerNorm params stay f32.
    lin = lambda k, i, o: (0.02 * jax.random.normal(k, (i, o), jnp.float32)
                           ).astype(jnp.bfloat16)
    return {
        "attn": dict(
            wq=lin(ks[0], d, d), bq=jnp.zeros((1, d), jnp.float32),
            wk=lin(ks[1], d, d), bk=jnp.zeros((1, d), jnp.float32),
            wv=lin(ks[2], d, d), bv=jnp.zeros((1, d), jnp.float32),
            wo=lin(ks[3], d, d), bo=jnp.zeros((1, d), jnp.float32),
        ),
        "pooler": dict(
            w=lin(ks[4], d, d),
            b=0.02 * jax.random.normal(ks[5], (1, d), jnp.float32),
        ),
        "ln1_g": jnp.ones((1, d), jnp.float32),
        "ln1_b": jnp.zeros((1, d), jnp.float32),
        "ffn": dict(
            w1=lin(ks[6], d, inter), b1=jnp.zeros((1, inter), jnp.float32),
            w2=lin(ks[7], inter, d), b2=jnp.zeros((1, d), jnp.float32),
            ln_g=jnp.ones((1, d), jnp.float32),
            ln_b=jnp.zeros((1, d), jnp.float32),
        ),
    }


if __name__ == "__main__":
    # small config: hidden=32, heads=2, intermediate=64, B=2, S=8, T=8
    B, S, T, d, H, INTER = 2, 8, 8, 32, 2, 64
    EPS = 1e-12

    key = jax.random.PRNGKey(0)
    k_x, k_pb, k_p = jax.random.split(key, 3)

    hidden_states = jax.random.normal(k_x, (B * S, T, d), jnp.float32)
    attention_mask = jnp.ones((B * S, T), jnp.float32).at[:, T - 2:].set(0.0)
    utterance_mask = jnp.ones((B, S), jnp.float32).at[:, S - 2:].set(0.0)
    position_bias = 0.02 * jax.random.normal(k_pb, (1, H, T, T), jnp.float32)

    params = init_params(k_p, d, INTER, H)

    def run():
        out = hssa_layer_forward(params, hidden_states, attention_mask, S,
                                 utterance_mask, position_bias,
                                 num_heads=H, eps=EPS)
        return jax.block_until_ready(out)

    try:
        out = run()
    except Exception:
        # Defensive fallback: drop single-buffered weight blocks if this jax
        # build's Mosaic pipeline rejects pl.Buffered(1).
        globals()["_WEIGHT_PIPELINE_MODE"] = None
        out = run()

    assert out.shape == (B * S, T, d)
    assert bool(jnp.all(jnp.isfinite(out)))
    print("KERNEL_OK")
</pallas_src>

<mosaic_0001>
module attributes {stable_mosaic.version = 11 : i64} {
  func.func @_token_attn_pool_kernel(%arg0: i32, %arg1: memref<8x8x32xbf16, #tpu.memory_space<vmem>>, %arg2: memref<8x1x8xf32, #tpu.memory_space<vmem>>, %arg3: memref<8x8x1xf32, #tpu.memory_space<vmem>>, %arg4: memref<2x8x8xbf16, #tpu.memory_space<vmem>>, %arg5: memref<32x32xbf16, #tpu.memory_space<vmem>>, %arg6: memref<1x32xf32, #tpu.memory_space<vmem>>, %arg7: memref<32x32xbf16, #tpu.memory_space<vmem>>, %arg8: memref<1x32xf32, #tpu.memory_space<vmem>>, %arg9: memref<32x32xbf16, #tpu.memory_space<vmem>>, %arg10: memref<1x32xf32, #tpu.memory_space<vmem>>, %arg11: memref<32x32xbf16, #tpu.memory_space<vmem>>, %arg12: memref<1x32xf32, #tpu.memory_space<vmem>>, %arg13: memref<32x32xbf16, #tpu.memory_space<vmem>>, %arg14: memref<1x32xf32, #tpu.memory_space<vmem>>, %arg15: memref<8x8x32xbf16, #tpu.memory_space<vmem>>, %arg16: memref<8x32xf32, #tpu.memory_space<vmem>>) attributes {dimension_semantics = [#tpu.dimension_semantics<parallel>], iteration_bounds = array<i64: 2>, scalar_prefetch = 0 : i64, scratch_operands = 0 : i64, tpu.core_type = #tpu.core_type<tc>, window_params = [{transform_indices = @transform_0, window_bounds = array<i64: 8, 8, 32>}, {transform_indices = @transform_1, window_bounds = array<i64: 8, 1, 8>}, {transform_indices = @transform_2, window_bounds = array<i64: 8, 8, 1>}, {pipeline_mode = #tpu.pipeline_mode<synchronous>, transform_indices = @transform_3, window_bounds = array<i64: 2, 8, 8>}, {pipeline_mode = #tpu.pipeline_mode<synchronous>, transform_indices = @transform_4, window_bounds = array<i64: 32, 32>}, {pipeline_mode = #tpu.pipeline_mode<synchronous>, transform_indices = @transform_5, window_bounds = array<i64: 1, 32>}, {pipeline_mode = #tpu.pipeline_mode<synchronous>, transform_indices = @transform_6, window_bounds = array<i64: 32, 32>}, {pipeline_mode = #tpu.pipeline_mode<synchronous>, transform_indices = @transform_7, window_bounds = array<i64: 1, 32>}, {pipeline_mode = #tpu.pipeline_mode<synchronous>, transform_indices = @transform_8, window_bounds = array<i64: 32, 32>}, {pipeline_mode = #tpu.pipeline_mode<synchronous>, transform_indices = @transform_9, window_bounds = array<i64: 1, 32>}, {pipeline_mode = #tpu.pipeline_mode<synchronous>, transform_indices = @transform_10, window_bounds = array<i64: 32, 32>}, {pipeline_mode = #tpu.pipeline_mode<synchronous>, transform_indices = @transform_11, window_bounds = array<i64: 1, 32>}, {pipeline_mode = #tpu.pipeline_mode<synchronous>, transform_indices = @transform_12, window_bounds = array<i64: 32, 32>}, {pipeline_mode = #tpu.pipeline_mode<synchronous>, transform_indices = @transform_13, window_bounds = array<i64: 1, 32>}, {transform_indices = @transform_14, window_bounds = array<i64: 8, 8, 32>}, {transform_indices = @transform_15, window_bounds = array<i64: 8, 32>}]} {
    %c0 = arith.constant 0 : index
    %c0_0 = arith.constant 0 : index
    %c0_1 = arith.constant 0 : index
    %0 = vector.load %arg1[%c0, %c0_0, %c0_1] : memref<8x8x32xbf16, #tpu.memory_space<vmem>>, vector<8x8x32xbf16>
    %1 = vector.shape_cast %0 : vector<8x8x32xbf16> to vector<64x32xbf16>
    %c0_2 = arith.constant 0 : index
    %c0_3 = arith.constant 0 : index
    %c0_4 = arith.constant 0 : index
    %2 = vector.load %arg2[%c0_2, %c0_3, %c0_4] : memref<8x1x8xf32, #tpu.memory_space<vmem>>, vector<8x1x8xf32>
    %cst = arith.constant 1.000000e+00 : f32
    %3 = vector.broadcast %cst : f32 to vector<8x1x8xf32>
    %4 = arith.subf %3, %2 : vector<8x1x8xf32>
    %cst_5 = arith.constant -1.000000e+04 : f32
    %5 = vector.broadcast %cst_5 : f32 to vector<8x1x8xf32>
    %6 = arith.mulf %4, %5 : vector<8x1x8xf32>
    %c0_6 = arith.constant 0 : index
    %c0_7 = arith.constant 0 : index
    %c0_8 = arith.constant 0 : index
    %7 = vector.load %arg4[%c0_6, %c0_7, %c0_8] : memref<2x8x8xbf16, #tpu.memory_space<vmem>>, vector<2x8x8xbf16>
    %c0_9 = arith.constant 0 : index
    %c0_10 = arith.constant 0 : index
    %8 = vector.load %arg5[%c0_9, %c0_10] : memref<32x32xbf16, #tpu.memory_space<vmem>>, vector<32x32xbf16>
    %c0_11 = arith.constant 0 : index
    %c0_12 = arith.constant 0 : index
    %9 = vector.load %arg6[%c0_11, %c0_12] : memref<1x32xf32, #tpu.memory_space<vmem>>, vector<1x32xf32>
    %c0_13 = arith.constant 0 : index
    %c0_14 = arith.constant 0 : index
    %10 = vector.load %arg7[%c0_13, %c0_14] : memref<32x32xbf16, #tpu.memory_space<vmem>>, vector<32x32xbf16>
    %c0_15 = arith.constant 0 : index
    %c0_16 = arith.constant 0 : index
    %11 = vector.load %arg8[%c0_15, %c0_16] : memref<1x32xf32, #tpu.memory_space<vmem>>, vector<1x32xf32>
    %c0_17 = arith.constant 0 : index
    %c0_18 = arith.constant 0 : index
    %12 = vector.load %arg9[%c0_17, %c0_18] : memref<32x32xbf16, #tpu.memory_space<vmem>>, vector<32x32xbf16>
    %c0_19 = arith.constant 0 : index
    %c0_20 = arith.constant 0 : index
    %13 = vector.load %arg10[%c0_19, %c0_20] : memref<1x32xf32, #tpu.memory_space<vmem>>, vector<1x32xf32>
    %c0_21 = arith.constant 0 : index
    %c0_22 = arith.constant 0 : index
    %14 = vector.load %arg11[%c0_21, %c0_22] : memref<32x32xbf16, #tpu.memory_space<vmem>>, vector<32x32xbf16>
    %c0_23 = arith.constant 0 : index
    %c0_24 = arith.constant 0 : index
    %15 = vector.load %arg12[%c0_23, %c0_24] : memref<1x32xf32, #tpu.memory_space<vmem>>, vector<1x32xf32>
    %cst_25 = arith.constant dense<0.000000e+00> : vector<64x32xf32>
    %16 = tpu.matmul %1, %8, %cst_25 {dimension_numbers = #tpu.dot_dimension_numbers<[1], [0], [0], [1], [0, 0, 1, 1], [], []>} : vector<64x32xbf16>, vector<32x32xbf16>, vector<64x32xf32> -> vector<64x32xf32>
    %17 = vector.broadcast %9 : vector<1x32xf32> to vector<64x32xf32>
    %18 = arith.addf %16, %17 : vector<64x32xf32>
    %19 = arith.truncf %18 : vector<64x32xf32> to vector<64x32xbf16>
    %20 = vector.shape_cast %19 : vector<64x32xbf16> to vector<8x8x32xbf16>
    %cst_26 = arith.constant dense<0.000000e+00> : vector<64x32xf32>
    %21 = tpu.matmul %1, %10, %cst_26 {dimension_numbers = #tpu.dot_dimension_numbers<[1], [0], [0], [1], [0, 0, 1, 1], [], []>} : vector<64x32xbf16>, vector<32x32xbf16>, vector<64x32xf32> -> vector<64x32xf32>
    %22 = vector.broadcast %11 : vector<1x32xf32> to vector<64x32xf32>
    %23 = arith.addf %21, %22 : vector<64x32xf32>
    %24 = arith.truncf %23 : vector<64x32xf32> to vector<64x32xbf16>
    %25 = vector.shape_cast %24 : vector<64x32xbf16> to vector<8x8x32xbf16>
    %cst_27 = arith.constant dense<0.000000e+00> : vector<64x32xf32>
    %26 = tpu.matmul %1, %12, %cst_27 {dimension_numbers = #tpu.dot_dimension_numbers<[1], [0], [0], [1], [0, 0, 1, 1], [], []>} : vector<64x32xbf16>, vector<32x32xbf16>, vector<64x32xf32> -> vector<64x32xf32>
    %27 = vector.broadcast %13 : vector<1x32xf32> to vector<64x32xf32>
    %28 = arith.addf %26, %27 : vector<64x32xf32>
    %29 = arith.truncf %28 : vector<64x32xf32> to vector<64x32xbf16>
    %30 = vector.shape_cast %29 : vector<64x32xbf16> to vector<8x8x32xbf16>
    %31 = vector.extract_strided_slice %20 {offsets = [0, 0, 0], sizes = [8, 8, 16], strides = [1, 1, 1]} : vector<8x8x32xbf16> to vector<8x8x16xbf16>
    %32 = vector.extract_strided_slice %25 {offsets = [0, 0, 0], sizes = [8, 8, 16], strides = [1, 1, 1]} : vector<8x8x32xbf16> to vector<8x8x16xbf16>
    %33 = vector.extract_strided_slice %30 {offsets = [0, 0, 0], sizes = [8, 8, 16], strides = [1, 1, 1]} : vector<8x8x32xbf16> to vector<8x8x16xbf16>
    "tpu.trace_start"() <{level = 10 : i32, message = "nqc,nkc->nqk"}> : () -> ()
    %cst_28 = arith.constant dense<0.000000e+00> : vector<8x8x8xf32>
    %34 = tpu.matmul %31, %32, %cst_28 {dimension_numbers = #tpu.dot_dimension_numbers<[2], [2], [1], [1], [0, 0, 0, 1, 1, 1], [0], [0]>} : vector<8x8x16xbf16>, vector<8x8x16xbf16>, vector<8x8x8xf32> -> vector<8x8x8xf32>
    "tpu.trace_stop"() : () -> ()
    %cst_29 = arith.constant 2.500000e-01 : f32
    %35 = vector.broadcast %cst_29 : f32 to vector<8x8x8xf32>
    %36 = arith.mulf %34, %35 : vector<8x8x8xf32>
    %37 = vector.broadcast %6 : vector<8x1x8xf32> to vector<8x8x8xf32>
    %38 = arith.addf %36, %37 : vector<8x8x8xf32>
    %39 = vector.extract_strided_slice %7 {offsets = [0, 0, 0], sizes = [1, 8, 8], strides = [1, 1, 1]} : vector<2x8x8xbf16> to vector<1x8x8xbf16>
    %40 = vector.shape_cast %39 : vector<1x8x8xbf16> to vector<8x8xbf16>
    %41 = arith.extf %40 : vector<8x8xbf16> to vector<8x8xf32>
    %42 = vector.shape_cast %41 : vector<8x8xf32> to vector<1x8x8xf32>
    %43 = vector.broadcast %42 : vector<1x8x8xf32> to vector<8x8x8xf32>
    %44 = arith.addf %38, %43 : vector<8x8x8xf32>
    %cst_30 = arith.constant dense<0xFF800000> : vector<8x8xf32>
    %45 = vector.multi_reduction <maximumf>, %44, %cst_30 [2] : vector<8x8x8xf32> to vector<8x8xf32>
    %46 = vector.shape_cast %45 : vector<8x8xf32> to vector<8x8x1xf32>
    %47 = vector.broadcast %46 : vector<8x8x1xf32> to vector<8x8x8xf32>
    %48 = arith.subf %44, %47 : vector<8x8x8xf32>
    %49 = math.exp %48 : vector<8x8x8xf32>
    %cst_31 = arith.constant dense<0.000000e+00> : vector<8x8xf32>
    %50 = vector.multi_reduction <add>, %49, %cst_31 [2] : vector<8x8x8xf32> to vector<8x8xf32>
    %51 = vector.shape_cast %50 : vector<8x8xf32> to vector<8x8x1xf32>
    %52 = tpu.reciprocal %51 {approx = true} : vector<8x8x1xf32> -> vector<8x8x1xf32>
    %53 = vector.broadcast %52 : vector<8x8x1xf32> to vector<8x8x8xf32>
    %54 = arith.mulf %49, %53 : vector<8x8x8xf32>
    %55 = arith.truncf %54 : vector<8x8x8xf32> to vector<8x8x8xbf16>
    "tpu.trace_start"() <{level = 10 : i32, message = "nqk,nkc->nqc"}> : () -> ()
    %cst_32 = arith.constant dense<0.000000e+00> : vector<8x8x16xf32>
    %56 = tpu.matmul %55, %33, %cst_32 {dimension_numbers = #tpu.dot_dimension_numbers<[2], [1], [1], [2], [0, 0, 0, 1, 1, 2], [0], [0]>} : vector<8x8x8xbf16>, vector<8x8x16xbf16>, vector<8x8x16xf32> -> vector<8x8x16xf32>
    "tpu.trace_stop"() : () -> ()
    %57 = vector.extract_strided_slice %20 {offsets = [0, 0, 16], sizes = [8, 8, 16], strides = [1, 1, 1]} : vector<8x8x32xbf16> to vector<8x8x16xbf16>
    %58 = vector.extract_strided_slice %25 {offsets = [0, 0, 16], sizes = [8, 8, 16], strides = [1, 1, 1]} : vector<8x8x32xbf16> to vector<8x8x16xbf16>
    %59 = vector.extract_strided_slice %30 {offsets = [0, 0, 16], sizes = [8, 8, 16], strides = [1, 1, 1]} : vector<8x8x32xbf16> to vector<8x8x16xbf16>
    "tpu.trace_start"() <{level = 10 : i32, message = "nqc,nkc->nqk"}> : () -> ()
    %cst_33 = arith.constant dense<0.000000e+00> : vector<8x8x8xf32>
    %60 = tpu.matmul %57, %58, %cst_33 {dimension_numbers = #tpu.dot_dimension_numbers<[2], [2], [1], [1], [0, 0, 0, 1, 1, 1], [0], [0]>} : vector<8x8x16xbf16>, vector<8x8x16xbf16>, vector<8x8x8xf32> -> vector<8x8x8xf32>
    "tpu.trace_stop"() : () -> ()
    %cst_34 = arith.constant 2.500000e-01 : f32
    %61 = vector.broadcast %cst_34 : f32 to vector<8x8x8xf32>
    %62 = arith.mulf %60, %61 : vector<8x8x8xf32>
    %63 = vector.broadcast %6 : vector<8x1x8xf32> to vector<8x8x8xf32>
    %64 = arith.addf %62, %63 : vector<8x8x8xf32>
    %65 = vector.extract_strided_slice %7 {offsets = [1, 0, 0], sizes = [1, 8, 8], strides = [1, 1, 1]} : vector<2x8x8xbf16> to vector<1x8x8xbf16>
    %66 = vector.shape_cast %65 : vector<1x8x8xbf16> to vector<8x8xbf16>
    %67 = arith.extf %66 : vector<8x8xbf16> to vector<8x8xf32>
    %68 = vector.shape_cast %67 : vector<8x8xf32> to vector<1x8x8xf32>
    %69 = vector.broadcast %68 : vector<1x8x8xf32> to vector<8x8x8xf32>
    %70 = arith.addf %64, %69 : vector<8x8x8xf32>
    %cst_35 = arith.constant dense<0xFF800000> : vector<8x8xf32>
    %71 = vector.multi_reduction <maximumf>, %70, %cst_35 [2] : vector<8x8x8xf32> to vector<8x8xf32>
    %72 = vector.shape_cast %71 : vector<8x8xf32> to vector<8x8x1xf32>
    %73 = vector.broadcast %72 : vector<8x8x1xf32> to vector<8x8x8xf32>
    %74 = arith.subf %70, %73 : vector<8x8x8xf32>
    %75 = math.exp %74 : vector<8x8x8xf32>
    %cst_36 = arith.constant dense<0.000000e+00> : vector<8x8xf32>
    %76 = vector.multi_reduction <add>, %75, %cst_36 [2] : vector<8x8x8xf32> to vector<8x8xf32>
    %77 = vector.shape_cast %76 : vector<8x8xf32> to vector<8x8x1xf32>
    %78 = tpu.reciprocal %77 {approx = true} : vector<8x8x1xf32> -> vector<8x8x1xf32>
    %79 = vector.broadcast %78 : vector<8x8x1xf32> to vector<8x8x8xf32>
    %80 = arith.mulf %75, %79 : vector<8x8x8xf32>
    %81 = arith.truncf %80 : vector<8x8x8xf32> to vector<8x8x8xbf16>
    "tpu.trace_start"() <{level = 10 : i32, message = "nqk,nkc->nqc"}> : () -> ()
    %cst_37 = arith.constant dense<0.000000e+00> : vector<8x8x16xf32>
    %82 = tpu.matmul %81, %59, %cst_37 {dimension_numbers = #tpu.dot_dimension_numbers<[2], [1], [1], [2], [0, 0, 0, 1, 1, 2], [0], [0]>} : vector<8x8x8xbf16>, vector<8x8x16xbf16>, vector<8x8x16xf32> -> vector<8x8x16xf32>
    "tpu.trace_stop"() : () -> ()
    %83 = tpu.concatenate %56, %82 in 2 : vector<8x8x16xf32>, vector<8x8x16xf32> -> vector<8x8x32xf32>
    %84 = vector.shape_cast %83 : vector<8x8x32xf32> to vector<64x32xf32>
    %85 = arith.truncf %84 : vector<64x32xf32> to vector<64x32xbf16>
    %cst_38 = arith.constant dense<0.000000e+00> : vector<64x32xf32>
    %86 = tpu.matmul %85, %14, %cst_38 {dimension_numbers = #tpu.dot_dimension_numbers<[1], [0], [0], [1], [0, 0, 1, 1], [], []>} : vector<64x32xbf16>, vector<32x32xbf16>, vector<64x32xf32> -> vector<64x32xf32>
    %87 = vector.broadcast %15 : vector<1x32xf32> to vector<64x32xf32>
    %88 = arith.addf %86, %87 : vector<64x32xf32>
    %89 = vector.shape_cast %88 : vector<64x32xf32> to vector<8x8x32xf32>
    %90 = arith.truncf %89 : vector<8x8x32xf32> to vector<8x8x32xbf16>
    %c0_39 = arith.constant 0 : index
    %c0_40 = arith.constant 0 : index
    %c0_41 = arith.constant 0 : index
    %91 = vector.load %arg15[%c0_39, %c0_40, %c0_41] : memref<8x8x32xbf16, #tpu.memory_space<vmem>>, vector<8x8x32xbf16>
    tpu.vector_store %arg15[%c0_39, %c0_40, %c0_41], %90 {strides = array<i32>} : memref<8x8x32xbf16, #tpu.memory_space<vmem>>, vector<8x8x32xbf16>,
    %c0_42 = arith.constant 0 : index
    %c0_43 = arith.constant 0 : index
    %c0_44 = arith.constant 0 : index
    %92 = vector.load %arg3[%c0_42, %c0_43, %c0_44] : memref<8x8x1xf32, #tpu.memory_space<vmem>>, vector<8x8x1xf32>
    %cst_45 = arith.constant dense<0.000000e+00> : vector<8x1xf32>
    %93 = vector.multi_reduction <add>, %92, %cst_45 [1] : vector<8x8x1xf32> to vector<8x1xf32>
    %94 = vector.shape_cast %93 : vector<8x1xf32> to vector<8x1x1xf32>
    %cst_46 = arith.constant 9.99999997E-7 : f32
    %95 = vector.broadcast %cst_46 : f32 to vector<8x1x1xf32>
    %96 = arith.addf %95, %94 : vector<8x1x1xf32>
    %97 = vector.broadcast %92 : vector<8x8x1xf32> to vector<8x8x32xf32>
    %98 = arith.mulf %97, %89 : vector<8x8x32xf32>
    %cst_47 = arith.constant dense<0.000000e+00> : vector<8x32xf32>
    %99 = vector.multi_reduction <add>, %98, %cst_47 [1] : vector<8x8x32xf32> to vector<8x32xf32>
    %100 = vector.shape_cast %99 : vector<8x32xf32> to vector<8x1x32xf32>
    %101 = vector.broadcast %96 : vector<8x1x1xf32> to vector<8x1x32xf32>
    %102 = arith.divf %100, %101 : vector<8x1x32xf32>
    %103 = vector.broadcast %102 : vector<8x1x32xf32> to vector<8x8x32xf32>
    %104 = arith.mulf %89, %103 : vector<8x8x32xf32>
    %cst_48 = arith.constant dense<0.000000e+00> : vector<8x8xf32>
    %105 = vector.multi_reduction <add>, %104, %cst_48 [2] : vector<8x8x32xf32> to vector<8x8xf32>
    %106 = vector.shape_cast %105 : vector<8x8xf32> to vector<8x8x1xf32>
    %cst_49 = arith.constant 0.176776692 : f32
    %107 = vector.broadcast %cst_49 : f32 to vector<8x8x1xf32>
    %108 = arith.mulf %106, %107 : vector<8x8x1xf32>
    %109 = arith.addf %108, %92 : vector<8x8x1xf32>
    %cst_50 = arith.constant dense<0xFF800000> : vector<8x1xf32>
    %110 = vector.multi_reduction <maximumf>, %109, %cst_50 [1] : vector<8x8x1xf32> to vector<8x1xf32>
    %111 = vector.shape_cast %110 : vector<8x1xf32> to vector<8x1x1xf32>
    %112 = vector.broadcast %111 : vector<8x1x1xf32> to vector<8x8x1xf32>
    %113 = arith.subf %109, %112 : vector<8x8x1xf32>
    %114 = math.exp %113 : vector<8x8x1xf32>
    %cst_51 = arith.constant dense<0.000000e+00> : vector<8x1xf32>
    %115 = vector.multi_reduction <add>, %114, %cst_51 [1] : vector<8x8x1xf32> to vector<8x1xf32>
    %116 = vector.shape_cast %115 : vector<8x1xf32> to vector<8x1x1xf32>
    %117 = vector.broadcast %116 : vector<8x1x1xf32> to vector<8x8x1xf32>
    %118 = arith.divf %114, %117 : vector<8x8x1xf32>
    %119 = vector.broadcast %118 : vector<8x8x1xf32> to vector<8x8x32xf32>
    %120 = arith.mulf %89, %119 : vector<8x8x32xf32>
    %cst_52 = arith.constant dense<0.000000e+00> : vector<8x32xf32>
    %121 = vector.multi_reduction <add>, %120, %cst_52 [1] : vector<8x8x32xf32> to vector<8x32xf32>
    %122 = vector.shape_cast %121 : vector<8x32xf32> to vector<8x1x32xf32>
    %123 = vector.shape_cast %122 : vector<8x1x32xf32> to vector<8x32xf32>
    %124 = arith.truncf %123 : vector<8x32xf32> to vector<8x32xbf16>
    %c0_53 = arith.constant 0 : index
    %c0_54 = arith.constant 0 : index
    %125 = vector.load %arg13[%c0_53, %c0_54] : memref<32x32xbf16, #tpu.memory_space<vmem>>, vector<32x32xbf16>
    %cst_55 = arith.constant dense<0.000000e+00> : vector<8x32xf32>
    %126 = tpu.matmul %124, %125, %cst_55 {dimension_numbers = #tpu.dot_dimension_numbers<[1], [0], [0], [1], [0, 0, 1, 1], [], []>} : vector<8x32xbf16>, vector<32x32xbf16>, vector<8x32xf32> -> vector<8x32xf32>
    %c0_56 = arith.constant 0 : index
    %c0_57 = arith.constant 0 : index
    %127 = vector.load %arg14[%c0_56, %c0_57] : memref<1x32xf32, #tpu.memory_space<vmem>>, vector<1x32xf32>
    %128 = vector.broadcast %127 : vector<1x32xf32> to vector<8x32xf32>
    %129 = arith.addf %126, %128 : vector<8x32xf32>
    %c0_58 = arith.constant 0 : index
    %c0_59 = arith.constant 0 : index
    %130 = vector.load %arg16[%c0_58, %c0_59] : memref<8x32xf32, #tpu.memory_space<vmem>>, vector<8x32xf32>
    tpu.vector_store %arg16[%c0_58, %c0_59], %129 {strides = array<i32>} : memref<8x32xf32, #tpu.memory_space<vmem>>, vector<8x32xf32>,
    return
  }
  func.func @transform_0(%arg0: i32) -> (i32, i32, i32) {
    %c0_i32 = arith.constant 0 : i32
    %c0_i32_0 = arith.constant 0 : i32
    %c0_i32_1 = arith.constant 0 : i32
    return %arg0, %c0_i32, %c0_i32_0 : i32, i32, i32
  }
  func.func @transform_1(%arg0: i32) -> (i32, i32, i32) {
    %c0_i32 = arith.constant 0 : i32
    %c0_i32_0 = arith.constant 0 : i32
    %c0_i32_1 = arith.constant 0 : i32
    return %arg0, %c0_i32, %c0_i32_0 : i32, i32, i32
  }
  func.func @transform_2(%arg0: i32) -> (i32, i32, i32) {
    %c0_i32 = arith.constant 0 : i32
    %c0_i32_0 = arith.constant 0 : i32
    %c0_i32_1 = arith.constant 0 : i32
    return %arg0, %c0_i32, %c0_i32_0 : i32, i32, i32
  }
  func.func @transform_3(%arg0: i32) -> (i32, i32, i32) {
    %c0_i32 = arith.constant 0 : i32
    %c0_i32_0 = arith.constant 0 : i32
    %c0_i32_1 = arith.constant 0 : i32
    %c0_i32_2 = arith.constant 0 : i32
    return %c0_i32, %c0_i32_0, %c0_i32_1 : i32, i32, i32
  }
  func.func @transform_4(%arg0: i32) -> (i32, i32) {
    %c0_i32 = arith.constant 0 : i32
    %c0_i32_0 = arith.constant 0 : i32
    %c0_i32_1 = arith.constant 0 : i32
    return %c0_i32, %c0_i32_0 : i32, i32
  }
  func.func @transform_5(%arg0: i32) -> (i32, i32) {
    %c0_i32 = arith.constant 0 : i32
    %c0_i32_0 = arith.constant 0 : i32
    %c0_i32_1 = arith.constant 0 : i32
    return %c0_i32, %c0_i32_0 : i32, i32
  }
  func.func @transform_6(%arg0: i32) -> (i32, i32) {
    %c0_i32 = arith.constant 0 : i32
    %c0_i32_0 = arith.constant 0 : i32
    %c0_i32_1 = arith.constant 0 : i32
    return %c0_i32, %c0_i32_0 : i32, i32
  }
  func.func @transform_7(%arg0: i32) -> (i32, i32) {
    %c0_i32 = arith.constant 0 : i32
    %c0_i32_0 = arith.constant 0 : i32
    %c0_i32_1 = arith.constant 0 : i32
    return %c0_i32, %c0_i32_0 : i32, i32
  }
  func.func @transform_8(%arg0: i32) -> (i32, i32) {
    %c0_i32 = arith.constant 0 : i32
    %c0_i32_0 = arith.constant 0 : i32
    %c0_i32_1 = arith.constant 0 : i32
    return %c0_i32, %c0_i32_0 : i32, i32
  }
  func.func @transform_9(%arg0: i32) -> (i32, i32) {
    %c0_i32 = arith.constant 0 : i32
    %c0_i32_0 = arith.constant 0 : i32
    %c0_i32_1 = arith.constant 0 : i32
    return %c0_i32, %c0_i32_0 : i32, i32
  }
  func.func @transform_10(%arg0: i32) -> (i32, i32) {
    %c0_i32 = arith.constant 0 : i32
    %c0_i32_0 = arith.constant 0 : i32
    %c0_i32_1 = arith.constant 0 : i32
    return %c0_i32, %c0_i32_0 : i32, i32
  }
  func.func @transform_11(%arg0: i32) -> (i32, i32) {
    %c0_i32 = arith.constant 0 : i32
    %c0_i32_0 = arith.constant 0 : i32
    %c0_i32_1 = arith.constant 0 : i32
    return %c0_i32, %c0_i32_0 : i32, i32
  }
  func.func @transform_12(%arg0: i32) -> (i32, i32) {
    %c0_i32 = arith.constant 0 : i32
    %c0_i32_0 = arith.constant 0 : i32
    %c0_i32_1 = arith.constant 0 : i32
    return %c0_i32, %c0_i32_0 : i32, i32
  }
  func.func @transform_13(%arg0: i32) -> (i32, i32) {
    %c0_i32 = arith.constant 0 : i32
    %c0_i32_0 = arith.constant 0 : i32
    %c0_i32_1 = arith.constant 0 : i32
    return %c0_i32, %c0_i32_0 : i32, i32
  }
  func.func @transform_14(%arg0: i32) -> (i32, i32, i32) {
    %c0_i32 = arith.constant 0 : i32
    %c0_i32_0 = arith.constant 0 : i32
    %c0_i32_1 = arith.constant 0 : i32
    return %arg0, %c0_i32, %c0_i32_0 : i32, i32, i32
  }
  func.func @transform_15(%arg0: i32) -> (i32, i32) {
    %c0_i32 = arith.constant 0 : i32
    %c0_i32_0 = arith.constant 0 : i32
    return %arg0, %c0_i32 : i32, i32
  }
}

module attributes {stable_mosaic.version = 11 : i64} {
  func.func @_token_attn_pool_kernel(%arg0: i32, %arg1: memref<8x8x32xbf16, #tpu.memory_space<vmem>>, %arg2: memref<8x1x8xf32, #tpu.memory_space<vmem>>, %arg3: memref<8x8x1xf32, #tpu.memory_space<vmem>>, %arg4: memref<2x8x8xbf16, #tpu.memory_space<vmem>>, %arg5: memref<32x32xbf16, #tpu.memory_space<vmem>>, %arg6: memref<1x32xf32, #tpu.memory_space<vmem>>, %arg7: memref<32x32xbf16, #tpu.memory_space<vmem>>, %arg8: memref<1x32xf32, #tpu.memory_space<vmem>>, %arg9: memref<32x32xbf16, #tpu.memory_space<vmem>>, %arg10: memref<1x32xf32, #tpu.memory_space<vmem>>, %arg11: memref<32x32xbf16, #tpu.memory_space<vmem>>, %arg12: memref<1x32xf32, #tpu.memory_space<vmem>>, %arg13: memref<32x32xbf16, #tpu.memory_space<vmem>>, %arg14: memref<1x32xf32, #tpu.memory_space<vmem>>, %arg15: memref<8x8x32xbf16, #tpu.memory_space<vmem>>, %arg16: memref<8x32xf32, #tpu.memory_space<vmem>>) attributes {dimension_semantics = [#tpu.dimension_semantics<parallel>], iteration_bounds = array<i64: 2>, scalar_prefetch = 0 : i64, scratch_operands = 0 : i64, tpu.core_type = #tpu.core_type<tc>, window_params = [{transform_indices = @transform_0, window_bounds = array<i64: 8, 8, 32>}, {transform_indices = @transform_1, window_bounds = array<i64: 8, 1, 8>}, {transform_indices = @transform_2, window_bounds = array<i64: 8, 8, 1>}, {pipeline_mode = #tpu.pipeline_mode<synchronous>, transform_indices = @transform_3, window_bounds = array<i64: 2, 8, 8>}, {pipeline_mode = #tpu.pipeline_mode<synchronous>, transform_indices = @transform_4, window_bounds = array<i64: 32, 32>}, {pipeline_mode = #tpu.pipeline_mode<synchronous>, transform_indices = @transform_5, window_bounds = array<i64: 1, 32>}, {pipeline_mode = #tpu.pipeline_mode<synchronous>, transform_indices = @transform_6, window_bounds = array<i64: 32, 32>}, {pipeline_mode = #tpu.pipeline_mode<synchronous>, transform_indices = @transform_7, window_bounds = array<i64: 1, 32>}, {pipeline_mode = #tpu.pipeline_mode<synchronous>, transform_indices = @transform_8, window_bounds = array<i64: 32, 32>}, {pipeline_mode = #tpu.pipeline_mode<synchronous>, transform_indices = @transform_9, window_bounds = array<i64: 1, 32>}, {pipeline_mode = #tpu.pipeline_mode<synchronous>, transform_indices = @transform_10, window_bounds = array<i64: 32, 32>}, {pipeline_mode = #tpu.pipeline_mode<synchronous>, transform_indices = @transform_11, window_bounds = array<i64: 1, 32>}, {pipeline_mode = #tpu.pipeline_mode<synchronous>, transform_indices = @transform_12, window_bounds = array<i64: 32, 32>}, {pipeline_mode = #tpu.pipeline_mode<synchronous>, transform_indices = @transform_13, window_bounds = array<i64: 1, 32>}, {transform_indices = @transform_14, window_bounds = array<i64: 8, 8, 32>}, {transform_indices = @transform_15, window_bounds = array<i64: 8, 32>}]} {
    %c0 = arith.constant 0 : index
    %c0_0 = arith.constant 0 : index
    %c0_1 = arith.constant 0 : index
    %0 = vector.load %arg1[%c0, %c0_0, %c0_1] : memref<8x8x32xbf16, #tpu.memory_space<vmem>>, vector<8x8x32xbf16>
    %1 = vector.shape_cast %0 : vector<8x8x32xbf16> to vector<64x32xbf16>
    %c0_2 = arith.constant 0 : index
    %c0_3 = arith.constant 0 : index
    %c0_4 = arith.constant 0 : index
    %2 = vector.load %arg2[%c0_2, %c0_3, %c0_4] : memref<8x1x8xf32, #tpu.memory_space<vmem>>, vector<8x1x8xf32>
    %cst = arith.constant 1.000000e+00 : f32
    %3 = vector.broadcast %cst : f32 to vector<8x1x8xf32>
    %4 = arith.subf %3, %2 : vector<8x1x8xf32>
    %cst_5 = arith.constant -1.000000e+04 : f32
    %5 = vector.broadcast %cst_5 : f32 to vector<8x1x8xf32>
    %6 = arith.mulf %4, %5 : vector<8x1x8xf32>
    %c0_6 = arith.constant 0 : index
    %c0_7 = arith.constant 0 : index
    %c0_8 = arith.constant 0 : index
    %7 = vector.load %arg4[%c0_6, %c0_7, %c0_8] : memref<2x8x8xbf16, #tpu.memory_space<vmem>>, vector<2x8x8xbf16>
    %c0_9 = arith.constant 0 : index
    %c0_10 = arith.constant 0 : index
    %8 = vector.load %arg5[%c0_9, %c0_10] : memref<32x32xbf16, #tpu.memory_space<vmem>>, vector<32x32xbf16>
    %c0_11 = arith.constant 0 : index
    %c0_12 = arith.constant 0 : index
    %9 = vector.load %arg6[%c0_11, %c0_12] : memref<1x32xf32, #tpu.memory_space<vmem>>, vector<1x32xf32>
    %c0_13 = arith.constant 0 : index
    %c0_14 = arith.constant 0 : index
    %10 = vector.load %arg7[%c0_13, %c0_14] : memref<32x32xbf16, #tpu.memory_space<vmem>>, vector<32x32xbf16>
    %c0_15 = arith.constant 0 : index
    %c0_16 = arith.constant 0 : index
    %11 = vector.load %arg8[%c0_15, %c0_16] : memref<1x32xf32, #tpu.memory_space<vmem>>, vector<1x32xf32>
    %c0_17 = arith.constant 0 : index
    %c0_18 = arith.constant 0 : index
    %12 = vector.load %arg9[%c0_17, %c0_18] : memref<32x32xbf16, #tpu.memory_space<vmem>>, vector<32x32xbf16>
    %c0_19 = arith.constant 0 : index
    %c0_20 = arith.constant 0 : index
    %13 = vector.load %arg10[%c0_19, %c0_20] : memref<1x32xf32, #tpu.memory_space<vmem>>, vector<1x32xf32>
    %c0_21 = arith.constant 0 : index
    %c0_22 = arith.constant 0 : index
    %14 = vector.load %arg11[%c0_21, %c0_22] : memref<32x32xbf16, #tpu.memory_space<vmem>>, vector<32x32xbf16>
    %c0_23 = arith.constant 0 : index
    %c0_24 = arith.constant 0 : index
    %15 = vector.load %arg12[%c0_23, %c0_24] : memref<1x32xf32, #tpu.memory_space<vmem>>, vector<1x32xf32>
    %cst_25 = arith.constant dense<0.000000e+00> : vector<64x32xf32>
    %16 = tpu.matmul %1, %8, %cst_25 {dimension_numbers = #tpu.dot_dimension_numbers<[1], [0], [0], [1], [0, 0, 1, 1], [], []>} : vector<64x32xbf16>, vector<32x32xbf16>, vector<64x32xf32> -> vector<64x32xf32>
    %17 = vector.broadcast %9 : vector<1x32xf32> to vector<64x32xf32>
    %18 = arith.addf %16, %17 : vector<64x32xf32>
    %19 = arith.truncf %18 : vector<64x32xf32> to vector<64x32xbf16>
    %20 = vector.shape_cast %19 : vector<64x32xbf16> to vector<8x8x32xbf16>
    %cst_26 = arith.constant dense<0.000000e+00> : vector<64x32xf32>
    %21 = tpu.matmul %1, %10, %cst_26 {dimension_numbers = #tpu.dot_dimension_numbers<[1], [0], [0], [1], [0, 0, 1, 1], [], []>} : vector<64x32xbf16>, vector<32x32xbf16>, vector<64x32xf32> -> vector<64x32xf32>
    %22 = vector.broadcast %11 : vector<1x32xf32> to vector<64x32xf32>
    %23 = arith.addf %21, %22 : vector<64x32xf32>
    %24 = arith.truncf %23 : vector<64x32xf32> to vector<64x32xbf16>
    %25 = vector.shape_cast %24 : vector<64x32xbf16> to vector<8x8x32xbf16>
    %cst_27 = arith.constant dense<0.000000e+00> : vector<64x32xf32>
    %26 = tpu.matmul %1, %12, %cst_27 {dimension_numbers = #tpu.dot_dimension_numbers<[1], [0], [0], [1], [0, 0, 1, 1], [], []>} : vector<64x32xbf16>, vector<32x32xbf16>, vector<64x32xf32> -> vector<64x32xf32>
    %27 = vector.broadcast %13 : vector<1x32xf32> to vector<64x32xf32>
    %28 = arith.addf %26, %27 : vector<64x32xf32>
    %29 = arith.truncf %28 : vector<64x32xf32> to vector<64x32xbf16>
    %30 = vector.shape_cast %29 : vector<64x32xbf16> to vector<8x8x32xbf16>
    %31 = vector.extract_strided_slice %20 {offsets = [0, 0, 0], sizes = [8, 8, 16], strides = [1, 1, 1]} : vector<8x8x32xbf16> to vector<8x8x16xbf16>
    %32 = vector.extract_strided_slice %25 {offsets = [0, 0, 0], sizes = [8, 8, 16], strides = [1, 1, 1]} : vector<8x8x32xbf16> to vector<8x8x16xbf16>
    %33 = vector.extract_strided_slice %30 {offsets = [0, 0, 0], sizes = [8, 8, 16], strides = [1, 1, 1]} : vector<8x8x32xbf16> to vector<8x8x16xbf16>
    "tpu.trace_start"() <{level = 10 : i32, message = "nqc,nkc->nqk"}> : () -> ()
    %cst_28 = arith.constant dense<0.000000e+00> : vector<8x8x8xf32>
    %34 = tpu.matmul %31, %32, %cst_28 {dimension_numbers = #tpu.dot_dimension_numbers<[2], [2], [1], [1], [0, 0, 0, 1, 1, 1], [0], [0]>} : vector<8x8x16xbf16>, vector<8x8x16xbf16>, vector<8x8x8xf32> -> vector<8x8x8xf32>
    "tpu.trace_stop"() : () -> ()
    %cst_29 = arith.constant 2.500000e-01 : f32
    %35 = vector.broadcast %cst_29 : f32 to vector<8x8x8xf32>
    %36 = arith.mulf %34, %35 : vector<8x8x8xf32>
    %37 = vector.broadcast %6 : vector<8x1x8xf32> to vector<8x8x8xf32>
    %38 = arith.addf %36, %37 : vector<8x8x8xf32>
    %39 = vector.extract_strided_slice %7 {offsets = [0, 0, 0], sizes = [1, 8, 8], strides = [1, 1, 1]} : vector<2x8x8xbf16> to vector<1x8x8xbf16>
    %40 = vector.shape_cast %39 : vector<1x8x8xbf16> to vector<8x8xbf16>
    %41 = arith.extf %40 : vector<8x8xbf16> to vector<8x8xf32>
    %42 = vector.shape_cast %41 : vector<8x8xf32> to vector<1x8x8xf32>
    %43 = vector.broadcast %42 : vector<1x8x8xf32> to vector<8x8x8xf32>
    %44 = arith.addf %38, %43 : vector<8x8x8xf32>
    %cst_30 = arith.constant dense<0xFF800000> : vector<8x8xf32>
    %45 = vector.multi_reduction <maximumf>, %44, %cst_30 [2] : vector<8x8x8xf32> to vector<8x8xf32>
    %46 = vector.shape_cast %45 : vector<8x8xf32> to vector<8x8x1xf32>
    %47 = vector.broadcast %46 : vector<8x8x1xf32> to vector<8x8x8xf32>
    %48 = arith.subf %44, %47 : vector<8x8x8xf32>
    %49 = math.exp %48 : vector<8x8x8xf32>
    %cst_31 = arith.constant dense<0.000000e+00> : vector<8x8xf32>
    %50 = vector.multi_reduction <add>, %49, %cst_31 [2] : vector<8x8x8xf32> to vector<8x8xf32>
    %51 = vector.shape_cast %50 : vector<8x8xf32> to vector<8x8x1xf32>
    %52 = tpu.reciprocal %51 {approx = true} : vector<8x8x1xf32> -> vector<8x8x1xf32>
    %53 = vector.broadcast %52 : vector<8x8x1xf32> to vector<8x8x8xf32>
    %54 = arith.mulf %49, %53 : vector<8x8x8xf32>
    %55 = arith.truncf %54 : vector<8x8x8xf32> to vector<8x8x8xbf16>
    "tpu.trace_start"() <{level = 10 : i32, message = "nqk,nkc->nqc"}> : () -> ()
    %cst_32 = arith.constant dense<0.000000e+00> : vector<8x8x16xf32>
    %56 = tpu.matmul %55, %33, %cst_32 {dimension_numbers = #tpu.dot_dimension_numbers<[2], [1], [1], [2], [0, 0, 0, 1, 1, 2], [0], [0]>} : vector<8x8x8xbf16>, vector<8x8x16xbf16>, vector<8x8x16xf32> -> vector<8x8x16xf32>
    "tpu.trace_stop"() : () -> ()
    %57 = vector.extract_strided_slice %20 {offsets = [0, 0, 16], sizes = [8, 8, 16], strides = [1, 1, 1]} : vector<8x8x32xbf16> to vector<8x8x16xbf16>
    %58 = vector.extract_strided_slice %25 {offsets = [0, 0, 16], sizes = [8, 8, 16], strides = [1, 1, 1]} : vector<8x8x32xbf16> to vector<8x8x16xbf16>
    %59 = vector.extract_strided_slice %30 {offsets = [0, 0, 16], sizes = [8, 8, 16], strides = [1, 1, 1]} : vector<8x8x32xbf16> to vector<8x8x16xbf16>
    "tpu.trace_start"() <{level = 10 : i32, message = "nqc,nkc->nqk"}> : () -> ()
    %cst_33 = arith.constant dense<0.000000e+00> : vector<8x8x8xf32>
    %60 = tpu.matmul %57, %58, %cst_33 {dimension_numbers = #tpu.dot_dimension_numbers<[2], [2], [1], [1], [0, 0, 0, 1, 1, 1], [0], [0]>} : vector<8x8x16xbf16>, vector<8x8x16xbf16>, vector<8x8x8xf32> -> vector<8x8x8xf32>
    "tpu.trace_stop"() : () -> ()
    %cst_34 = arith.constant 2.500000e-01 : f32
    %61 = vector.broadcast %cst_34 : f32 to vector<8x8x8xf32>
    %62 = arith.mulf %60, %61 : vector<8x8x8xf32>
    %63 = vector.broadcast %6 : vector<8x1x8xf32> to vector<8x8x8xf32>
    %64 = arith.addf %62, %63 : vector<8x8x8xf32>
    %65 = vector.extract_strided_slice %7 {offsets = [1, 0, 0], sizes = [1, 8, 8], strides = [1, 1, 1]} : vector<2x8x8xbf16> to vector<1x8x8xbf16>
    %66 = vector.shape_cast %65 : vector<1x8x8xbf16> to vector<8x8xbf16>
    %67 = arith.extf %66 : vector<8x8xbf16> to vector<8x8xf32>
    %68 = vector.shape_cast %67 : vector<8x8xf32> to vector<1x8x8xf32>
    %69 = vector.broadcast %68 : vector<1x8x8xf32> to vector<8x8x8xf32>
    %70 = arith.addf %64, %69 : vector<8x8x8xf32>
    %cst_35 = arith.constant dense<0xFF800000> : vector<8x8xf32>
    %71 = vector.multi_reduction <maximumf>, %70, %cst_35 [2] : vector<8x8x8xf32> to vector<8x8xf32>
    %72 = vector.shape_cast %71 : vector<8x8xf32> to vector<8x8x1xf32>
    %73 = vector.broadcast %72 : vector<8x8x1xf32> to vector<8x8x8xf32>
    %74 = arith.subf %70, %73 : vector<8x8x8xf32>
    %75 = math.exp %74 : vector<8x8x8xf32>
    %cst_36 = arith.constant dense<0.000000e+00> : vector<8x8xf32>
    %76 = vector.multi_reduction <add>, %75, %cst_36 [2] : vector<8x8x8xf32> to vector<8x8xf32>
    %77 = vector.shape_cast %76 : vector<8x8xf32> to vector<8x8x1xf32>
    %78 = tpu.reciprocal %77 {approx = true} : vector<8x8x1xf32> -> vector<8x8x1xf32>
    %79 = vector.broadcast %78 : vector<8x8x1xf32> to vector<8x8x8xf32>
    %80 = arith.mulf %75, %79 : vector<8x8x8xf32>
    %81 = arith.truncf %80 : vector<8x8x8xf32> to vector<8x8x8xbf16>
    "tpu.trace_start"() <{level = 10 : i32, message = "nqk,nkc->nqc"}> : () -> ()
    %cst_37 = arith.constant dense<0.000000e+00> : vector<8x8x16xf32>
    %82 = tpu.matmul %81, %59, %cst_37 {dimension_numbers = #tpu.dot_dimension_numbers<[2], [1], [1], [2], [0, 0, 0, 1, 1, 2], [0], [0]>} : vector<8x8x8xbf16>, vector<8x8x16xbf16>, vector<8x8x16xf32> -> vector<8x8x16xf32>
    "tpu.trace_stop"() : () -> ()
    %83 = tpu.concatenate %56, %82 in 2 : vector<8x8x16xf32>, vector<8x8x16xf32> -> vector<8x8x32xf32>
    %84 = vector.shape_cast %83 : vector<8x8x32xf32> to vector<64x32xf32>
    %85 = arith.truncf %84 : vector<64x32xf32> to vector<64x32xbf16>
    %cst_38 = arith.constant dense<0.000000e+00> : vector<64x32xf32>
    %86 = tpu.matmul %85, %14, %cst_38 {dimension_numbers = #tpu.dot_dimension_numbers<[1], [0], [0], [1], [0, 0, 1, 1], [], []>} : vector<64x32xbf16>, vector<32x32xbf16>, vector<64x32xf32> -> vector<64x32xf32>
    %87 = vector.broadcast %15 : vector<1x32xf32> to vector<64x32xf32>
    %88 = arith.addf %86, %87 : vector<64x32xf32>
    %89 = vector.shape_cast %88 : vector<64x32xf32> to vector<8x8x32xf32>
    %90 = arith.truncf %89 : vector<8x8x32xf32> to vector<8x8x32xbf16>
    %c0_39 = arith.constant 0 : index
    %c0_40 = arith.constant 0 : index
    %c0_41 = arith.constant 0 : index
    %91 = vector.load %arg15[%c0_39, %c0_40, %c0_41] : memref<8x8x32xbf16, #tpu.memory_space<vmem>>, vector<8x8x32xbf16>
    tpu.vector_store %arg15[%c0_39, %c0_40, %c0_41], %90 {strides = array<i32>} : memref<8x8x32xbf16, #tpu.memory_space<vmem>>, vector<8x8x32xbf16>,
    %c0_42 = arith.constant 0 : index
    %c0_43 = arith.constant 0 : index
    %c0_44 = arith.constant 0 : index
    %92 = vector.load %arg3[%c0_42, %c0_43, %c0_44] : memref<8x8x1xf32, #tpu.memory_space<vmem>>, vector<8x8x1xf32>
    %cst_45 = arith.constant dense<0.000000e+00> : vector<8x1xf32>
    %93 = vector.multi_reduction <add>, %92, %cst_45 [1] : vector<8x8x1xf32> to vector<8x1xf32>
    %94 = vector.shape_cast %93 : vector<8x1xf32> to vector<8x1x1xf32>
    %cst_46 = arith.constant 9.99999997E-7 : f32
    %95 = vector.broadcast %cst_46 : f32 to vector<8x1x1xf32>
    %96 = arith.addf %95, %94 : vector<8x1x1xf32>
    %97 = vector.broadcast %92 : vector<8x8x1xf32> to vector<8x8x32xf32>
    %98 = arith.mulf %97, %89 : vector<8x8x32xf32>
    %cst_47 = arith.constant dense<0.000000e+00> : vector<8x32xf32>
    %99 = vector.multi_reduction <add>, %98, %cst_47 [1] : vector<8x8x32xf32> to vector<8x32xf32>
    %100 = vector.shape_cast %99 : vector<8x32xf32> to vector<8x1x32xf32>
    %101 = vector.broadcast %96 : vector<8x1x1xf32> to vector<8x1x32xf32>
    %102 = arith.divf %100, %101 : vector<8x1x32xf32>
    %103 = vector.broadcast %102 : vector<8x1x32xf32> to vector<8x8x32xf32>
    %104 = arith.mulf %89, %103 : vector<8x8x32xf32>
    %cst_48 = arith.constant dense<0.000000e+00> : vector<8x8xf32>
    %105 = vector.multi_reduction <add>, %104, %cst_48 [2] : vector<8x8x32xf32> to vector<8x8xf32>
    %106 = vector.shape_cast %105 : vector<8x8xf32> to vector<8x8x1xf32>
    %cst_49 = arith.constant 0.176776692 : f32
    %107 = vector.broadcast %cst_49 : f32 to vector<8x8x1xf32>
    %108 = arith.mulf %106, %107 : vector<8x8x1xf32>
    %109 = arith.addf %108, %92 : vector<8x8x1xf32>
    %cst_50 = arith.constant dense<0xFF800000> : vector<8x1xf32>
    %110 = vector.multi_reduction <maximumf>, %109, %cst_50 [1] : vector<8x8x1xf32> to vector<8x1xf32>
    %111 = vector.shape_cast %110 : vector<8x1xf32> to vector<8x1x1xf32>
    %112 = vector.broadcast %111 : vector<8x1x1xf32> to vector<8x8x1xf32>
    %113 = arith.subf %109, %112 : vector<8x8x1xf32>
    %114 = math.exp %113 : vector<8x8x1xf32>
    %cst_51 = arith.constant dense<0.000000e+00> : vector<8x1xf32>
    %115 = vector.multi_reduction <add>, %114, %cst_51 [1] : vector<8x8x1xf32> to vector<8x1xf32>
    %116 = vector.shape_cast %115 : vector<8x1xf32> to vector<8x1x1xf32>
    %117 = vector.broadcast %116 : vector<8x1x1xf32> to vector<8x8x1xf32>
    %118 = arith.divf %114, %117 : vector<8x8x1xf32>
    %119 = vector.broadcast %118 : vector<8x8x1xf32> to vector<8x8x32xf32>
    %120 = arith.mulf %89, %119 : vector<8x8x32xf32>
    %cst_52 = arith.constant dense<0.000000e+00> : vector<8x32xf32>
    %121 = vector.multi_reduction <add>, %120, %cst_52 [1] : vector<8x8x32xf32> to vector<8x32xf32>
    %122 = vector.shape_cast %121 : vector<8x32xf32> to vector<8x1x32xf32>
    %123 = vector.shape_cast %122 : vector<8x1x32xf32> to vector<8x32xf32>
    %124 = arith.truncf %123 : vector<8x32xf32> to vector<8x32xbf16>
    %c0_53 = arith.constant 0 : index
    %c0_54 = arith.constant 0 : index
    %125 = vector.load %arg13[%c0_53, %c0_54] : memref<32x32xbf16, #tpu.memory_space<vmem>>, vector<32x32xbf16>
    %cst_55 = arith.constant dense<0.000000e+00> : vector<8x32xf32>
    %126 = tpu.matmul %124, %125, %cst_55 {dimension_numbers = #tpu.dot_dimension_numbers<[1], [0], [0], [1], [0, 0, 1, 1], [], []>} : vector<8x32xbf16>, vector<32x32xbf16>, vector<8x32xf32> -> vector<8x32xf32>
    %c0_56 = arith.constant 0 : index
    %c0_57 = arith.constant 0 : index
    %127 = vector.load %arg14[%c0_56, %c0_57] : memref<1x32xf32, #tpu.memory_space<vmem>>, vector<1x32xf32>
    %128 = vector.broadcast %127 : vector<1x32xf32> to vector<8x32xf32>
    %129 = arith.addf %126, %128 : vector<8x32xf32>
    %c0_58 = arith.constant 0 : index
    %c0_59 = arith.constant 0 : index
    %130 = vector.load %arg16[%c0_58, %c0_59] : memref<8x32xf32, #tpu.memory_space<vmem>>, vector<8x32xf32>
    tpu.vector_store %arg16[%c0_58, %c0_59], %129 {strides = array<i32>} : memref<8x32xf32, #tpu.memory_space<vmem>>, vector<8x32xf32>,
    return
  }
  func.func @transform_0(%arg0: i32) -> (i32, i32, i32) {
    %c0_i32 = arith.constant 0 : i32
    %c0_i32_0 = arith.constant 0 : i32
    %c0_i32_1 = arith.constant 0 : i32
    return %arg0, %c0_i32, %c0_i32_0 : i32, i32, i32
  }
  func.func @transform_1(%arg0: i32) -> (i32, i32, i32) {
    %c0_i32 = arith.constant 0 : i32
    %c0_i32_0 = arith.constant 0 : i32
    %c0_i32_1 = arith.constant 0 : i32
    return %arg0, %c0_i32, %c0_i32_0 : i32, i32, i32
  }
  func.func @transform_2(%arg0: i32) -> (i32, i32, i32) {
    %c0_i32 = arith.constant 0 : i32
    %c0_i32_0 = arith.constant 0 : i32
    %c0_i32_1 = arith.constant 0 : i32
    return %arg0, %c0_i32, %c0_i32_0 : i32, i32, i32
  }
  func.func @transform_3(%arg0: i32) -> (i32, i32, i32) {
    %c0_i32 = arith.constant 0 : i32
    %c0_i32_0 = arith.constant 0 : i32
    %c0_i32_1 = arith.constant 0 : i32
    %c0_i32_2 = arith.constant 0 : i32
    return %c0_i32, %c0_i32_0, %c0_i32_1 : i32, i32, i32
  }
  func.func @transform_4(%arg0: i32) -> (i32, i32) {
    %c0_i32 = arith.constant 0 : i32
    %c0_i32_0 = arith.constant 0 : i32
    %c0_i32_1 = arith.constant 0 : i32
    return %c0_i32, %c0_i32_0 : i32, i32
  }
  func.func @transform_5(%arg0: i32) -> (i32, i32) {
    %c0_i32 = arith.constant 0 : i32
    %c0_i32_0 = arith.constant 0 : i32
    %c0_i32_1 = arith.constant 0 : i32
    return %c0_i32, %c0_i32_0 : i32, i32
  }
  func.func @transform_6(%arg0: i32) -> (i32, i32) {
    %c0_i32 = arith.constant 0 : i32
    %c0_i32_0 = arith.constant 0 : i32
    %c0_i32_1 = arith.constant 0 : i32
    return %c0_i32, %c0_i32_0 : i32, i32
  }
  func.func @transform_7(%arg0: i32) -> (i32, i32) {
    %c0_i32 = arith.constant 0 : i32
    %c0_i32_0 = arith.constant 0 : i32
    %c0_i32_1 = arith.constant 0 : i32
    return %c0_i32, %c0_i32_0 : i32, i32
  }
  func.func @transform_8(%arg0: i32) -> (i32, i32) {
    %c0_i32 = arith.constant 0 : i32
    %c0_i32_0 = arith.constant 0 : i32
    %c0_i32_1 = arith.constant 0 : i32
    return %c0_i32, %c0_i32_0 : i32, i32
  }
  func.func @transform_9(%arg0: i32) -> (i32, i32) {
    %c0_i32 = arith.constant 0 : i32
    %c0_i32_0 = arith.constant 0 : i32
    %c0_i32_1 = arith.constant 0 : i32
    return %c0_i32, %c0_i32_0 : i32, i32
  }
  func.func @transform_10(%arg0: i32) -> (i32, i32) {
    %c0_i32 = arith.constant 0 : i32
    %c0_i32_0 = arith.constant 0 : i32
    %c0_i32_1 = arith.constant 0 : i32
    return %c0_i32, %c0_i32_0 : i32, i32
  }
  func.func @transform_11(%arg0: i32) -> (i32, i32) {
    %c0_i32 = arith.constant 0 : i32
    %c0_i32_0 = arith.constant 0 : i32
    %c0_i32_1 = arith.constant 0 : i32
    return %c0_i32, %c0_i32_0 : i32, i32
  }
  func.func @transform_12(%arg0: i32) -> (i32, i32) {
    %c0_i32 = arith.constant 0 : i32
    %c0_i32_0 = arith.constant 0 : i32
    %c0_i32_1 = arith.constant 0 : i32
    return %c0_i32, %c0_i32_0 : i32, i32
  }
  func.func @transform_13(%arg0: i32) -> (i32, i32) {
    %c0_i32 = arith.constant 0 : i32
    %c0_i32_0 = arith.constant 0 : i32
    %c0_i32_1 = arith.constant 0 : i32
    return %c0_i32, %c0_i32_0 : i32, i32
  }
  func.func @transform_14(%arg0: i32) -> (i32, i32, i32) {
    %c0_i32 = arith.constant 0 : i32
    %c0_i32_0 = arith.constant 0 : i32
    %c0_i32_1 = arith.constant 0 : i32
    return %arg0, %c0_i32, %c0_i32_0 : i32, i32, i32
  }
  func.func @transform_15(%arg0: i32) -> (i32, i32) {
    %c0_i32 = arith.constant 0 : i32
    %c0_i32_0 = arith.constant 0 : i32
    return %arg0, %c0_i32 : i32, i32
  }
}

</mosaic_0001>

<llo_original>
// kernel: tpu_custom_call.1
$region0: #{tpu_custom_call.1}
  #allocation0 [shape = 'u32[]', space=smem, size = 0x4, offset = 0x4, fixed_abs, tag = 'smem constant byte address 0x4 - core index']
  #allocation1 [shape = 'u32[72,128]{1,0:T(1,128)}', space=vmem, size = 0x9000, scoped, tag = 'internal scratch']
  %s0 = inlined_call_operand.vmem [shape: bf16[16,8,32], index: 0, kind: input, shape index: {}]
  %s1 = inlined_call_operand.vmem [shape: f32[16,1,8], index: 1, kind: input, shape index: {}]
  %s2 = inlined_call_operand.vmem [shape: f32[16,8,1], index: 2, kind: input, shape index: {}]
  %s3 = inlined_call_operand.vmem [shape: bf16[2,8,8], index: 3, kind: input, shape index: {}]
  %s4 = inlined_call_operand.vmem [shape: bf16[32,32], index: 4, kind: input, shape index: {}]
  %s5 = inlined_call_operand.vmem [shape: f32[1,32], index: 5, kind: input, shape index: {}]
  %s6 = inlined_call_operand.vmem [shape: bf16[32,32], index: 6, kind: input, shape index: {}]
  %s7 = inlined_call_operand.vmem [shape: f32[1,32], index: 7, kind: input, shape index: {}]
  %s8 = inlined_call_operand.vmem [shape: bf16[32,32], index: 8, kind: input, shape index: {}]
  %s9 = inlined_call_operand.vmem [shape: f32[1,32], index: 9, kind: input, shape index: {}]
  %s10 = inlined_call_operand.vmem [shape: bf16[32,32], index: 10, kind: input, shape index: {}]
  %s11 = inlined_call_operand.vmem [shape: f32[1,32], index: 11, kind: input, shape index: {}]
  %s12 = inlined_call_operand.vmem [shape: bf16[32,32], index: 12, kind: input, shape index: {}]
  %s13 = inlined_call_operand.vmem [shape: f32[1,32], index: 13, kind: input, shape index: {}]
  %s14 = inlined_call_operand.hbm [shape: bf16[16,8,32], index: 14, kind: output, shape index: {0}]
  %s15 = inlined_call_operand.hbm [shape: f32[16,32], index: 15, kind: output, shape index: {1}]
  %16 = xla_tuple %s14, %s15
  %s17 = sld [smem:[#allocation0]]
  $region97: #{tpu_custom_call.1} parent=0
    _
  %s19 = ssub.s32 1, %s17
  %s20 = scalar_select 0, %s19, %s17
  $region1: #{tpu_custom_call.1} parent=0
    #allocation2 [shape = 'u8[32768]{0}', space=vmem, size = 0x8000, scoped, tag = 'output window, operand 0']
    #allocation3 [shape = 's32[2]{0}', space=sflag, size = 0x8, scoped, tag = 'scoped memory for tpu_custom_call.1']
    #allocation4 [shape = 'u8[8192]{0}', space=vmem, size = 0x2000, scoped, tag = 'output window, operand 1']
    #allocation5 [shape = 's32[2]{0}', space=sflag, size = 0x8, scoped, tag = 'scoped memory for tpu_custom_call.1']
    %21 = vsyncpa [#allocation3], 0
    %s22 = scalar_lea.sflag [#allocation3], 1
    %23 = vsyncpa %s22, 0
    %24 = vsyncpa [#allocation5], 0
    %s25 = scalar_lea.sflag [#allocation5], 1
    %26 = vsyncpa %s25, 0
    loop: start=0, step=1, limit=4
    $region2: #{tpu_custom_call.1} parent=1 // loop_pre_header
      _
    $region3: #{tpu_custom_call.1} parent=1 // loop_header
      %s28 = sphi 0, %s32
      %p29 = scmp.ge.s32.totalorder %s28, 4
      %s38 = sphi 0, %s40
      %s41 = sphi 0, %s38
      %s42 = sphi 0, %s41
      %s58 = sphi 0, %s42
      %s64 = sphi 0, %s66
      %s67 = sphi 0, %s64
      %s68 = sphi 0, %s67
      %s84 = sphi 0, %s68
      %s90 = sphi 0, %s92
      %s93 = sphi 0, %s90
      %s94 = sphi 0, %s93
      %s110 = sphi 0, %s94
      %s114 = sphi 0, %s114
      %s116 = sphi 0, %s114
      %s117 = sphi 0, %s116
      %s131 = sphi 0, %s117
      %s135 = sphi 0, %s135
      %s137 = sphi 0, %s135
      %s138 = sphi 0, %s137
      %s152 = sphi 0, %s138
      %s156 = sphi 0, %s156
      %s158 = sphi 0, %s156
      %s159 = sphi 0, %s158
      %s173 = sphi 0, %s159
      %s177 = sphi 0, %s177
      %s179 = sphi 0, %s177
      %s180 = sphi 0, %s179
      %s194 = sphi 0, %s180
      %s198 = sphi 0, %s198
      %s200 = sphi 0, %s198
      %s201 = sphi 0, %s200
      %s215 = sphi 0, %s201
      %s219 = sphi 0, %s219
      %s221 = sphi 0, %s219
      %s222 = sphi 0, %s221
      %s236 = sphi 0, %s222
      %s240 = sphi 0, %s240
      %s242 = sphi 0, %s240
      %s243 = sphi 0, %s242
      %s257 = sphi 0, %s243
      %s261 = sphi 0, %s261
      %s263 = sphi 0, %s261
      %s264 = sphi 0, %s263
      %s278 = sphi 0, %s264
      %s282 = sphi 0, %s282
      %s284 = sphi 0, %s282
      %s285 = sphi 0, %s284
      %s299 = sphi 0, %s285
      %s303 = sphi 0, %s303
      %s305 = sphi 0, %s303
      %s306 = sphi 0, %s305
      %s320 = sphi 0, %s306
      %s324 = sphi 0, %s324
      %s326 = sphi 0, %s324
      %s327 = sphi 0, %s326
      %s341 = sphi 0, %s327
      %s347 = sphi 0, %s349
      %s350 = sphi 0, %s347
      %s351 = sphi 0, %s350
      %s367 = sphi 0, %s351
      %s373 = sphi 0, %s375
      %s376 = sphi 0, %s373
      %s377 = sphi 0, %s376
      %s393 = sphi 0, %s377
    $region4: #{tpu_custom_call.1} parent=1 // loop_header_branch
      %31 = sbr.rel (%p29) target = $region8
    $region5: #{tpu_custom_call.1} parent=1 // loop_body
      %s33 = ssub.s32 %s28, 1
      %s34 = ssub.s32 %s28, 2
      %s35 = sadd.s32 %s28, 1
      %s36 = ssub.s32 %s28, %s35
      %p37 = scmp.eq.s32.totalorder %s36, 0
      %s39 = sadd.s32 %s38, 1
      %s40 = scalar_select %p37, %s38, %s39
      %p43 = pneg %p37
      %p44 = scmp.eq.s32.totalorder %s28, 1
      %p45 = por %p43, %p44
      %p46 = scmp.ne.s32.totalorder %s38, %s41
      %p47 = scmp.eq.s32.totalorder %s28, 0
      %p48 = por %p46, %p47
      %p49 = scmp.ne.s32.totalorder %s38, %s41
      %p50 = scmp.eq.s32.totalorder %s33, 1
      %p51 = por %p49, %p50
      %p52 = scmp.ne.s32.totalorder %s41, %s42
      %p53 = scmp.eq.s32.totalorder %s33, 0
      %p54 = por %p52, %p53
      %p55 = scmp.ne.s32.totalorder %s41, %s42
      %p56 = scmp.eq.s32.totalorder %s34, 1
      %p57 = por %p55, %p56
      %p59 = scmp.ne.s32.totalorder %s42, %s58
      %p60 = scmp.eq.s32.totalorder %s34, 0
      %p61 = por %p59, %p60
      %s62 = ssub.s32 %s28, %s35
      %p63 = scmp.eq.s32.totalorder %s62, 0
      %s65 = sadd.s32 %s64, 1
      %s66 = scalar_select %p63, %s64, %s65
      %p69 = pneg %p63
      %p70 = scmp.eq.s32.totalorder %s28, 1
      %p71 = por %p69, %p70
      %p72 = scmp.ne.s32.totalorder %s64, %s67
      %p73 = scmp.eq.s32.totalorder %s28, 0
      %p74 = por %p72, %p73
      %p75 = scmp.ne.s32.totalorder %s64, %s67
      %p76 = scmp.eq.s32.totalorder %s33, 1
      %p77 = por %p75, %p76
      %p78 = scmp.ne.s32.totalorder %s67, %s68
      %p79 = scmp.eq.s32.totalorder %s33, 0
      %p80 = por %p78, %p79
      %p81 = scmp.ne.s32.totalorder %s67, %s68
      %p82 = scmp.eq.s32.totalorder %s34, 1
      %p83 = por %p81, %p82
      %p85 = scmp.ne.s32.totalorder %s68, %s84
      %p86 = scmp.eq.s32.totalorder %s34, 0
      %p87 = por %p85, %p86
      %s88 = ssub.s32 %s28, %s35
      %p89 = scmp.eq.s32.totalorder %s88, 0
      %s91 = sadd.s32 %s90, 1
      %s92 = scalar_select %p89, %s90, %s91
      %p95 = pneg %p89
      %p96 = scmp.eq.s32.totalorder %s28, 1
      %p97 = por %p95, %p96
      %p98 = scmp.ne.s32.totalorder %s90, %s93
      %p99 = scmp.eq.s32.totalorder %s28, 0
      %p100 = por %p98, %p99
      %p101 = scmp.ne.s32.totalorder %s90, %s93
      %p102 = scmp.eq.s32.totalorder %s33, 1
      %p103 = por %p101, %p102
      %p104 = scmp.ne.s32.totalorder %s93, %s94
      %p105 = scmp.eq.s32.totalorder %s33, 0
      %p106 = por %p104, %p105
      %p107 = scmp.ne.s32.totalorder %s93, %s94
      %p108 = scmp.eq.s32.totalorder %s34, 1
      %p109 = por %p107, %p108
      %p111 = scmp.ne.s32.totalorder %s94, %s110
      %p112 = scmp.eq.s32.totalorder %s34, 0
      %p113 = por %p111, %p112
      %s115 = sadd.s32 %s114, 1
      %p118 = scmp.eq.s32.totalorder %s28, 1
      %p119 = scmp.ne.s32.totalorder %s114, %s116
      %p120 = scmp.eq.s32.totalorder %s28, 0
      %p121 = por %p119, %p120
      %p122 = scmp.ne.s32.totalorder %s114, %s116
      %p123 = scmp.eq.s32.totalorder %s33, 1
      %p124 = por %p122, %p123
      %p125 = scmp.ne.s32.totalorder %s116, %s117
      %p126 = scmp.eq.s32.totalorder %s33, 0
      %p127 = por %p125, %p126
      %p128 = scmp.ne.s32.totalorder %s116, %s117
      %p129 = scmp.eq.s32.totalorder %s34, 1
      %p130 = por %p128, %p129
      %p132 = scmp.ne.s32.totalorder %s117, %s131
      %p133 = scmp.eq.s32.totalorder %s34, 0
      %p134 = por %p132, %p133
      %s136 = sadd.s32 %s135, 1
      %p139 = scmp.eq.s32.totalorder %s28, 1
      %p140 = scmp.ne.s32.totalorder %s135, %s137
      %p141 = scmp.eq.s32.totalorder %s28, 0
      %p142 = por %p140, %p141
      %p143 = scmp.ne.s32.totalorder %s135, %s137
      %p144 = scmp.eq.s32.totalorder %s33, 1
      %p145 = por %p143, %p144
      %p146 = scmp.ne.s32.totalorder %s137, %s138
      %p147 = scmp.eq.s32.totalorder %s33, 0
      %p148 = por %p146, %p147
      %p149 = scmp.ne.s32.totalorder %s137, %s138
      %p150 = scmp.eq.s32.totalorder %s34, 1
      %p151 = por %p149, %p150
      %p153 = scmp.ne.s32.totalorder %s138, %s152
      %p154 = scmp.eq.s32.totalorder %s34, 0
      %p155 = por %p153, %p154
      %s157 = sadd.s32 %s156, 1
      %p160 = scmp.eq.s32.totalorder %s28, 1
      %p161 = scmp.ne.s32.totalorder %s156, %s158
      %p162 = scmp.eq.s32.totalorder %s28, 0
      %p163 = por %p161, %p162
      %p164 = scmp.ne.s32.totalorder %s156, %s158
      %p165 = scmp.eq.s32.totalorder %s33, 1
      %p166 = por %p164, %p165
      %p167 = scmp.ne.s32.totalorder %s158, %s159
      %p168 = scmp.eq.s32.totalorder %s33, 0
      %p169 = por %p167, %p168
      %p170 = scmp.ne.s32.totalorder %s158, %s159
      %p171 = scmp.eq.s32.totalorder %s34, 1
      %p172 = por %p170, %p171
      %p174 = scmp.ne.s32.totalorder %s159, %s173
      %p175 = scmp.eq.s32.totalorder %s34, 0
      %p176 = por %p174, %p175
      %s178 = sadd.s32 %s177, 1
      %p181 = scmp.eq.s32.totalorder %s28, 1
      %p182 = scmp.ne.s32.totalorder %s177, %s179
      %p183 = scmp.eq.s32.totalorder %s28, 0
      %p184 = por %p182, %p183
      %p185 = scmp.ne.s32.totalorder %s177, %s179
      %p186 = scmp.eq.s32.totalorder %s33, 1
      %p187 = por %p185, %p186
      %p188 = scmp.ne.s32.totalorder %s179, %s180
      %p189 = scmp.eq.s32.totalorder %s33, 0
      %p190 = por %p188, %p189
      %p191 = scmp.ne.s32.totalorder %s179, %s180
      %p192 = scmp.eq.s32.totalorder %s34, 1
      %p193 = por %p191, %p192
      %p195 = scmp.ne.s32.totalorder %s180, %s194
      %p196 = scmp.eq.s32.totalorder %s34, 0
      %p197 = por %p195, %p196
      %s199 = sadd.s32 %s198, 1
      %p202 = scmp.eq.s32.totalorder %s28, 1
      %p203 = scmp.ne.s32.totalorder %s198, %s200
      %p204 = scmp.eq.s32.totalorder %s28, 0
      %p205 = por %p203, %p204
      %p206 = scmp.ne.s32.totalorder %s198, %s200
      %p207 = scmp.eq.s32.totalorder %s33, 1
      %p208 = por %p206, %p207
      %p209 = scmp.ne.s32.totalorder %s200, %s201
      %p210 = scmp.eq.s32.totalorder %s33, 0
      %p211 = por %p209, %p210
      %p212 = scmp.ne.s32.totalorder %s200, %s201
      %p213 = scmp.eq.s32.totalorder %s34, 1
      %p214 = por %p212, %p213
      %p216 = scmp.ne.s32.totalorder %s201, %s215
      %p217 = scmp.eq.s32.totalorder %s34, 0
      %p218 = por %p216, %p217
      %s220 = sadd.s32 %s219, 1
      %p223 = scmp.eq.s32.totalorder %s28, 1
      %p224 = scmp.ne.s32.totalorder %s219, %s221
      %p225 = scmp.eq.s32.totalorder %s28, 0
      %p226 = por %p224, %p225
      %p227 = scmp.ne.s32.totalorder %s219, %s221
      %p228 = scmp.eq.s32.totalorder %s33, 1
      %p229 = por %p227, %p228
      %p230 = scmp.ne.s32.totalorder %s221, %s222
      %p231 = scmp.eq.s32.totalorder %s33, 0
      %p232 = por %p230, %p231
      %p233 = scmp.ne.s32.totalorder %s221, %s222
      %p234 = scmp.eq.s32.totalorder %s34, 1
      %p235 = por %p233, %p234
      %p237 = scmp.ne.s32.totalorder %s222, %s236
      %p238 = scmp.eq.s32.totalorder %s34, 0
      %p239 = por %p237, %p238
      %s241 = sadd.s32 %s240, 1
      %p244 = scmp.eq.s32.totalorder %s28, 1
      %p245 = scmp.ne.s32.totalorder %s240, %s242
      %p246 = scmp.eq.s32.totalorder %s28, 0
      %p247 = por %p245, %p246
      %p248 = scmp.ne.s32.totalorder %s240, %s242
      %p249 = scmp.eq.s32.totalorder %s33, 1
      %p250 = por %p248, %p249
      %p251 = scmp.ne.s32.totalorder %s242, %s243
      %p252 = scmp.eq.s32.totalorder %s33, 0
      %p253 = por %p251, %p252
      %p254 = scmp.ne.s32.totalorder %s242, %s243
      %p255 = scmp.eq.s32.totalorder %s34, 1
      %p256 = por %p254, %p255
      %p258 = scmp.ne.s32.totalorder %s243, %s257
      %p259 = scmp.eq.s32.totalorder %s34, 0
      %p260 = por %p258, %p259
      %s262 = sadd.s32 %s261, 1
      %p265 = scmp.eq.s32.totalorder %s28, 1
      %p266 = scmp.ne.s32.totalorder %s261, %s263
      %p267 = scmp.eq.s32.totalorder %s28, 0
      %p268 = por %p266, %p267
      %p269 = scmp.ne.s32.totalorder %s261, %s263
      %p270 = scmp.eq.s32.totalorder %s33, 1
      %p271 = por %p269, %p270
      %p272 = scmp.ne.s32.totalorder %s263, %s264
      %p273 = scmp.eq.s32.totalorder %s33, 0
      %p274 = por %p272, %p273
      %p275 = scmp.ne.s32.totalorder %s263, %s264
      %p276 = scmp.eq.s32.totalorder %s34, 1
      %p277 = por %p275, %p276
      %p279 = scmp.ne.s32.totalorder %s264, %s278
      %p280 = scmp.eq.s32.totalorder %s34, 0
      %p281 = por %p279, %p280
      %s283 = sadd.s32 %s282, 1
      %p286 = scmp.eq.s32.totalorder %s28, 1
      %p287 = scmp.ne.s32.totalorder %s282, %s284
      %p288 = scmp.eq.s32.totalorder %s28, 0
      %p289 = por %p287, %p288
      %p290 = scmp.ne.s32.totalorder %s282, %s284
      %p291 = scmp.eq.s32.totalorder %s33, 1
      %p292 = por %p290, %p291
      %p293 = scmp.ne.s32.totalorder %s284, %s285
      %p294 = scmp.eq.s32.totalorder %s33, 0
      %p295 = por %p293, %p294
      %p296 = scmp.ne.s32.totalorder %s284, %s285
      %p297 = scmp.eq.s32.totalorder %s34, 1
      %p298 = por %p296, %p297
      %p300 = scmp.ne.s32.totalorder %s285, %s299
      %p301 = scmp.eq.s32.totalorder %s34, 0
      %p302 = por %p300, %p301
      %s304 = sadd.s32 %s303, 1
      %p307 = scmp.eq.s32.totalorder %s28, 1
      %p308 = scmp.ne.s32.totalorder %s303, %s305
      %p309 = scmp.eq.s32.totalorder %s28, 0
      %p310 = por %p308, %p309
      %p311 = scmp.ne.s32.totalorder %s303, %s305
      %p312 = scmp.eq.s32.totalorder %s33, 1
      %p313 = por %p311, %p312
      %p314 = scmp.ne.s32.totalorder %s305, %s306
      %p315 = scmp.eq.s32.totalorder %s33, 0
      %p316 = por %p314, %p315
      %p317 = scmp.ne.s32.totalorder %s305, %s306
      %p318 = scmp.eq.s32.totalorder %s34, 1
      %p319 = por %p317, %p318
      %p321 = scmp.ne.s32.totalorder %s306, %s320
      %p322 = scmp.eq.s32.totalorder %s34, 0
      %p323 = por %p321, %p322
      %s325 = sadd.s32 %s324, 1
      %p328 = scmp.eq.s32.totalorder %s28, 1
      %p329 = scmp.ne.s32.totalorder %s324, %s326
      %p330 = scmp.eq.s32.totalorder %s28, 0
      %p331 = por %p329, %p330
      %p332 = scmp.ne.s32.totalorder %s324, %s326
      %p333 = scmp.eq.s32.totalorder %s33, 1
      %p334 = por %p332, %p333
      %p335 = scmp.ne.s32.totalorder %s326, %s327
      %p336 = scmp.eq.s32.totalorder %s33, 0
      %p337 = por %p335, %p336
      %p338 = scmp.ne.s32.totalorder %s326, %s327
      %p339 = scmp.eq.s32.totalorder %s34, 1
      %p340 = por %p338, %p339
      %p342 = scmp.ne.s32.totalorder %s327, %s341
      %p343 = scmp.eq.s32.totalorder %s34, 0
      %p344 = por %p342, %p343
      %s345 = ssub.s32 %s28, %s35
      %p346 = scmp.eq.s32.totalorder %s345, 0
      %s348 = sadd.s32 %s347, 1
      %s349 = scalar_select %p346, %s347, %s348
      %p352 = pneg %p346
      %p353 = scmp.eq.s32.totalorder %s28, 1
      %p354 = por %p352, %p353
      %p355 = scmp.ne.s32.totalorder %s347, %s350
      %p356 = scmp.eq.s32.totalorder %s28, 0
      %p357 = por %p355, %p356
      %p358 = scmp.ne.s32.totalorder %s347, %s350
      %p359 = scmp.eq.s32.totalorder %s33, 1
      %p360 = por %p358, %p359
      %p361 = scmp.ne.s32.totalorder %s350, %s351
      %p362 = scmp.eq.s32.totalorder %s33, 0
      %p363 = por %p361, %p362
      %p364 = scmp.ne.s32.totalorder %s350, %s351
      %p365 = scmp.eq.s32.totalorder %s34, 1
      %p366 = por %p364, %p365
      %p368 = scmp.ne.s32.totalorder %s351, %s367
      %p369 = scmp.eq.s32.totalorder %s34, 0
      %p370 = por %p368, %p369
      %s371 = ssub.s32 %s28, %s35
      %p372 = scmp.eq.s32.totalorder %s371, 0
      %s374 = sadd.s32 %s373, 1
      %s375 = scalar_select %p372, %s373, %s374
      %p378 = pneg %p372
      %p379 = scmp.eq.s32.totalorder %s28, 1
      %p380 = por %p378, %p379
      %p381 = scmp.ne.s32.totalorder %s373, %s376
      %p382 = scmp.eq.s32.totalorder %s28, 0
      %p383 = por %p381, %p382
      %p384 = scmp.ne.s32.totalorder %s373, %s376
      %p385 = scmp.eq.s32.totalorder %s33, 1
      %p386 = por %p384, %p385
      %p387 = scmp.ne.s32.totalorder %s376, %s377
      %p388 = scmp.eq.s32.totalorder %s33, 0
      %p389 = por %p387, %p388
      %p390 = scmp.ne.s32.totalorder %s376, %s377
      %p391 = scmp.eq.s32.totalorder %s34, 1
      %p392 = por %p390, %p391
      %p394 = scmp.ne.s32.totalorder %s377, %s393
      %p395 = scmp.eq.s32.totalorder %s34, 0
      %p396 = por %p394, %p395
      %p397 = scmp.le.s32.totalorder 1, %s28
      %p398 = scmp.lt.s32.totalorder %s28, 3
      %p399 = pnand %p397, %p398
      %p400 = pneg %p399
      // Predicated region
      $region9: #{tpu_custom_call.1} parent=5 // pred_check
        _
      $region10: #{tpu_custom_call.1} parent=5 // pred_check_branch
        %402 = sbr.rel (%p399) target = $region12
      $region11: #{tpu_custom_call.1} parent=5 // pred_region
        %s403 = ssub.s32 %s28, 1
        // Predicated region
        $region13: #{tpu_custom_call.1} parent=11 // pred_check
          %p404 = pneg %p127
        $region14: #{tpu_custom_call.1} parent=11 // pred_check_branch
          %406 = sbr.rel (%p404) target = $region16
        $region15: #{tpu_custom_call.1} parent=11 // pred_region
          _
        $region16: #{tpu_custom_call.1} parent=11 // pred_fallthru
          _
        // Predicated region
        $region17: #{tpu_custom_call.1} parent=11 // pred_check
          %p407 = pneg %p148
        $region18: #{tpu_custom_call.1} parent=11 // pred_check_branch
          %409 = sbr.rel (%p407) target = $region20
        $region19: #{tpu_custom_call.1} parent=11 // pred_region
          _
        $region20: #{tpu_custom_call.1} parent=11 // pred_fallthru
          _
        // Predicated region
        $region21: #{tpu_custom_call.1} parent=11 // pred_check
          %p410 = pneg %p169
        $region22: #{tpu_custom_call.1} parent=11 // pred_check_branch
          %412 = sbr.rel (%p410) target = $region24
        $region23: #{tpu_custom_call.1} parent=11 // pred_region
          _
        $region24: #{tpu_custom_call.1} parent=11 // pred_fallthru
          _
        // Predicated region
        $region25: #{tpu_custom_call.1} parent=11 // pred_check
          %p413 = pneg %p190
        $region26: #{tpu_custom_call.1} parent=11 // pred_check_branch
          %415 = sbr.rel (%p413) target = $region28
        $region27: #{tpu_custom_call.1} parent=11 // pred_region
          _
        $region28: #{tpu_custom_call.1} parent=11 // pred_fallthru
          _
        // Predicated region
        $region29: #{tpu_custom_call.1} parent=11 // pred_check
          %p416 = pneg %p211
        $region30: #{tpu_custom_call.1} parent=11 // pred_check_branch
          %418 = sbr.rel (%p416) target = $region32
        $region31: #{tpu_custom_call.1} parent=11 // pred_region
          _
        $region32: #{tpu_custom_call.1} parent=11 // pred_fallthru
          _
        // Predicated region
        $region33: #{tpu_custom_call.1} parent=11 // pred_check
          %p419 = pneg %p232
        $region34: #{tpu_custom_call.1} parent=11 // pred_check_branch
          %421 = sbr.rel (%p419) target = $region36
        $region35: #{tpu_custom_call.1} parent=11 // pred_region
          _
        $region36: #{tpu_custom_call.1} parent=11 // pred_fallthru
          _
        // Predicated region
        $region37: #{tpu_custom_call.1} parent=11 // pred_check
          %p422 = pneg %p253
        $region38: #{tpu_custom_call.1} parent=11 // pred_check_branch
          %424 = sbr.rel (%p422) target = $region40
        $region39: #{tpu_custom_call.1} parent=11 // pred_region
          _
        $region40: #{tpu_custom_call.1} parent=11 // pred_fallthru
          _
        // Predicated region
        $region41: #{tpu_custom_call.1} parent=11 // pred_check
          %p425 = pneg %p274
        $region42: #{tpu_custom_call.1} parent=11 // pred_check_branch
          %427 = sbr.rel (%p425) target = $region44
        $region43: #{tpu_custom_call.1} parent=11 // pred_region
          _
        $region44: #{tpu_custom_call.1} parent=11 // pred_fallthru
          _
        // Predicated region
        $region45: #{tpu_custom_call.1} parent=11 // pred_check
          %p428 = pneg %p295
        $region46: #{tpu_custom_call.1} parent=11 // pred_check_branch
          %430 = sbr.rel (%p428) target = $region48
        $region47: #{tpu_custom_call.1} parent=11 // pred_region
          _
        $region48: #{tpu_custom_call.1} parent=11 // pred_fallthru
          _
        // Predicated region
        $region49: #{tpu_custom_call.1} parent=11 // pred_check
          %p431 = pneg %p316
        $region50: #{tpu_custom_call.1} parent=11 // pred_check_branch
          %433 = sbr.rel (%p431) target = $region52
        $region51: #{tpu_custom_call.1} parent=11 // pred_region
          _
        $region52: #{tpu_custom_call.1} parent=11 // pred_fallthru
          _
        // Predicated region
        $region53: #{tpu_custom_call.1} parent=11 // pred_check
          %p434 = pneg %p337
        $region54: #{tpu_custom_call.1} parent=11 // pred_check_branch
          %436 = sbr.rel (%p434) target = $region56
        $region55: #{tpu_custom_call.1} parent=11 // pred_region
          _
        $region56: #{tpu_custom_call.1} parent=11 // pred_fallthru
          _
      $region12: #{tpu_custom_call.1} parent=5 // pred_fallthru
        _
      %p437 = scmp.lt.s32.totalorder %s28, 2
      // Predicated region
      $region57: #{tpu_custom_call.1} parent=5 // pred_check
        %p438 = pneg %p437
      $region58: #{tpu_custom_call.1} parent=5 // pred_check_branch
        %440 = sbr.rel (%p438) target = $region60
      $region59: #{tpu_custom_call.1} parent=5 // pred_region
        // Predicated region
        $region61: #{tpu_custom_call.1} parent=59 // pred_check
          %p441 = pneg %p48
        $region62: #{tpu_custom_call.1} parent=59 // pred_check_branch
          %443 = sbr.rel (%p441) target = $region64
        $region63: #{tpu_custom_call.1} parent=59 // pred_region
          %s444 = smul.u32 8, %s28
          %p445 = scmp.lt.s32.totalorder %s444, 15
          %s446 = scalar_select %p445, %s444, 15
          %s447 = smul.addr %s446, 4
          %s448 = scalar_lea.vmem %s0, %s447
          %s449 = smul.u32 8, %s28
        $region64: #{tpu_custom_call.1} parent=59 // pred_fallthru
          _
        // Predicated region
        $region65: #{tpu_custom_call.1} parent=59 // pred_check
          %p450 = pneg %p74
        $region66: #{tpu_custom_call.1} parent=59 // pred_check_branch
          %452 = sbr.rel (%p450) target = $region68
        $region67: #{tpu_custom_call.1} parent=59 // pred_region
          %s453 = smul.u32 8, %s28
          %p454 = scmp.lt.s32.totalorder %s453, 15
          %s455 = scalar_select %p454, %s453, 15
          %s456 = scalar_lea.vmem %s1, %s455
          %s457 = smul.u32 8, %s28
        $region68: #{tpu_custom_call.1} parent=59 // pred_fallthru
          _
        // Predicated region
        $region69: #{tpu_custom_call.1} parent=59 // pred_check
          %p458 = pneg %p100
        $region70: #{tpu_custom_call.1} parent=59 // pred_check_branch
          %460 = sbr.rel (%p458) target = $region72
        $region71: #{tpu_custom_call.1} parent=59 // pred_region
          %s461 = smul.u32 8, %s28
          %p462 = scmp.lt.s32.totalorder %s461, 15
          %s463 = scalar_select %p462, %s461, 15
          %s464 = smul.addr %s463, 8
          %s465 = scalar_lea.vmem %s2, %s464
          %s466 = smul.u32 8, %s28
        $region72: #{tpu_custom_call.1} parent=59 // pred_fallthru
          _
      $region60: #{tpu_custom_call.1} parent=5 // pred_fallthru
        _
      %p467 = scmp.le.s32.totalorder 1, %s28
      %p468 = scmp.lt.s32.totalorder %s28, 3
      %p469 = pnand %p467, %p468
      %p470 = pneg %p469
      // Predicated region
      $region73: #{tpu_custom_call.1} parent=5 // pred_check
        _
      $region74: #{tpu_custom_call.1} parent=5 // pred_check_branch
        %472 = sbr.rel (%p469) target = $region76
      $region75: #{tpu_custom_call.1} parent=5 // pred_region
        %s473 = ssub.s32 %s28, 1
        %s474 = smul.u32 8, %s33
        %p475 = scmp.lt.s32.totalorder %s474, 15
        %s476 = scalar_select %p475, %s474, 15
        %s477 = smul.addr %s476, 4
        %s478 = scalar_lea.vmem %s0, %s477
        %p479 = pneg %p54
        %p480 = pneg %p51
        %s481 = smul.u32 8, %s33
        %p482 = scmp.lt.s32.totalorder %s481, 15
        %s483 = scalar_select %p482, %s481, 15
        %s484 = scalar_lea.vmem %s1, %s483
        %p485 = pneg %p80
        %p486 = pneg %p77
        %s487 = smul.u32 8, %s33
        %p488 = scmp.lt.s32.totalorder %s487, 15
        %s489 = scalar_select %p488, %s487, 15
        %s490 = smul.addr %s489, 8
        %s491 = scalar_lea.vmem %s2, %s490
        %p492 = pneg %p106
        %p493 = pneg %p103
        %p494 = pneg %p127
        %p495 = pneg %p124
        %p496 = pneg %p148
        %p497 = pneg %p145
        %p498 = pneg %p169
        %p499 = pneg %p166
        %p500 = pneg %p190
        %p501 = pneg %p187
        %p502 = pneg %p211
        %p503 = pneg %p208
        %p504 = pneg %p232
        %p505 = pneg %p229
        %p506 = pneg %p253
        %p507 = pneg %p250
        %p508 = pneg %p274
        %p509 = pneg %p271
        %p510 = pneg %p295
        %p511 = pneg %p292
        %p512 = pneg %p316
        %p513 = pneg %p313
        %p514 = pneg %p337
        %p515 = pneg %p334
        %p516 = pneg %p363
        %p517 = pneg %p360
        %s518 = sand.u32 %s350, 1
        %s519 = scalar_lea.sflag [#allocation3], %s518
        %s520 = sand.u32 %s350, 1
        %s521 = smul.addr %s520, 32
        %s522 = scalar_lea.vmem [#allocation2], %s521
        %p523 = pneg %p389
        %p524 = pneg %p386
        %s525 = sand.u32 %s376, 1
        %s526 = scalar_lea.sflag [#allocation5], %s525
        %s527 = sand.u32 %s376, 1
        %s528 = smul.addr %s527, 8
        %s529 = scalar_lea.vmem [#allocation4], %s528
        %s530 = smul.u32 8, %s33
        %p531 = scmp.lt.s32.totalorder %s530, 15
        %s532 = scalar_select %p531, %s530, 15
        %s533 = smul.addr %s532, 4
        %s534 = scalar_lea.vmem %s0, %s533
        %s535 = smul.u32 8, %s33
        %s536 = smul.u32 8, %s33
        %p537 = scmp.lt.s32.totalorder %s536, 15
        %s538 = scalar_select %p537, %s536, 15
        %s539 = scalar_lea.vmem %s1, %s538
        %s540 = smul.u32 8, %s33
        %s541 = smul.u32 8, %s33
        %p542 = scmp.lt.s32.totalorder %s541, 15
        %s543 = scalar_select %p542, %s541, 15
        %s544 = smul.addr %s543, 8
        %s545 = scalar_lea.vmem %s2, %s544
        %s546 = smul.u32 8, %s33
        %s547 = smul.u32 8, %s33
        %v549 = vld [vmem:[%s534] sm:$0xf]
        %v550 = vld [vmem:[%s534 + $0x4] sm:$0xf]
        %v551 = vld [vmem:[%s534 + $0x8] sm:$0xf]
        %v552 = vld [vmem:[%s534 + $0xc] sm:$0xf]
        %v553 = vld [vmem:[%s534 + $0x10] sm:$0xf]
        %v554 = vld [vmem:[%s534 + $0x14] sm:$0xf]
        %v555 = vld [vmem:[%s534 + $0x18] sm:$0xf]
        %v556 = vld [vmem:[%s534 + $0x1c] sm:$0xf]
        %v557 = vld [vmem:[%s539] sm:$0x1]
        %v558 = vld [vmem:[%s539 + $0x1] sm:$0x1]
        %v559 = vld [vmem:[%s539 + $0x2] sm:$0x1]
        %v560 = vld [vmem:[%s539 + $0x3] sm:$0x1]
        %v561 = vld [vmem:[%s539 + $0x4] sm:$0x1]
        %v562 = vld [vmem:[%s539 + $0x5] sm:$0x1]
        %v563 = vld [vmem:[%s539 + $0x6] sm:$0x1]
        %v564 = vld [vmem:[%s539 + $0x7] sm:$0x1]
        %v565 = vsub.f32 1.0, %v557
        %v566 = vsub.f32 1.0, %v558
        %v567 = vsub.f32 1.0, %v559
        %v568 = vsub.f32 1.0, %v560
        %v569 = vsub.f32 1.0, %v561
        %v570 = vsub.f32 1.0, %v562
        %v571 = vsub.f32 1.0, %v563
        %v572 = vsub.f32 1.0, %v564
        %v573 = vmul.f32 %v565, -10000.0
        %v574 = vmul.f32 %v566, -10000.0
        %v575 = vmul.f32 %v567, -10000.0
        %v576 = vmul.f32 %v568, -10000.0
        %v577 = vmul.f32 %v569, -10000.0
        %v578 = vmul.f32 %v570, -10000.0
        %v579 = vmul.f32 %v571, -10000.0
        %v580 = vmul.f32 %v572, -10000.0
        %v581 = vld [vmem:[%s3] sm:$0xf]
        %v582 = vld [vmem:[%s3 + $0x4] sm:$0xf]
        %v583 = vld [vmem:[%s4] sm:$0xf]
        %v584 = vld [vmem:[%s4 + $0x4] sm:$0xf]
        %v585 = vld [vmem:[%s4 + $0x8] sm:$0xf]
        %v586 = vld [vmem:[%s4 + $0xc] sm:$0xf]
        %v587 = vld [vmem:[%s5] sm:$0x1]
        %v588 = vld [vmem:[%s6] sm:$0xf]
        %v589 = vld [vmem:[%s6 + $0x4] sm:$0xf]
        %v590 = vld [vmem:[%s6 + $0x8] sm:$0xf]
        %v591 = vld [vmem:[%s6 + $0xc] sm:$0xf]
        %v592 = vld [vmem:[%s7] sm:$0x1]
        %v593 = vld [vmem:[%s8] sm:$0xf]
        %v594 = vld [vmem:[%s8 + $0x4] sm:$0xf]
        %v595 = vld [vmem:[%s8 + $0x8] sm:$0xf]
        %v596 = vld [vmem:[%s8 + $0xc] sm:$0xf]
        %v597 = vld [vmem:[%s9] sm:$0x1]
        %v598 = vld [vmem:[%s10] sm:$0xf]
        %v599 = vld [vmem:[%s10 + $0x4] sm:$0xf]
        %v600 = vld [vmem:[%s10 + $0x8] sm:$0xf]
        %v601 = vld [vmem:[%s10 + $0xc] sm:$0xf]
        %v602 = vld [vmem:[%s11] sm:$0x1]
        %v604 = vperm.slane %v587, 0
        %v614 = vunpack.c.l.b16 %v549
        %v615 = vunpack.c.l.b16 %v550
        %v616 = vunpack.c.l.b16 %v551
        %v617 = vunpack.c.l.b16 %v552
        %v618 = vunpack.c.l.b16 %v553
        %v619 = vunpack.c.l.b16 %v554
        %v620 = vunpack.c.l.b16 %v555
        %v621 = vunpack.c.l.b16 %v556
        %v622 = vpack.c.b16 %v615, %v614
        %v623 = vpack.c.b16 %v617, %v616
        %v624 = vpack.c.b16 %v619, %v618
        %v625 = vpack.c.b16 %v621, %v620
        %v630 = vunpack.c.l.b16 %v583
        %v631 = vunpack.c.l.b16 %v584
        %v632 = vunpack.c.l.b16 %v585
        %v633 = vunpack.c.l.b16 %v586
        %v634 = vpack.c.b16 %v631, %v630
        %v635 = vpack.c.b16 %v633, %v632
        %vm638 = vcmask 261120
        %v640 = vsel %vm638, %v622, 0
        %v643 = vsel %vm638, %v623, 0
        %v646 = vsel %vm638, %v624, 0
        %v649 = vsel %vm638, %v625, 0
        %651 = vmatpush.bf16.msra.mxu0 0
        %652 = vmatpush.bf16.msra.mxu0 0
        %653 = vmatpush.bf16.msra.mxu0 0
        %654 = vmatpush.bf16.msra.mxu0 0
        %655 = vmatpush.bf16.msra.mxu0 0
        %656 = vmatpush.bf16.msra.mxu0 0
        %657 = vmatpush.bf16.msra.mxu0 %v635
        %658 = vmatpush.bf16.msra.mxu0 %v634
        %659 = vmatmul.bf16.gmra.mxu0 %v640
        %v660 = vpop.f32.mrf.mxu0
        %v661 = vadd.f32 %v604, %v660
        %v662 = vpop.f32.mrf.mxu0
        %v663 = vadd.f32 %v604, %v662
        %664 = vmatmul.bf16.gmra.mxu0 %v643
        %v665 = vpop.f32.mrf.mxu0
        %v666 = vadd.f32 %v604, %v665
        %v667 = vpop.f32.mrf.mxu0
        %v668 = vadd.f32 %v604, %v667
        %669 = vmatmul.bf16.gmra.mxu0 %v646
        %v670 = vpop.f32.mrf.mxu0
        %v671 = vadd.f32 %v604, %v670
        %v672 = vpop.f32.mrf.mxu0
        %v673 = vadd.f32 %v604, %v672
        %674 = vmatmul.bf16.gmra.mxu0 %v649
        %v675 = vpop.f32.mrf.mxu0
        %v676 = vadd.f32 %v604, %v675
        %v677 = vpop.f32.mrf.mxu0
        %v678 = vadd.f32 %v604, %v677
        %679 = vdwg.mxu0
        %v680 = vpack.c.bf16 %v661, %v661
        %v681 = vpack.c.bf16 %v663, %v663
        %v682 = vpack.c.bf16 %v666, %v666
        %v683 = vpack.c.bf16 %v668, %v668
        %v684 = vpack.c.bf16 %v671, %v671
        %v685 = vpack.c.bf16 %v673, %v673
        %v686 = vpack.c.bf16 %v676, %v676
        %v687 = vpack.c.bf16 %v678, %v678
        %v689 = vperm.slane %v592, 0
        %v695 = vunpack.c.l.b16 %v588
        %v696 = vunpack.c.l.b16 %v589
        %v697 = vunpack.c.l.b16 %v590
        %v698 = vunpack.c.l.b16 %v591
        %v699 = vpack.c.b16 %v696, %v695
        %v700 = vpack.c.b16 %v698, %v697
        %703 = vmatpush.bf16.msra.mxu0 0
        %704 = vmatpush.bf16.msra.mxu0 0
        %705 = vmatpush.bf16.msra.mxu0 0
        %706 = vmatpush.bf16.msra.mxu0 0
        %707 = vmatpush.bf16.msra.mxu0 0
        %708 = vmatpush.bf16.msra.mxu0 0
        %709 = vmatpush.bf16.msra.mxu0 %v700
        %710 = vmatpush.bf16.msra.mxu0 %v699
        %711 = vmatmul.bf16.gmra.mxu0 %v640
        %v712 = vpop.f32.mrf.mxu0
        %v713 = vadd.f32 %v689, %v712
        %v714 = vpop.f32.mrf.mxu0
        %v715 = vadd.f32 %v689, %v714
        %716 = vmatmul.bf16.gmra.mxu0 %v643
        %v717 = vpop.f32.mrf.mxu0
        %v718 = vadd.f32 %v689, %v717
        %v719 = vpop.f32.mrf.mxu0
        %v720 = vadd.f32 %v689, %v719
        %721 = vmatmul.bf16.gmra.mxu0 %v646
        %v722 = vpop.f32.mrf.mxu0
        %v723 = vadd.f32 %v689, %v722
        %v724 = vpop.f32.mrf.mxu0
        %v725 = vadd.f32 %v689, %v724
        %726 = vmatmul.bf16.gmra.mxu0 %v649
        %v727 = vpop.f32.mrf.mxu0
        %v728 = vadd.f32 %v689, %v727
        %v729 = vpop.f32.mrf.mxu0
        %v730 = vadd.f32 %v689, %v729
        %731 = vdwg.mxu0
        %v732 = vpack.c.bf16 %v713, %v713
        %v733 = vpack.c.bf16 %v715, %v715
        %v734 = vpack.c.bf16 %v718, %v718
        %v735 = vpack.c.bf16 %v720, %v720
        %v736 = vpack.c.bf16 %v723, %v723
        %v737 = vpack.c.bf16 %v725, %v725
        %v738 = vpack.c.bf16 %v728, %v728
        %v739 = vpack.c.bf16 %v730, %v730
        %v741 = vperm.slane %v597, 0
        %v747 = vunpack.c.l.b16 %v593
        %v748 = vunpack.c.l.b16 %v594
        %v749 = vunpack.c.l.b16 %v595
        %v750 = vunpack.c.l.b16 %v596
        %v751 = vpack.c.b16 %v748, %v747
        %v752 = vpack.c.b16 %v750, %v749
        %755 = vmatpush.bf16.msra.mxu0 0
        %756 = vmatpush.bf16.msra.mxu0 0
        %757 = vmatpush.bf16.msra.mxu0 0
        %758 = vmatpush.bf16.msra.mxu0 0
        %759 = vmatpush.bf16.msra.mxu0 0
        %760 = vmatpush.bf16.msra.mxu0 0
        %761 = vmatpush.bf16.msra.mxu0 %v752
        %762 = vmatpush.bf16.msra.mxu0 %v751
        %763 = vmatmul.bf16.gmra.mxu0 %v640
        %v764 = vpop.f32.mrf.mxu0
        %v765 = vadd.f32 %v741, %v764
        %v766 = vpop.f32.mrf.mxu0
        %v767 = vadd.f32 %v741, %v766
        %768 = vmatmul.bf16.gmra.mxu0 %v643
        %v769 = vpop.f32.mrf.mxu0
        %v770 = vadd.f32 %v741, %v769
        %v771 = vpop.f32.mrf.mxu0
        %v772 = vadd.f32 %v741, %v771
        %773 = vmatmul.bf16.gmra.mxu0 %v646
        %v774 = vpop.f32.mrf.mxu0
        %v775 = vadd.f32 %v741, %v774
        %v776 = vpop.f32.mrf.mxu0
        %v777 = vadd.f32 %v741, %v776
        %778 = vmatmul.bf16.gmra.mxu0 %v649
        %v779 = vpop.f32.mrf.mxu0
        %v780 = vadd.f32 %v741, %v779
        %v781 = vpop.f32.mrf.mxu0
        %v782 = vadd.f32 %v741, %v781
        %783 = vdwg.mxu0
        %v784 = vpack.c.bf16 %v765, %v765
        %v785 = vpack.c.bf16 %v767, %v767
        %v786 = vpack.c.bf16 %v770, %v770
        %v787 = vpack.c.bf16 %v772, %v772
        %v788 = vpack.c.bf16 %v775, %v775
        %v789 = vpack.c.bf16 %v777, %v777
        %v790 = vpack.c.bf16 %v780, %v780
        %v791 = vpack.c.bf16 %v782, %v782
        %vm792 = vcmask 130048
        %v794 = vsel %vm792, %v680, 0
        %v797 = vsel %vm792, %v732, 0
        %799 = vmatpush.bf16.xpose.msra.mxu0 0
        %800 = vmatpush.bf16.xpose.msra.mxu0 0
        %801 = vmatpush.bf16.xpose.msra.mxu0 0
        %802 = vmatpush.bf16.xpose.msra.mxu0 0
        %803 = vmatpush.bf16.xpose.msra.mxu0 0
        %804 = vmatpush.bf16.xpose.msra.mxu0 0
        %805 = vmatpush.bf16.xpose.msra.mxu0 0
        %806 = vmatpush.bf16.xpose.msra.mxu0 %v797
        %807 = vmatmul.bf16.gmra.mxu0 %v794
        %v808 = vpop.f32.mrf.mxu0
        %v809 = vadd.f32 0.0, %v808
        %v810 = vpop.f32.mrf.mxu0
        %811 = vdwg.mxu0
        %v813 = vsel %vm792, %v681, 0
        %v816 = vsel %vm792, %v733, 0
        %818 = vmatpush.bf16.xpose.msra.mxu0 0
        %819 = vmatpush.bf16.xpose.msra.mxu0 0
        %820 = vmatpush.bf16.xpose.msra.mxu0 0
        %821 = vmatpush.bf16.xpose.msra.mxu0 0
        %822 = vmatpush.bf16.xpose.msra.mxu0 0
        %823 = vmatpush.bf16.xpose.msra.mxu0 0
        %824 = vmatpush.bf16.xpose.msra.mxu0 0
        %825 = vmatpush.bf16.xpose.msra.mxu0 %v816
        %826 = vmatmul.bf16.gmra.mxu0 %v813
        %v827 = vpop.f32.mrf.mxu0
        %v828 = vadd.f32 0.0, %v827
        %v829 = vpop.f32.mrf.mxu0
        %830 = vdwg.mxu0
        %v832 = vsel %vm792, %v682, 0
        %v835 = vsel %vm792, %v734, 0
        %837 = vmatpush.bf16.xpose.msra.mxu0 0
        %838 = vmatpush.bf16.xpose.msra.mxu0 0
        %839 = vmatpush.bf16.xpose.msra.mxu0 0
        %840 = vmatpush.bf16.xpose.msra.mxu0 0
        %841 = vmatpush.bf16.xpose.msra.mxu0 0
        %842 = vmatpush.bf16.xpose.msra.mxu0 0
        %843 = vmatpush.bf16.xpose.msra.mxu0 0
        %844 = vmatpush.bf16.xpose.msra.mxu0 %v835
        %845 = vmatmul.bf16.gmra.mxu0 %v832
        %v846 = vpop.f32.mrf.mxu0
        %v847 = vadd.f32 0.0, %v846
        %v848 = vpop.f32.mrf.mxu0
        %849 = vdwg.mxu0
        %v851 = vsel %vm792, %v683, 0
        %v854 = vsel %vm792, %v735, 0
        %856 = vmatpush.bf16.xpose.msra.mxu0 0
        %857 = vmatpush.bf16.xpose.msra.mxu0 0
        %858 = vmatpush.bf16.xpose.msra.mxu0 0
        %859 = vmatpush.bf16.xpose.msra.mxu0 0
        %860 = vmatpush.bf16.xpose.msra.mxu0 0
        %861 = vmatpush.bf16.xpose.msra.mxu0 0
        %862 = vmatpush.bf16.xpose.msra.mxu0 0
        %863 = vmatpush.bf16.xpose.msra.mxu0 %v854
        %864 = vmatmul.bf16.gmra.mxu0 %v851
        %v865 = vpop.f32.mrf.mxu0
        %v866 = vadd.f32 0.0, %v865
        %v867 = vpop.f32.mrf.mxu0
        %868 = vdwg.mxu0
        %v870 = vsel %vm792, %v684, 0
        %v873 = vsel %vm792, %v736, 0
        %875 = vmatpush.bf16.xpose.msra.mxu0 0
        %876 = vmatpush.bf16.xpose.msra.mxu0 0
        %877 = vmatpush.bf16.xpose.msra.mxu0 0
        %878 = vmatpush.bf16.xpose.msra.mxu0 0
        %879 = vmatpush.bf16.xpose.msra.mxu0 0
        %880 = vmatpush.bf16.xpose.msra.mxu0 0
        %881 = vmatpush.bf16.xpose.msra.mxu0 0
        %882 = vmatpush.bf16.xpose.msra.mxu0 %v873
        %883 = vmatmul.bf16.gmra.mxu0 %v870
        %v884 = vpop.f32.mrf.mxu0
        %v885 = vadd.f32 0.0, %v884
        %v886 = vpop.f32.mrf.mxu0
        %887 = vdwg.mxu0
        %v889 = vsel %vm792, %v685, 0
        %v892 = vsel %vm792, %v737, 0
        %894 = vmatpush.bf16.xpose.msra.mxu0 0
        %895 = vmatpush.bf16.xpose.msra.mxu0 0
        %896 = vmatpush.bf16.xpose.msra.mxu0 0
        %897 = vmatpush.bf16.xpose.msra.mxu0 0
        %898 = vmatpush.bf16.xpose.msra.mxu0 0
        %899 = vmatpush.bf16.xpose.msra.mxu0 0
        %900 = vmatpush.bf16.xpose.msra.mxu0 0
        %901 = vmatpush.bf16.xpose.msra.mxu0 %v892
        %902 = vmatmul.bf16.gmra.mxu0 %v889
        %v903 = vpop.f32.mrf.mxu0
        %v904 = vadd.f32 0.0, %v903
        %v905 = vpop.f32.mrf.mxu0
        %906 = vdwg.mxu0
        %v908 = vsel %vm792, %v686, 0
        %v911 = vsel %vm792, %v738, 0
        %913 = vmatpush.bf16.xpose.msra.mxu0 0
        %914 = vmatpush.bf16.xpose.msra.mxu0 0
        %915 = vmatpush.bf16.xpose.msra.mxu0 0
        %916 = vmatpush.bf16.xpose.msra.mxu0 0
        %917 = vmatpush.bf16.xpose.msra.mxu0 0
        %918 = vmatpush.bf16.xpose.msra.mxu0 0
        %919 = vmatpush.bf16.xpose.msra.mxu0 0
        %920 = vmatpush.bf16.xpose.msra.mxu0 %v911
        %921 = vmatmul.bf16.gmra.mxu0 %v908
        %v922 = vpop.f32.mrf.mxu0
        %v923 = vadd.f32 0.0, %v922
        %v924 = vpop.f32.mrf.mxu0
        %925 = vdwg.mxu0
        %v927 = vsel %vm792, %v687, 0
        %v930 = vsel %vm792, %v739, 0
        %932 = vmatpush.bf16.xpose.msra.mxu0 0
        %933 = vmatpush.bf16.xpose.msra.mxu0 0
        %934 = vmatpush.bf16.xpose.msra.mxu0 0
        %935 = vmatpush.bf16.xpose.msra.mxu0 0
        %936 = vmatpush.bf16.xpose.msra.mxu0 0
        %937 = vmatpush.bf16.xpose.msra.mxu0 0
        %938 = vmatpush.bf16.xpose.msra.mxu0 0
        %939 = vmatpush.bf16.xpose.msra.mxu0 %v930
        %940 = vmatmul.bf16.gmra.mxu0 %v927
        %v941 = vpop.f32.mrf.mxu0
        %v942 = vadd.f32 0.0, %v941
        %v943 = vpop.f32.mrf.mxu0
        %944 = vdwg.mxu0
        %v945 = vmul.f32 %v809, 0.25
        %v946 = vmul.f32 %v828, 0.25
        %v947 = vmul.f32 %v847, 0.25
        %v948 = vmul.f32 %v866, 0.25
        %v949 = vmul.f32 %v885, 0.25
        %v950 = vmul.f32 %v904, 0.25
        %v951 = vmul.f32 %v923, 0.25
        %v952 = vmul.f32 %v942, 0.25
        %v961 = vperm.slane %v573, 0
        %v962 = vperm.slane %v574, 0
        %v963 = vperm.slane %v575, 0
        %v964 = vperm.slane %v576, 0
        %v965 = vperm.slane %v577, 0
        %v966 = vperm.slane %v578, 0
        %v967 = vperm.slane %v579, 0
        %v968 = vperm.slane %v580, 0
        %v977 = vadd.f32 %v945, %v961
        %v978 = vadd.f32 %v946, %v962
        %v979 = vadd.f32 %v947, %v963
        %v980 = vadd.f32 %v948, %v964
        %v981 = vadd.f32 %v949, %v965
        %v982 = vadd.f32 %v950, %v966
        %v983 = vadd.f32 %v951, %v967
        %v984 = vadd.f32 %v952, %v968
        %v985 = vunpack.c.l.bf16 %v581
        %v986 = vadd.f32 %v977, %v985
        %v987 = vadd.f32 %v978, %v985
        %v988 = vadd.f32 %v979, %v985
        %v989 = vadd.f32 %v980, %v985
        %v990 = vadd.f32 %v981, %v985
        %v991 = vadd.f32 %v982, %v985
        %v992 = vadd.f32 %v983, %v985
        %v993 = vadd.f32 %v984, %v985
        %vm994 = vcmask 64512
        %v995 = vsel %vm994, %v986, -inf
        %996 = vmax.xlane.f32.xlu0 %v995
        %v997 = vpop.xlane.xlu0 %996
        %v998 = vsel %vm994, %v987, -inf
        %999 = vmax.xlane.f32.xlu0 %v998
        %v1000 = vpop.xlane.xlu0 %999
        %v1001 = vsel %vm994, %v988, -inf
        %1002 = vmax.xlane.f32.xlu0 %v1001
        %v1003 = vpop.xlane.xlu0 %1002
        %v1004 = vsel %vm994, %v989, -inf
        %1005 = vmax.xlane.f32.xlu0 %v1004
        %v1006 = vpop.xlane.xlu0 %1005
        %v1007 = vsel %vm994, %v990, -inf
        %1008 = vmax.xlane.f32.xlu0 %v1007
        %v1009 = vpop.xlane.xlu0 %1008
        %v1010 = vsel %vm994, %v991, -inf
        %1011 = vmax.xlane.f32.xlu0 %v1010
        %v1012 = vpop.xlane.xlu0 %1011
        %v1013 = vsel %vm994, %v992, -inf
        %1014 = vmax.xlane.f32.xlu0 %v1013
        %v1015 = vpop.xlane.xlu0 %1014
        %v1016 = vsel %vm994, %v993, -inf
        %1017 = vmax.xlane.f32.xlu0 %v1016
        %v1018 = vpop.xlane.xlu0 %1017
        %v1019 = vsub.f32 %v986, %v997
        %v1020 = vsub.f32 %v987, %v1000
        %v1021 = vsub.f32 %v988, %v1003
        %v1022 = vsub.f32 %v989, %v1006
        %v1023 = vsub.f32 %v990, %v1009
        %v1024 = vsub.f32 %v991, %v1012
        %v1025 = vsub.f32 %v992, %v1015
        %v1026 = vsub.f32 %v993, %v1018
        %v1027 = vmul.f32 %v1019, 1.442695
        %v1028 = vpow.pop %v1027
        %v1029 = vmul.f32 %v1020, 1.442695
        %v1030 = vpow.pop %v1029
        %v1031 = vmul.f32 %v1021, 1.442695
        %v1032 = vpow.pop %v1031
        %v1033 = vmul.f32 %v1022, 1.442695
        %v1034 = vpow.pop %v1033
        %v1035 = vmul.f32 %v1023, 1.442695
        %v1036 = vpow.pop %v1035
        %v1037 = vmul.f32 %v1024, 1.442695
        %v1038 = vpow.pop %v1037
        %v1039 = vmul.f32 %v1025, 1.442695
        %v1040 = vpow.pop %v1039
        %v1041 = vmul.f32 %v1026, 1.442695
        %v1042 = vpow.pop %v1041
        %v1043 = vsel %vm994, %v1028, 0.0
        %1044 = vadd.xlane.f32.xlu0 %v1043
        %v1045 = vpop.xlane.xlu0 %1044
        %v1046 = vsel %vm994, %v1030, 0.0
        %1047 = vadd.xlane.f32.xlu0 %v1046
        %v1048 = vpop.xlane.xlu0 %1047
        %v1049 = vsel %vm994, %v1032, 0.0
        %1050 = vadd.xlane.f32.xlu0 %v1049
        %v1051 = vpop.xlane.xlu0 %1050
        %v1052 = vsel %vm994, %v1034, 0.0
        %1053 = vadd.xlane.f32.xlu0 %v1052
        %v1054 = vpop.xlane.xlu0 %1053
        %v1055 = vsel %vm994, %v1036, 0.0
        %1056 = vadd.xlane.f32.xlu0 %v1055
        %v1057 = vpop.xlane.xlu0 %1056
        %v1058 = vsel %vm994, %v1038, 0.0
        %1059 = vadd.xlane.f32.xlu0 %v1058
        %v1060 = vpop.xlane.xlu0 %1059
        %v1061 = vsel %vm994, %v1040, 0.0
        %1062 = vadd.xlane.f32.xlu0 %v1061
        %v1063 = vpop.xlane.xlu0 %1062
        %v1064 = vsel %vm994, %v1042, 0.0
        %1065 = vadd.xlane.f32.xlu0 %v1064
        %v1066 = vpop.xlane.xlu0 %1065
        %v1067 = vrcp.pop %v1045
        %v1068 = vrcp.pop %v1048
        %v1069 = vrcp.pop %v1051
        %v1070 = vrcp.pop %v1054
        %v1071 = vrcp.pop %v1057
        %v1072 = vrcp.pop %v1060
        %v1073 = vrcp.pop %v1063
        %v1074 = vrcp.pop %v1066
        %v1075 = vmul.f32 %v1028, %v1067
        %v1076 = vmul.f32 %v1030, %v1068
        %v1077 = vmul.f32 %v1032, %v1069
        %v1078 = vmul.f32 %v1034, %v1070
        %v1079 = vmul.f32 %v1036, %v1071
        %v1080 = vmul.f32 %v1038, %v1072
        %v1081 = vmul.f32 %v1040, %v1073
        %v1082 = vmul.f32 %v1042, %v1074
        %v1083 = vpack.c.bf16 %v1075, %v1075
        %v1084 = vpack.c.bf16 %v1076, %v1076
        %v1085 = vpack.c.bf16 %v1077, %v1077
        %v1086 = vpack.c.bf16 %v1078, %v1078
        %v1087 = vpack.c.bf16 %v1079, %v1079
        %v1088 = vpack.c.bf16 %v1080, %v1080
        %v1089 = vpack.c.bf16 %v1081, %v1081
        %v1090 = vpack.c.bf16 %v1082, %v1082
        %v1092 = vsel %vm994, %v1083, 0
        %vm1094 = vcmask 1043456
        %v1096 = vsel %vm1094, %v784, 0
        %1098 = vmatpush.bf16.msra.mxu0 0
        %1099 = vmatpush.bf16.msra.mxu0 0
        %1100 = vmatpush.bf16.msra.mxu0 0
        %1101 = vmatpush.bf16.msra.mxu0 0
        %1102 = vmatpush.bf16.msra.mxu0 0
        %1103 = vmatpush.bf16.msra.mxu0 0
        %1104 = vmatpush.bf16.msra.mxu0 0
        %1105 = vmatpush.bf16.msra.mxu0 %v1096
        %1106 = vmatmul.bf16.gmra.mxu0 %v1092
        %v1107 = vpop.f32.mrf.mxu0
        %v1108 = vadd.f32 0.0, %v1107
        %v1109 = vpop.f32.mrf.mxu0
        %1110 = vdwg.mxu0
        %v1112 = vsel %vm994, %v1084, 0
        %v1115 = vsel %vm1094, %v785, 0
        %1117 = vmatpush.bf16.msra.mxu0 0
        %1118 = vmatpush.bf16.msra.mxu0 0
        %1119 = vmatpush.bf16.msra.mxu0 0
        %1120 = vmatpush.bf16.msra.mxu0 0
        %1121 = vmatpush.bf16.msra.mxu0 0
        %1122 = vmatpush.bf16.msra.mxu0 0
        %1123 = vmatpush.bf16.msra.mxu0 0
        %1124 = vmatpush.bf16.msra.mxu0 %v1115
        %1125 = vmatmul.bf16.gmra.mxu0 %v1112
        %v1126 = vpop.f32.mrf.mxu0
        %v1127 = vadd.f32 0.0, %v1126
        %v1128 = vpop.f32.mrf.mxu0
        %1129 = vdwg.mxu0
        %v1131 = vsel %vm994, %v1085, 0
        %v1134 = vsel %vm1094, %v786, 0
        %1136 = vmatpush.bf16.msra.mxu0 0
        %1137 = vmatpush.bf16.msra.mxu0 0
        %1138 = vmatpush.bf16.msra.mxu0 0
        %1139 = vmatpush.bf16.msra.mxu0 0
        %1140 = vmatpush.bf16.msra.mxu0 0
        %1141 = vmatpush.bf16.msra.mxu0 0
        %1142 = vmatpush.bf16.msra.mxu0 0
        %1143 = vmatpush.bf16.msra.mxu0 %v1134
        %1144 = vmatmul.bf16.gmra.mxu0 %v1131
        %v1145 = vpop.f32.mrf.mxu0
        %v1146 = vadd.f32 0.0, %v1145
        %v1147 = vpop.f32.mrf.mxu0
        %1148 = vdwg.mxu0
        %v1150 = vsel %vm994, %v1086, 0
        %v1153 = vsel %vm1094, %v787, 0
        %1155 = vmatpush.bf16.msra.mxu0 0
        %1156 = vmatpush.bf16.msra.mxu0 0
        %1157 = vmatpush.bf16.msra.mxu0 0
        %1158 = vmatpush.bf16.msra.mxu0 0
        %1159 = vmatpush.bf16.msra.mxu0 0
        %1160 = vmatpush.bf16.msra.mxu0 0
        %1161 = vmatpush.bf16.msra.mxu0 0
        %1162 = vmatpush.bf16.msra.mxu0 %v1153
        %1163 = vmatmul.bf16.gmra.mxu0 %v1150
        %v1164 = vpop.f32.mrf.mxu0
        %v1165 = vadd.f32 0.0, %v1164
        %v1166 = vpop.f32.mrf.mxu0
        %1167 = vdwg.mxu0
        %v1169 = vsel %vm994, %v1087, 0
        %v1172 = vsel %vm1094, %v788, 0
        %1174 = vmatpush.bf16.msra.mxu0 0
        %1175 = vmatpush.bf16.msra.mxu0 0
        %1176 = vmatpush.bf16.msra.mxu0 0
        %1177 = vmatpush.bf16.msra.mxu0 0
        %1178 = vmatpush.bf16.msra.mxu0 0
        %1179 = vmatpush.bf16.msra.mxu0 0
        %1180 = vmatpush.bf16.msra.mxu0 0
        %1181 = vmatpush.bf16.msra.mxu0 %v1172
        %1182 = vmatmul.bf16.gmra.mxu0 %v1169
        %v1183 = vpop.f32.mrf.mxu0
        %v1184 = vadd.f32 0.0, %v1183
        %v1185 = vpop.f32.mrf.mxu0
        %1186 = vdwg.mxu0
        %v1188 = vsel %vm994, %v1088, 0
        %v1191 = vsel %vm1094, %v789, 0
        %1193 = vmatpush.bf16.msra.mxu0 0
        %1194 = vmatpush.bf16.msra.mxu0 0
        %1195 = vmatpush.bf16.msra.mxu0 0
        %1196 = vmatpush.bf16.msra.mxu0 0
        %1197 = vmatpush.bf16.msra.mxu0 0
        %1198 = vmatpush.bf16.msra.mxu0 0
        %1199 = vmatpush.bf16.msra.mxu0 0
        %1200 = vmatpush.bf16.msra.mxu0 %v1191
        %1201 = vmatmul.bf16.gmra.mxu0 %v1188
        %v1202 = vpop.f32.mrf.mxu0
        %v1203 = vadd.f32 0.0, %v1202
        %v1204 = vpop.f32.mrf.mxu0
        %1205 = vdwg.mxu0
        %v1207 = vsel %vm994, %v1089, 0
        %v1210 = vsel %vm1094, %v790, 0
        %1212 = vmatpush.bf16.msra.mxu0 0
        %1213 = vmatpush.bf16.msra.mxu0 0
        %1214 = vmatpush.bf16.msra.mxu0 0
        %1215 = vmatpush.bf16.msra.mxu0 0
        %1216 = vmatpush.bf16.msra.mxu0 0
        %1217 = vmatpush.bf16.msra.mxu0 0
        %1218 = vmatpush.bf16.msra.mxu0 0
        %1219 = vmatpush.bf16.msra.mxu0 %v1210
        %1220 = vmatmul.bf16.gmra.mxu0 %v1207
        %v1221 = vpop.f32.mrf.mxu0
        %v1222 = vadd.f32 0.0, %v1221
        %v1223 = vpop.f32.mrf.mxu0
        %1224 = vdwg.mxu0
        %v1226 = vsel %vm994, %v1090, 0
        %v1229 = vsel %vm1094, %v791, 0
        %1231 = vmatpush.bf16.msra.mxu0 0
        %1232 = vmatpush.bf16.msra.mxu0 0
        %1233 = vmatpush.bf16.msra.mxu0 0
        %1234 = vmatpush.bf16.msra.mxu0 0
        %1235 = vmatpush.bf16.msra.mxu0 0
        %1236 = vmatpush.bf16.msra.mxu0 0
        %1237 = vmatpush.bf16.msra.mxu0 0
        %1238 = vmatpush.bf16.msra.mxu0 %v1229
        %1239 = vmatmul.bf16.gmra.mxu0 %v1226
        %v1240 = vpop.f32.mrf.mxu0
        %v1241 = vadd.f32 0.0, %v1240
        %v1242 = vpop.f32.mrf.mxu0
        %1243 = vdwg.mxu0
        %v1245 = vunpack.c.l.b16 %v680
        %v1246 = vpack.c.b16 %v1245, %v1245
        %1247 = vrot.lane.b32.xlu0 %v1246, 112
        %v1248 = vpop.permute.xlu0 %1247
        %v1250 = vunpack.c.l.b16 %v732
        %v1251 = vpack.c.b16 %v1250, %v1250
        %1252 = vrot.lane.b32.xlu0 %v1251, 112
        %v1253 = vpop.permute.xlu0 %1252
        %v1255 = vsel %vm792, %v1248, 0
        %v1258 = vsel %vm792, %v1253, 0
        %1260 = vmatpush.bf16.xpose.msra.mxu0 0
        %1261 = vmatpush.bf16.xpose.msra.mxu0 0
        %1262 = vmatpush.bf16.xpose.msra.mxu0 0
        %1263 = vmatpush.bf16.xpose.msra.mxu0 0
        %1264 = vmatpush.bf16.xpose.msra.mxu0 0
        %1265 = vmatpush.bf16.xpose.msra.mxu0 0
        %1266 = vmatpush.bf16.xpose.msra.mxu0 0
        %1267 = vmatpush.bf16.xpose.msra.mxu0 %v1258
        %1268 = vmatmul.bf16.gmra.mxu0 %v1255
        %v1269 = vpop.f32.mrf.mxu0
        %v1270 = vadd.f32 0.0, %v1269
        %v1271 = vpop.f32.mrf.mxu0
        %1272 = vdwg.mxu0
        %v1274 = vunpack.c.l.b16 %v681
        %v1275 = vpack.c.b16 %v1274, %v1274
        %1276 = vrot.lane.b32.xlu0 %v1275, 112
        %v1277 = vpop.permute.xlu0 %1276
        %v1279 = vunpack.c.l.b16 %v733
        %v1280 = vpack.c.b16 %v1279, %v1279
        %1281 = vrot.lane.b32.xlu0 %v1280, 112
        %v1282 = vpop.permute.xlu0 %1281
        %v1284 = vsel %vm792, %v1277, 0
        %v1287 = vsel %vm792, %v1282, 0
        %1289 = vmatpush.bf16.xpose.msra.mxu0 0
        %1290 = vmatpush.bf16.xpose.msra.mxu0 0
        %1291 = vmatpush.bf16.xpose.msra.mxu0 0
        %1292 = vmatpush.bf16.xpose.msra.mxu0 0
        %1293 = vmatpush.bf16.xpose.msra.mxu0 0
        %1294 = vmatpush.bf16.xpose.msra.mxu0 0
        %1295 = vmatpush.bf16.xpose.msra.mxu0 0
        %1296 = vmatpush.bf16.xpose.msra.mxu0 %v1287
        %1297 = vmatmul.bf16.gmra.mxu0 %v1284
        %v1298 = vpop.f32.mrf.mxu0
        %v1299 = vadd.f32 0.0, %v1298
        %v1300 = vpop.f32.mrf.mxu0
        %1301 = vdwg.mxu0
        %v1303 = vunpack.c.l.b16 %v682
        %v1304 = vpack.c.b16 %v1303, %v1303
        %1305 = vrot.lane.b32.xlu0 %v1304, 112
        %v1306 = vpop.permute.xlu0 %1305
        %v1308 = vunpack.c.l.b16 %v734
        %v1309 = vpack.c.b16 %v1308, %v1308
        %1310 = vrot.lane.b32.xlu0 %v1309, 112
        %v1311 = vpop.permute.xlu0 %1310
        %v1313 = vsel %vm792, %v1306, 0
        %v1316 = vsel %vm792, %v1311, 0
        %1318 = vmatpush.bf16.xpose.msra.mxu0 0
        %1319 = vmatpush.bf16.xpose.msra.mxu0 0
        %1320 = vmatpush.bf16.xpose.msra.mxu0 0
        %1321 = vmatpush.bf16.xpose.msra.mxu0 0
        %1322 = vmatpush.bf16.xpose.msra.mxu0 0
        %1323 = vmatpush.bf16.xpose.msra.mxu0 0
        %1324 = vmatpush.bf16.xpose.msra.mxu0 0
        %1325 = vmatpush.bf16.xpose.msra.mxu0 %v1316
        %1326 = vmatmul.bf16.gmra.mxu0 %v1313
        %v1327 = vpop.f32.mrf.mxu0
        %v1328 = vadd.f32 0.0, %v1327
        %v1329 = vpop.f32.mrf.mxu0
        %1330 = vdwg.mxu0
        %v1332 = vunpack.c.l.b16 %v683
        %v1333 = vpack.c.b16 %v1332, %v1332
        %1334 = vrot.lane.b32.xlu0 %v1333, 112
        %v1335 = vpop.permute.xlu0 %1334
        %v1337 = vunpack.c.l.b16 %v735
        %v1338 = vpack.c.b16 %v1337, %v1337
        %1339 = vrot.lane.b32.xlu0 %v1338, 112
        %v1340 = vpop.permute.xlu0 %1339
        %v1342 = vsel %vm792, %v1335, 0
        %v1345 = vsel %vm792, %v1340, 0
        %1347 = vmatpush.bf16.xpose.msra.mxu0 0
        %1348 = vmatpush.bf16.xpose.msra.mxu0 0
        %1349 = vmatpush.bf16.xpose.msra.mxu0 0
        %1350 = vmatpush.bf16.xpose.msra.mxu0 0
        %1351 = vmatpush.bf16.xpose.msra.mxu0 0
        %1352 = vmatpush.bf16.xpose.msra.mxu0 0
        %1353 = vmatpush.bf16.xpose.msra.mxu0 0
        %1354 = vmatpush.bf16.xpose.msra.mxu0 %v1345
        %1355 = vmatmul.bf16.gmra.mxu0 %v1342
        %v1356 = vpop.f32.mrf.mxu0
        %v1357 = vadd.f32 0.0, %v1356
        %v1358 = vpop.f32.mrf.mxu0
        %1359 = vdwg.mxu0
        %v1361 = vunpack.c.l.b16 %v684
        %v1362 = vpack.c.b16 %v1361, %v1361
        %1363 = vrot.lane.b32.xlu0 %v1362, 112
        %v1364 = vpop.permute.xlu0 %1363
        %v1366 = vunpack.c.l.b16 %v736
        %v1367 = vpack.c.b16 %v1366, %v1366
        %1368 = vrot.lane.b32.xlu0 %v1367, 112
        %v1369 = vpop.permute.xlu0 %1368
        %v1371 = vsel %vm792, %v1364, 0
        %v1374 = vsel %vm792, %v1369, 0
        %1376 = vmatpush.bf16.xpose.msra.mxu0 0
        %1377 = vmatpush.bf16.xpose.msra.mxu0 0
        %1378 = vmatpush.bf16.xpose.msra.mxu0 0
        %1379 = vmatpush.bf16.xpose.msra.mxu0 0
        %1380 = vmatpush.bf16.xpose.msra.mxu0 0
        %1381 = vmatpush.bf16.xpose.msra.mxu0 0
        %1382 = vmatpush.bf16.xpose.msra.mxu0 0
        %1383 = vmatpush.bf16.xpose.msra.mxu0 %v1374
        %1384 = vmatmul.bf16.gmra.mxu0 %v1371
        %v1385 = vpop.f32.mrf.mxu0
        %v1386 = vadd.f32 0.0, %v1385
        %v1387 = vpop.f32.mrf.mxu0
        %1388 = vdwg.mxu0
        %v1390 = vunpack.c.l.b16 %v685
        %v1391 = vpack.c.b16 %v1390, %v1390
        %1392 = vrot.lane.b32.xlu0 %v1391, 112
        %v1393 = vpop.permute.xlu0 %1392
        %v1395 = vunpack.c.l.b16 %v737
        %v1396 = vpack.c.b16 %v1395, %v1395
        %1397 = vrot.lane.b32.xlu0 %v1396, 112
        %v1398 = vpop.permute.xlu0 %1397
        %v1400 = vsel %vm792, %v1393, 0
        %v1403 = vsel %vm792, %v1398, 0
        %1405 = vmatpush.bf16.xpose.msra.mxu0 0
        %1406 = vmatpush.bf16.xpose.msra.mxu0 0
        %1407 = vmatpush.bf16.xpose.msra.mxu0 0
        %1408 = vmatpush.bf16.xpose.msra.mxu0 0
        %1409 = vmatpush.bf16.xpose.msra.mxu0 0
        %1410 = vmatpush.bf16.xpose.msra.mxu0 0
        %1411 = vmatpush.bf16.xpose.msra.mxu0 0
        %1412 = vmatpush.bf16.xpose.msra.mxu0 %v1403
        %1413 = vmatmul.bf16.gmra.mxu0 %v1400
        %v1414 = vpop.f32.mrf.mxu0
        %v1415 = vadd.f32 0.0, %v1414
        %v1416 = vpop.f32.mrf.mxu0
        %1417 = vdwg.mxu0
        %v1419 = vunpack.c.l.b16 %v686
        %v1420 = vpack.c.b16 %v1419, %v1419
        %1421 = vrot.lane.b32.xlu0 %v1420, 112
        %v1422 = vpop.permute.xlu0 %1421
        %v1424 = vunpack.c.l.b16 %v738
        %v1425 = vpack.c.b16 %v1424, %v1424
        %1426 = vrot.lane.b32.xlu0 %v1425, 112
        %v1427 = vpop.permute.xlu0 %1426
        %v1429 = vsel %vm792, %v1422, 0
        %v1432 = vsel %vm792, %v1427, 0
        %1434 = vmatpush.bf16.xpose.msra.mxu0 0
        %1435 = vmatpush.bf16.xpose.msra.mxu0 0
        %1436 = vmatpush.bf16.xpose.msra.mxu0 0
        %1437 = vmatpush.bf16.xpose.msra.mxu0 0
        %1438 = vmatpush.bf16.xpose.msra.mxu0 0
        %1439 = vmatpush.bf16.xpose.msra.mxu0 0
        %1440 = vmatpush.bf16.xpose.msra.mxu0 0
        %1441 = vmatpush.bf16.xpose.msra.mxu0 %v1432
        %1442 = vmatmul.bf16.gmra.mxu0 %v1429
        %v1443 = vpop.f32.mrf.mxu0
        %v1444 = vadd.f32 0.0, %v1443
        %v1445 = vpop.f32.mrf.mxu0
        %1446 = vdwg.mxu0
        %v1448 = vunpack.c.l.b16 %v687
        %v1449 = vpack.c.b16 %v1448, %v1448
        %1450 = vrot.lane.b32.xlu0 %v1449, 112
        %v1451 = vpop.permute.xlu0 %1450
        %v1453 = vunpack.c.l.b16 %v739
        %v1454 = vpack.c.b16 %v1453, %v1453
        %1455 = vrot.lane.b32.xlu0 %v1454, 112
        %v1456 = vpop.permute.xlu0 %1455
        %v1458 = vsel %vm792, %v1451, 0
        %v1461 = vsel %vm792, %v1456, 0
        %1463 = vmatpush.bf16.xpose.msra.mxu0 0
        %1464 = vmatpush.bf16.xpose.msra.mxu0 0
        %1465 = vmatpush.bf16.xpose.msra.mxu0 0
        %1466 = vmatpush.bf16.xpose.msra.mxu0 0
        %1467 = vmatpush.bf16.xpose.msra.mxu0 0
        %1468 = vmatpush.bf16.xpose.msra.mxu0 0
        %1469 = vmatpush.bf16.xpose.msra.mxu0 0
        %1470 = vmatpush.bf16.xpose.msra.mxu0 %v1461
        %1471 = vmatmul.bf16.gmra.mxu0 %v1458
        %v1472 = vpop.f32.mrf.mxu0
        %v1473 = vadd.f32 0.0, %v1472
        %v1474 = vpop.f32.mrf.mxu0
        %1475 = vdwg.mxu0
        %v1476 = vmul.f32 %v1270, 0.25
        %v1477 = vmul.f32 %v1299, 0.25
        %v1478 = vmul.f32 %v1328, 0.25
        %v1479 = vmul.f32 %v1357, 0.25
        %v1480 = vmul.f32 %v1386, 0.25
        %v1481 = vmul.f32 %v1415, 0.25
        %v1482 = vmul.f32 %v1444, 0.25
        %v1483 = vmul.f32 %v1473, 0.25
        %v1484 = vadd.f32 %v1476, %v961
        %v1485 = vadd.f32 %v1477, %v962
        %v1486 = vadd.f32 %v1478, %v963
        %v1487 = vadd.f32 %v1479, %v964
        %v1488 = vadd.f32 %v1480, %v965
        %v1489 = vadd.f32 %v1481, %v966
        %v1490 = vadd.f32 %v1482, %v967
        %v1491 = vadd.f32 %v1483, %v968
        %v1492 = vunpack.c.l.bf16 %v582
        %v1493 = vadd.f32 %v1484, %v1492
        %v1494 = vadd.f32 %v1485, %v1492
        %v1495 = vadd.f32 %v1486, %v1492
        %v1496 = vadd.f32 %v1487, %v1492
        %v1497 = vadd.f32 %v1488, %v1492
        %v1498 = vadd.f32 %v1489, %v1492
        %v1499 = vadd.f32 %v1490, %v1492
        %v1500 = vadd.f32 %v1491, %v1492
        %v1501 = vsel %vm994, %v1493, -inf
        %1502 = vmax.xlane.f32.xlu0 %v1501
        %v1503 = vpop.xlane.xlu0 %1502
        %v1504 = vsel %vm994, %v1494, -inf
        %1505 = vmax.xlane.f32.xlu0 %v1504
        %v1506 = vpop.xlane.xlu0 %1505
        %v1507 = vsel %vm994, %v1495, -inf
        %1508 = vmax.xlane.f32.xlu0 %v1507
        %v1509 = vpop.xlane.xlu0 %1508
        %v1510 = vsel %vm994, %v1496, -inf
        %1511 = vmax.xlane.f32.xlu0 %v1510
        %v1512 = vpop.xlane.xlu0 %1511
        %v1513 = vsel %vm994, %v1497, -inf
        %1514 = vmax.xlane.f32.xlu0 %v1513
        %v1515 = vpop.xlane.xlu0 %1514
        %v1516 = vsel %vm994, %v1498, -inf
        %1517 = vmax.xlane.f32.xlu0 %v1516
        %v1518 = vpop.xlane.xlu0 %1517
        %v1519 = vsel %vm994, %v1499, -inf
        %1520 = vmax.xlane.f32.xlu0 %v1519
        %v1521 = vpop.xlane.xlu0 %1520
        %v1522 = vsel %vm994, %v1500, -inf
        %1523 = vmax.xlane.f32.xlu0 %v1522
        %v1524 = vpop.xlane.xlu0 %1523
        %v1525 = vsub.f32 %v1493, %v1503
        %v1526 = vsub.f32 %v1494, %v1506
        %v1527 = vsub.f32 %v1495, %v1509
        %v1528 = vsub.f32 %v1496, %v1512
        %v1529 = vsub.f32 %v1497, %v1515
        %v1530 = vsub.f32 %v1498, %v1518
        %v1531 = vsub.f32 %v1499, %v1521
        %v1532 = vsub.f32 %v1500, %v1524
        %v1533 = vmul.f32 %v1525, 1.442695
        %v1534 = vpow.pop %v1533
        %v1535 = vmul.f32 %v1526, 1.442695
        %v1536 = vpow.pop %v1535
        %v1537 = vmul.f32 %v1527, 1.442695
        %v1538 = vpow.pop %v1537
        %v1539 = vmul.f32 %v1528, 1.442695
        %v1540 = vpow.pop %v1539
        %v1541 = vmul.f32 %v1529, 1.442695
        %v1542 = vpow.pop %v1541
        %v1543 = vmul.f32 %v1530, 1.442695
        %v1544 = vpow.pop %v1543
        %v1545 = vmul.f32 %v1531, 1.442695
        %v1546 = vpow.pop %v1545
        %v1547 = vmul.f32 %v1532, 1.442695
        %v1548 = vpow.pop %v1547
        %v1549 = vsel %vm994, %v1534, 0.0
        %1550 = vadd.xlane.f32.xlu0 %v1549
        %v1551 = vpop.xlane.xlu0 %1550
        %v1552 = vsel %vm994, %v1536, 0.0
        %1553 = vadd.xlane.f32.xlu0 %v1552
        %v1554 = vpop.xlane.xlu0 %1553
        %v1555 = vsel %vm994, %v1538, 0.0
        %1556 = vadd.xlane.f32.xlu0 %v1555
        %v1557 = vpop.xlane.xlu0 %1556
        %v1558 = vsel %vm994, %v1540, 0.0
        %1559 = vadd.xlane.f32.xlu0 %v1558
        %v1560 = vpop.xlane.xlu0 %1559
        %v1561 = vsel %vm994, %v1542, 0.0
        %1562 = vadd.xlane.f32.xlu0 %v1561
        %v1563 = vpop.xlane.xlu0 %1562
        %v1564 = vsel %vm994, %v1544, 0.0
        %1565 = vadd.xlane.f32.xlu0 %v1564
        %v1566 = vpop.xlane.xlu0 %1565
        %v1567 = vsel %vm994, %v1546, 0.0
        %1568 = vadd.xlane.f32.xlu0 %v1567
        %v1569 = vpop.xlane.xlu0 %1568
        %v1570 = vsel %vm994, %v1548, 0.0
        %1571 = vadd.xlane.f32.xlu0 %v1570
        %v1572 = vpop.xlane.xlu0 %1571
        %v1573 = vrcp.pop %v1551
        %v1574 = vrcp.pop %v1554
        %v1575 = vrcp.pop %v1557
        %v1576 = vrcp.pop %v1560
        %v1577 = vrcp.pop %v1563
        %v1578 = vrcp.pop %v1566
        %v1579 = vrcp.pop %v1569
        %v1580 = vrcp.pop %v1572
        %v1581 = vmul.f32 %v1534, %v1573
        %v1582 = vmul.f32 %v1536, %v1574
        %v1583 = vmul.f32 %v1538, %v1575
        %v1584 = vmul.f32 %v1540, %v1576
        %v1585 = vmul.f32 %v1542, %v1577
        %v1586 = vmul.f32 %v1544, %v1578
        %v1587 = vmul.f32 %v1546, %v1579
        %v1588 = vmul.f32 %v1548, %v1580
        %v1589 = vpack.c.bf16 %v1581, %v1581
        %v1590 = vpack.c.bf16 %v1582, %v1582
        %v1591 = vpack.c.bf16 %v1583, %v1583
        %v1592 = vpack.c.bf16 %v1584, %v1584
        %v1593 = vpack.c.bf16 %v1585, %v1585
        %v1594 = vpack.c.bf16 %v1586, %v1586
        %v1595 = vpack.c.bf16 %v1587, %v1587
        %v1596 = vpack.c.bf16 %v1588, %v1588
        %v1598 = vunpack.c.l.b16 %v784
        %v1599 = vpack.c.b16 %v1598, %v1598
        %1600 = vrot.lane.b32.xlu0 %v1599, 112
        %v1601 = vpop.permute.xlu0 %1600
        %v1603 = vsel %vm994, %v1589, 0
        %v1606 = vsel %vm1094, %v1601, 0
        %1608 = vmatpush.bf16.msra.mxu0 0
        %1609 = vmatpush.bf16.msra.mxu0 0
        %1610 = vmatpush.bf16.msra.mxu0 0
        %1611 = vmatpush.bf16.msra.mxu0 0
        %1612 = vmatpush.bf16.msra.mxu0 0
        %1613 = vmatpush.bf16.msra.mxu0 0
        %1614 = vmatpush.bf16.msra.mxu0 0
        %1615 = vmatpush.bf16.msra.mxu0 %v1606
        %1616 = vmatmul.bf16.gmra.mxu0 %v1603
        %v1617 = vpop.f32.mrf.mxu0
        %v1618 = vadd.f32 0.0, %v1617
        %v1619 = vpop.f32.mrf.mxu0
        %1620 = vdwg.mxu0
        %v1622 = vunpack.c.l.b16 %v785
        %v1623 = vpack.c.b16 %v1622, %v1622
        %1624 = vrot.lane.b32.xlu0 %v1623, 112
        %v1625 = vpop.permute.xlu0 %1624
        %v1627 = vsel %vm994, %v1590, 0
        %v1630 = vsel %vm1094, %v1625, 0
        %1632 = vmatpush.bf16.msra.mxu0 0
        %1633 = vmatpush.bf16.msra.mxu0 0
        %1634 = vmatpush.bf16.msra.mxu0 0
        %1635 = vmatpush.bf16.msra.mxu0 0
        %1636 = vmatpush.bf16.msra.mxu0 0
        %1637 = vmatpush.bf16.msra.mxu0 0
        %1638 = vmatpush.bf16.msra.mxu0 0
        %1639 = vmatpush.bf16.msra.mxu0 %v1630
        %1640 = vmatmul.bf16.gmra.mxu0 %v1627
        %v1641 = vpop.f32.mrf.mxu0
        %v1642 = vadd.f32 0.0, %v1641
        %v1643 = vpop.f32.mrf.mxu0
        %1644 = vdwg.mxu0
        %v1646 = vunpack.c.l.b16 %v786
        %v1647 = vpack.c.b16 %v1646, %v1646
        %1648 = vrot.lane.b32.xlu0 %v1647, 112
        %v1649 = vpop.permute.xlu0 %1648
        %v1651 = vsel %vm994, %v1591, 0
        %v1654 = vsel %vm1094, %v1649, 0
        %1656 = vmatpush.bf16.msra.mxu0 0
        %1657 = vmatpush.bf16.msra.mxu0 0
        %1658 = vmatpush.bf16.msra.mxu0 0
        %1659 = vmatpush.bf16.msra.mxu0 0
        %1660 = vmatpush.bf16.msra.mxu0 0
        %1661 = vmatpush.bf16.msra.mxu0 0
        %1662 = vmatpush.bf16.msra.mxu0 0
        %1663 = vmatpush.bf16.msra.mxu0 %v1654
        %1664 = vmatmul.bf16.gmra.mxu0 %v1651
        %v1665 = vpop.f32.mrf.mxu0
        %v1666 = vadd.f32 0.0, %v1665
        %v1667 = vpop.f32.mrf.mxu0
        %1668 = vdwg.mxu0
        %v1670 = vunpack.c.l.b16 %v787
        %v1671 = vpack.c.b16 %v1670, %v1670
        %1672 = vrot.lane.b32.xlu0 %v1671, 112
        %v1673 = vpop.permute.xlu0 %1672
        %v1675 = vsel %vm994, %v1592, 0
        %v1678 = vsel %vm1094, %v1673, 0
        %1680 = vmatpush.bf16.msra.mxu0 0
        %1681 = vmatpush.bf16.msra.mxu0 0
        %1682 = vmatpush.bf16.msra.mxu0 0
        %1683 = vmatpush.bf16.msra.mxu0 0
        %1684 = vmatpush.bf16.msra.mxu0 0
        %1685 = vmatpush.bf16.msra.mxu0 0
        %1686 = vmatpush.bf16.msra.mxu0 0
        %1687 = vmatpush.bf16.msra.mxu0 %v1678
        %1688 = vmatmul.bf16.gmra.mxu0 %v1675
        %v1689 = vpop.f32.mrf.mxu0
        %v1690 = vadd.f32 0.0, %v1689
        %v1691 = vpop.f32.mrf.mxu0
        %1692 = vdwg.mxu0
        %v1694 = vunpack.c.l.b16 %v788
        %v1695 = vpack.c.b16 %v1694, %v1694
        %1696 = vrot.lane.b32.xlu0 %v1695, 112
        %v1697 = vpop.permute.xlu0 %1696
        %v1699 = vsel %vm994, %v1593, 0
        %v1702 = vsel %vm1094, %v1697, 0
        %1704 = vmatpush.bf16.msra.mxu0 0
        %1705 = vmatpush.bf16.msra.mxu0 0
        %1706 = vmatpush.bf16.msra.mxu0 0
        %1707 = vmatpush.bf16.msra.mxu0 0
        %1708 = vmatpush.bf16.msra.mxu0 0
        %1709 = vmatpush.bf16.msra.mxu0 0
        %1710 = vmatpush.bf16.msra.mxu0 0
        %1711 = vmatpush.bf16.msra.mxu0 %v1702
        %1712 = vmatmul.bf16.gmra.mxu0 %v1699
        %v1713 = vpop.f32.mrf.mxu0
        %v1714 = vadd.f32 0.0, %v1713
        %v1715 = vpop.f32.mrf.mxu0
        %1716 = vdwg.mxu0
        %v1718 = vunpack.c.l.b16 %v789
        %v1719 = vpack.c.b16 %v1718, %v1718
        %1720 = vrot.lane.b32.xlu0 %v1719, 112
        %v1721 = vpop.permute.xlu0 %1720
        %v1723 = vsel %vm994, %v1594, 0
        %v1726 = vsel %vm1094, %v1721, 0
        %1728 = vmatpush.bf16.msra.mxu0 0
        %1729 = vmatpush.bf16.msra.mxu0 0
        %1730 = vmatpush.bf16.msra.mxu0 0
        %1731 = vmatpush.bf16.msra.mxu0 0
        %1732 = vmatpush.bf16.msra.mxu0 0
        %1733 = vmatpush.bf16.msra.mxu0 0
        %1734 = vmatpush.bf16.msra.mxu0 0
        %1735 = vmatpush.bf16.msra.mxu0 %v1726
        %1736 = vmatmul.bf16.gmra.mxu0 %v1723
        %v1737 = vpop.f32.mrf.mxu0
        %v1738 = vadd.f32 0.0, %v1737
        %v1739 = vpop.f32.mrf.mxu0
        %1740 = vdwg.mxu0
        %v1742 = vunpack.c.l.b16 %v790
        %v1743 = vpack.c.b16 %v1742, %v1742
        %1744 = vrot.lane.b32.xlu0 %v1743, 112
        %v1745 = vpop.permute.xlu0 %1744
        %v1747 = vsel %vm994, %v1595, 0
        %v1750 = vsel %vm1094, %v1745, 0
        %1752 = vmatpush.bf16.msra.mxu0 0
        %1753 = vmatpush.bf16.msra.mxu0 0
        %1754 = vmatpush.bf16.msra.mxu0 0
        %1755 = vmatpush.bf16.msra.mxu0 0
        %1756 = vmatpush.bf16.msra.mxu0 0
        %1757 = vmatpush.bf16.msra.mxu0 0
        %1758 = vmatpush.bf16.msra.mxu0 0
        %1759 = vmatpush.bf16.msra.mxu0 %v1750
        %1760 = vmatmul.bf16.gmra.mxu0 %v1747
        %v1761 = vpop.f32.mrf.mxu0
        %v1762 = vadd.f32 0.0, %v1761
        %v1763 = vpop.f32.mrf.mxu0
        %1764 = vdwg.mxu0
        %v1766 = vunpack.c.l.b16 %v791
        %v1767 = vpack.c.b16 %v1766, %v1766
        %1768 = vrot.lane.b32.xlu0 %v1767, 112
        %v1769 = vpop.permute.xlu0 %1768
        %v1771 = vsel %vm994, %v1596, 0
        %v1774 = vsel %vm1094, %v1769, 0
        %1776 = vmatpush.bf16.msra.mxu0 0
        %1777 = vmatpush.bf16.msra.mxu0 0
        %1778 = vmatpush.bf16.msra.mxu0 0
        %1779 = vmatpush.bf16.msra.mxu0 0
        %1780 = vmatpush.bf16.msra.mxu0 0
        %1781 = vmatpush.bf16.msra.mxu0 0
        %1782 = vmatpush.bf16.msra.mxu0 0
        %1783 = vmatpush.bf16.msra.mxu0 %v1774
        %1784 = vmatmul.bf16.gmra.mxu0 %v1771
        %v1785 = vpop.f32.mrf.mxu0
        %v1786 = vadd.f32 0.0, %v1785
        %v1787 = vpop.f32.mrf.mxu0
        %1788 = vdwg.mxu0
        %1797 = vrot.lane.b32.xlu0 %v1618, 16
        %v1798 = vpop.permute.xlu0 %1797
        %1799 = vrot.lane.b32.xlu0 %v1642, 16
        %v1800 = vpop.permute.xlu0 %1799
        %1801 = vrot.lane.b32.xlu0 %v1666, 16
        %v1802 = vpop.permute.xlu0 %1801
        %1803 = vrot.lane.b32.xlu0 %v1690, 16
        %v1804 = vpop.permute.xlu0 %1803
        %1805 = vrot.lane.b32.xlu0 %v1714, 16
        %v1806 = vpop.permute.xlu0 %1805
        %1807 = vrot.lane.b32.xlu0 %v1738, 16
        %v1808 = vpop.permute.xlu0 %1807
        %1809 = vrot.lane.b32.xlu0 %v1762, 16
        %v1810 = vpop.permute.xlu0 %1809
        %1811 = vrot.lane.b32.xlu0 %v1786, 16
        %v1812 = vpop.permute.xlu0 %1811
        %v1821 = vsel %vm792, %v1108, %v1798
        %v1822 = vsel %vm792, %v1127, %v1800
        %v1823 = vsel %vm792, %v1146, %v1802
        %v1824 = vsel %vm792, %v1165, %v1804
        %v1825 = vsel %vm792, %v1184, %v1806
        %v1826 = vsel %vm792, %v1203, %v1808
        %v1827 = vsel %vm792, %v1222, %v1810
        %v1828 = vsel %vm792, %v1241, %v1812
        %v1829 = vpack.c.bf16 %v1822, %v1821
        %v1830 = vpack.c.bf16 %v1824, %v1823
        %v1831 = vpack.c.bf16 %v1826, %v1825
        %v1832 = vpack.c.bf16 %v1828, %v1827
        %v1834 = vperm.slane %v602, 0
        %v1840 = vunpack.c.l.b16 %v598
        %v1841 = vunpack.c.l.b16 %v599
        %v1842 = vunpack.c.l.b16 %v600
        %v1843 = vunpack.c.l.b16 %v601
        %v1844 = vpack.c.b16 %v1841, %v1840
        %v1845 = vpack.c.b16 %v1843, %v1842
        %v1849 = vsel %vm638, %v1829, 0
        %v1852 = vsel %vm638, %v1830, 0
        %v1855 = vsel %vm638, %v1831, 0
        %v1858 = vsel %vm638, %v1832, 0
        %1860 = vmatpush.bf16.msra.mxu0 0
        %1861 = vmatpush.bf16.msra.mxu0 0
        %1862 = vmatpush.bf16.msra.mxu0 0
        %1863 = vmatpush.bf16.msra.mxu0 0
        %1864 = vmatpush.bf16.msra.mxu0 0
        %1865 = vmatpush.bf16.msra.mxu0 0
        %1866 = vmatpush.bf16.msra.mxu0 %v1845
        %1867 = vmatpush.bf16.msra.mxu0 %v1844
        %1868 = vmatmul.bf16.gmra.mxu0 %v1849
        %v1869 = vpop.f32.mrf.mxu0
        %v1870 = vadd.f32 %v1834, %v1869
        %v1871 = vpop.f32.mrf.mxu0
        %v1872 = vadd.f32 %v1834, %v1871
        %1873 = vmatmul.bf16.gmra.mxu0 %v1852
        %v1874 = vpop.f32.mrf.mxu0
        %v1875 = vadd.f32 %v1834, %v1874
        %v1876 = vpop.f32.mrf.mxu0
        %v1877 = vadd.f32 %v1834, %v1876
        %1878 = vmatmul.bf16.gmra.mxu0 %v1855
        %v1879 = vpop.f32.mrf.mxu0
        %v1880 = vadd.f32 %v1834, %v1879
        %v1881 = vpop.f32.mrf.mxu0
        %v1882 = vadd.f32 %v1834, %v1881
        %1883 = vmatmul.bf16.gmra.mxu0 %v1858
        %v1884 = vpop.f32.mrf.mxu0
        %v1885 = vadd.f32 %v1834, %v1884
        %v1886 = vpop.f32.mrf.mxu0
        %v1887 = vadd.f32 %v1834, %v1886
        %1888 = vdwg.mxu0
        %v1889 = vpack.c.bf16 %v1870, %v1870
        %v1890 = vpack.c.bf16 %v1872, %v1872
        %v1891 = vpack.c.bf16 %v1875, %v1875
        %v1892 = vpack.c.bf16 %v1877, %v1877
        %v1893 = vpack.c.bf16 %v1880, %v1880
        %v1894 = vpack.c.bf16 %v1882, %v1882
        %v1895 = vpack.c.bf16 %v1885, %v1885
        %v1896 = vpack.c.bf16 %v1887, %v1887
        %vm1897 = vcmask 257024
        %1898 = vst.msk [vmem:[%s522] sm:$0xf] %vm1897, %v1889
        %1899 = vst.msk [vmem:[%s522 + $0x4] sm:$0xf] %vm1897, %v1890
        %1900 = vst.msk [vmem:[%s522 + $0x8] sm:$0xf] %vm1897, %v1891
        %1901 = vst.msk [vmem:[%s522 + $0xc] sm:$0xf] %vm1897, %v1892
        %1902 = vst.msk [vmem:[%s522 + $0x10] sm:$0xf] %vm1897, %v1893
        %1903 = vst.msk [vmem:[%s522 + $0x14] sm:$0xf] %vm1897, %v1894
        %1904 = vst.msk [vmem:[%s522 + $0x18] sm:$0xf] %vm1897, %v1895
        %1905 = vst.msk [vmem:[%s522 + $0x1c] sm:$0xf] %vm1897, %v1896
        %v1906 = vld [vmem:[%s545] sm:$0xff]
        %v1907 = vld [vmem:[%s545 + $0x8] sm:$0xff]
        %v1908 = vld [vmem:[%s545 + $0x10] sm:$0xff]
        %v1909 = vld [vmem:[%s545 + $0x18] sm:$0xff]
        %v1910 = vld [vmem:[%s545 + $0x20] sm:$0xff]
        %v1911 = vld [vmem:[%s545 + $0x28] sm:$0xff]
        %v1912 = vld [vmem:[%s545 + $0x30] sm:$0xff]
        %v1913 = vld [vmem:[%s545 + $0x38] sm:$0xff]
        %vm1914 = vcmask 7168
        %v1915 = vsel %vm1914, %v1906, 0.0
        %v1916 = vrot.slane %v1915, 4
        %v1917 = vadd.f32 %v1915, %v1916
        %v1918 = vrot.slane %v1917, 2
        %v1919 = vadd.f32 %v1917, %v1918
        %v1920 = vrot.slane %v1919, 1
        %v1921 = vadd.f32 %v1919, %v1920
        %v1922 = vsel %vm1914, %v1907, 0.0
        %v1923 = vrot.slane %v1922, 4
        %v1924 = vadd.f32 %v1922, %v1923
        %v1925 = vrot.slane %v1924, 2
        %v1926 = vadd.f32 %v1924, %v1925
        %v1927 = vrot.slane %v1926, 1
        %v1928 = vadd.f32 %v1926, %v1927
        %v1929 = vsel %vm1914, %v1908, 0.0
        %v1930 = vrot.slane %v1929, 4
        %v1931 = vadd.f32 %v1929, %v1930
        %v1932 = vrot.slane %v1931, 2
        %v1933 = vadd.f32 %v1931, %v1932
        %v1934 = vrot.slane %v1933, 1
        %v1935 = vadd.f32 %v1933, %v1934
        %v1936 = vsel %vm1914, %v1909, 0.0
        %v1937 = vrot.slane %v1936, 4
        %v1938 = vadd.f32 %v1936, %v1937
        %v1939 = vrot.slane %v1938, 2
        %v1940 = vadd.f32 %v1938, %v1939
        %v1941 = vrot.slane %v1940, 1
        %v1942 = vadd.f32 %v1940, %v1941
        %v1943 = vsel %vm1914, %v1910, 0.0
        %v1944 = vrot.slane %v1943, 4
        %v1945 = vadd.f32 %v1943, %v1944
        %v1946 = vrot.slane %v1945, 2
        %v1947 = vadd.f32 %v1945, %v1946
        %v1948 = vrot.slane %v1947, 1
        %v1949 = vadd.f32 %v1947, %v1948
        %v1950 = vsel %vm1914, %v1911, 0.0
        %v1951 = vrot.slane %v1950, 4
        %v1952 = vadd.f32 %v1950, %v1951
        %v1953 = vrot.slane %v1952, 2
        %v1954 = vadd.f32 %v1952, %v1953
        %v1955 = vrot.slane %v1954, 1
        %v1956 = vadd.f32 %v1954, %v1955
        %v1957 = vsel %vm1914, %v1912, 0.0
        %v1958 = vrot.slane %v1957, 4
        %v1959 = vadd.f32 %v1957, %v1958
        %v1960 = vrot.slane %v1959, 2
        %v1961 = vadd.f32 %v1959, %v1960
        %v1962 = vrot.slane %v1961, 1
        %v1963 = vadd.f32 %v1961, %v1962
        %v1964 = vsel %vm1914, %v1913, 0.0
        %v1965 = vrot.slane %v1964, 4
        %v1966 = vadd.f32 %v1964, %v1965
        %v1967 = vrot.slane %v1966, 2
        %v1968 = vadd.f32 %v1966, %v1967
        %v1969 = vrot.slane %v1968, 1
        %v1970 = vadd.f32 %v1968, %v1969
        %v1971 = vadd.f32 %v1921, 1e-06
        %v1972 = vadd.f32 %v1928, 1e-06
        %v1973 = vadd.f32 %v1935, 1e-06
        %v1974 = vadd.f32 %v1942, 1e-06
        %v1975 = vadd.f32 %v1949, 1e-06
        %v1976 = vadd.f32 %v1956, 1e-06
        %v1977 = vadd.f32 %v1963, 1e-06
        %v1978 = vadd.f32 %v1970, 1e-06
        %1980 = vset.pattern.permute.xlu0 0
        %1981 = vperm.xlu0 %1980, %v1906
        %v1982 = vpop.permute.xlu0 %1981
        %1985 = vset.pattern.permute.xlu0 0
        %1986 = vperm.xlu0 %1985, %v1907
        %v1987 = vpop.permute.xlu0 %1986
        %1990 = vset.pattern.permute.xlu0 0
        %1991 = vperm.xlu0 %1990, %v1908
        %v1992 = vpop.permute.xlu0 %1991
        %1995 = vset.pattern.permute.xlu0 0
        %1996 = vperm.xlu0 %1995, %v1909
        %v1997 = vpop.permute.xlu0 %1996
        %2000 = vset.pattern.permute.xlu0 0
        %2001 = vperm.xlu0 %2000, %v1910
        %v2002 = vpop.permute.xlu0 %2001
        %2005 = vset.pattern.permute.xlu0 0
        %2006 = vperm.xlu0 %2005, %v1911
        %v2007 = vpop.permute.xlu0 %2006
        %2010 = vset.pattern.permute.xlu0 0
        %2011 = vperm.xlu0 %2010, %v1912
        %v2012 = vpop.permute.xlu0 %2011
        %2015 = vset.pattern.permute.xlu0 0
        %2016 = vperm.xlu0 %2015, %v1913
        %v2017 = vpop.permute.xlu0 %2016
        %v2019 = vmul.f32 %v1982, %v1870
        %v2020 = vmul.f32 %v1987, %v1872
        %v2021 = vmul.f32 %v1992, %v1875
        %v2022 = vmul.f32 %v1997, %v1877
        %v2023 = vmul.f32 %v2002, %v1880
        %v2024 = vmul.f32 %v2007, %v1882
        %v2025 = vmul.f32 %v2012, %v1885
        %v2026 = vmul.f32 %v2017, %v1887
        %v2027 = vsel %vm638, %v2019, 0.0
        %v2028 = vrot.slane %v2027, 4
        %v2029 = vadd.f32 %v2027, %v2028
        %v2030 = vrot.slane %v2029, 2
        %v2031 = vadd.f32 %v2029, %v2030
        %v2032 = vrot.slane %v2031, 1
        %v2033 = vadd.f32 %v2031, %v2032
        %v2034 = vsel %vm638, %v2020, 0.0
        %v2035 = vrot.slane %v2034, 4
        %v2036 = vadd.f32 %v2034, %v2035
        %v2037 = vrot.slane %v2036, 2
        %v2038 = vadd.f32 %v2036, %v2037
        %v2039 = vrot.slane %v2038, 1
        %v2040 = vadd.f32 %v2038, %v2039
        %v2041 = vsel %vm638, %v2021, 0.0
        %v2042 = vrot.slane %v2041, 4
        %v2043 = vadd.f32 %v2041, %v2042
        %v2044 = vrot.slane %v2043, 2
        %v2045 = vadd.f32 %v2043, %v2044
        %v2046 = vrot.slane %v2045, 1
        %v2047 = vadd.f32 %v2045, %v2046
        %v2048 = vsel %vm638, %v2022, 0.0
        %v2049 = vrot.slane %v2048, 4
        %v2050 = vadd.f32 %v2048, %v2049
        %v2051 = vrot.slane %v2050, 2
        %v2052 = vadd.f32 %v2050, %v2051
        %v2053 = vrot.slane %v2052, 1
        %v2054 = vadd.f32 %v2052, %v2053
        %v2055 = vsel %vm638, %v2023, 0.0
        %v2056 = vrot.slane %v2055, 4
        %v2057 = vadd.f32 %v2055, %v2056
        %v2058 = vrot.slane %v2057, 2
        %v2059 = vadd.f32 %v2057, %v2058
        %v2060 = vrot.slane %v2059, 1
        %v2061 = vadd.f32 %v2059, %v2060
        %v2062 = vsel %vm638, %v2024, 0.0
        %v2063 = vrot.slane %v2062, 4
        %v2064 = vadd.f32 %v2062, %v2063
        %v2065 = vrot.slane %v2064, 2
        %v2066 = vadd.f32 %v2064, %v2065
        %v2067 = vrot.slane %v2066, 1
        %v2068 = vadd.f32 %v2066, %v2067
        %v2069 = vsel %vm638, %v2025, 0.0
        %v2070 = vrot.slane %v2069, 4
        %v2071 = vadd.f32 %v2069, %v2070
        %v2072 = vrot.slane %v2071, 2
        %v2073 = vadd.f32 %v2071, %v2072
        %v2074 = vrot.slane %v2073, 1
        %v2075 = vadd.f32 %v2073, %v2074
        %v2076 = vsel %vm638, %v2026, 0.0
        %v2077 = vrot.slane %v2076, 4
        %v2078 = vadd.f32 %v2076, %v2077
        %v2079 = vrot.slane %v2078, 2
        %v2080 = vadd.f32 %v2078, %v2079
        %v2081 = vrot.slane %v2080, 1
        %v2082 = vadd.f32 %v2080, %v2081
        %2084 = vset.pattern.permute.xlu0 0
        %2085 = vperm.xlu0 %2084, %v1971
        %v2086 = vpop.permute.xlu0 %2085
        %2089 = vset.pattern.permute.xlu0 0
        %2090 = vperm.xlu0 %2089, %v1972
        %v2091 = vpop.permute.xlu0 %2090
        %2094 = vset.pattern.permute.xlu0 0
        %2095 = vperm.xlu0 %2094, %v1973
        %v2096 = vpop.permute.xlu0 %2095
        %2099 = vset.pattern.permute.xlu0 0
        %2100 = vperm.xlu0 %2099, %v1974
        %v2101 = vpop.permute.xlu0 %2100
        %2104 = vset.pattern.permute.xlu0 0
        %2105 = vperm.xlu0 %2104, %v1975
        %v2106 = vpop.permute.xlu0 %2105
        %2109 = vset.pattern.permute.xlu0 0
        %2110 = vperm.xlu0 %2109, %v1976
        %v2111 = vpop.permute.xlu0 %2110
        %2114 = vset.pattern.permute.xlu0 0
        %2115 = vperm.xlu0 %2114, %v1977
        %v2116 = vpop.permute.xlu0 %2115
        %2119 = vset.pattern.permute.xlu0 0
        %2120 = vperm.xlu0 %2119, %v1978
        %v2121 = vpop.permute.xlu0 %2120
        %v2123 = vrcp.pop %v2086
        %v2124 = vmul.f32 %v2086, %v2123
        %v2125 = vsub.f32 1.0, %v2124
        %v2126 = vmul.f32 %v2123, %v2125
        %v2127 = vadd.f32 %v2123, %v2126
        %vm2128 = vweird.f32 %v2086
        %vm2129 = vweird.f32 %v2123
        %vm2130 = vmor %vm2128, %vm2129
        %v2131 = vsel %vm2130, %v2123, %v2127
        %v2132 = vand.u32 2147483647, %v2086
        %vm2133 = vcmp.eq.f32.partialorder %v2132, 8.507059e+37
        %v2134 = vand.u32 %v2086, 2147483648
        %v2135 = vor.u32 1.1754944e-38, %v2134
        %v2136 = vsel %vm2133, %v2135, %v2131
        %v2137 = vmul.f32 %v2033, %v2136
        %v2138 = vrcp.pop %v2091
        %v2139 = vmul.f32 %v2091, %v2138
        %v2140 = vsub.f32 1.0, %v2139
        %v2141 = vmul.f32 %v2138, %v2140
        %v2142 = vadd.f32 %v2138, %v2141
        %vm2143 = vweird.f32 %v2091
        %vm2144 = vweird.f32 %v2138
        %vm2145 = vmor %vm2143, %vm2144
        %v2146 = vsel %vm2145, %v2138, %v2142
        %v2147 = vand.u32 2147483647, %v2091
        %vm2148 = vcmp.eq.f32.partialorder %v2147, 8.507059e+37
        %v2149 = vand.u32 %v2091, 2147483648
        %v2150 = vor.u32 1.1754944e-38, %v2149
        %v2151 = vsel %vm2148, %v2150, %v2146
        %v2152 = vmul.f32 %v2040, %v2151
        %v2153 = vrcp.pop %v2096
        %v2154 = vmul.f32 %v2096, %v2153
        %v2155 = vsub.f32 1.0, %v2154
        %v2156 = vmul.f32 %v2153, %v2155
        %v2157 = vadd.f32 %v2153, %v2156
        %vm2158 = vweird.f32 %v2096
        %vm2159 = vweird.f32 %v2153
        %vm2160 = vmor %vm2158, %vm2159
        %v2161 = vsel %vm2160, %v2153, %v2157
        %v2162 = vand.u32 2147483647, %v2096
        %vm2163 = vcmp.eq.f32.partialorder %v2162, 8.507059e+37
        %v2164 = vand.u32 %v2096, 2147483648
        %v2165 = vor.u32 1.1754944e-38, %v2164
        %v2166 = vsel %vm2163, %v2165, %v2161
        %v2167 = vmul.f32 %v2047, %v2166
        %v2168 = vrcp.pop %v2101
        %v2169 = vmul.f32 %v2101, %v2168
        %v2170 = vsub.f32 1.0, %v2169
        %v2171 = vmul.f32 %v2168, %v2170
        %v2172 = vadd.f32 %v2168, %v2171
        %vm2173 = vweird.f32 %v2101
        %vm2174 = vweird.f32 %v2168
        %vm2175 = vmor %vm2173, %vm2174
        %v2176 = vsel %vm2175, %v2168, %v2172
        %v2177 = vand.u32 2147483647, %v2101
        %vm2178 = vcmp.eq.f32.partialorder %v2177, 8.507059e+37
        %v2179 = vand.u32 %v2101, 2147483648
        %v2180 = vor.u32 1.1754944e-38, %v2179
        %v2181 = vsel %vm2178, %v2180, %v2176
        %v2182 = vmul.f32 %v2054, %v2181
        %v2183 = vrcp.pop %v2106
        %v2184 = vmul.f32 %v2106, %v2183
        %v2185 = vsub.f32 1.0, %v2184
        %v2186 = vmul.f32 %v2183, %v2185
        %v2187 = vadd.f32 %v2183, %v2186
        %vm2188 = vweird.f32 %v2106
        %vm2189 = vweird.f32 %v2183
        %vm2190 = vmor %vm2188, %vm2189
        %v2191 = vsel %vm2190, %v2183, %v2187
        %v2192 = vand.u32 2147483647, %v2106
        %vm2193 = vcmp.eq.f32.partialorder %v2192, 8.507059e+37
        %v2194 = vand.u32 %v2106, 2147483648
        %v2195 = vor.u32 1.1754944e-38, %v2194
        %v2196 = vsel %vm2193, %v2195, %v2191
        %v2197 = vmul.f32 %v2061, %v2196
        %v2198 = vrcp.pop %v2111
        %v2199 = vmul.f32 %v2111, %v2198
        %v2200 = vsub.f32 1.0, %v2199
        %v2201 = vmul.f32 %v2198, %v2200
        %v2202 = vadd.f32 %v2198, %v2201
        %vm2203 = vweird.f32 %v2111
        %vm2204 = vweird.f32 %v2198
        %vm2205 = vmor %vm2203, %vm2204
        %v2206 = vsel %vm2205, %v2198, %v2202
        %v2207 = vand.u32 2147483647, %v2111
        %vm2208 = vcmp.eq.f32.partialorder %v2207, 8.507059e+37
        %v2209 = vand.u32 %v2111, 2147483648
        %v2210 = vor.u32 1.1754944e-38, %v2209
        %v2211 = vsel %vm2208, %v2210, %v2206
        %v2212 = vmul.f32 %v2068, %v2211
        %v2213 = vrcp.pop %v2116
        %v2214 = vmul.f32 %v2116, %v2213
        %v2215 = vsub.f32 1.0, %v2214
        %v2216 = vmul.f32 %v2213, %v2215
        %v2217 = vadd.f32 %v2213, %v2216
        %vm2218 = vweird.f32 %v2116
        %vm2219 = vweird.f32 %v2213
        %vm2220 = vmor %vm2218, %vm2219
        %v2221 = vsel %vm2220, %v2213, %v2217
        %v2222 = vand.u32 2147483647, %v2116
        %vm2223 = vcmp.eq.f32.partialorder %v2222, 8.507059e+37
        %v2224 = vand.u32 %v2116, 2147483648
        %v2225 = vor.u32 1.1754944e-38, %v2224
        %v2226 = vsel %vm2223, %v2225, %v2221
        %v2227 = vmul.f32 %v2075, %v2226
        %v2228 = vrcp.pop %v2121
        %v2229 = vmul.f32 %v2121, %v2228
        %v2230 = vsub.f32 1.0, %v2229
        %v2231 = vmul.f32 %v2228, %v2230
        %v2232 = vadd.f32 %v2228, %v2231
        %vm2233 = vweird.f32 %v2121
        %vm2234 = vweird.f32 %v2228
        %vm2235 = vmor %vm2233, %vm2234
        %v2236 = vsel %vm2235, %v2228, %v2232
        %v2237 = vand.u32 2147483647, %v2121
        %vm2238 = vcmp.eq.f32.partialorder %v2237, 8.507059e+37
        %v2239 = vand.u32 %v2121, 2147483648
        %v2240 = vor.u32 1.1754944e-38, %v2239
        %v2241 = vsel %vm2238, %v2240, %v2236
        %v2242 = vmul.f32 %v2082, %v2241
        %v2243 = vmul.f32 %v1870, %v2137
        %v2244 = vmul.f32 %v1872, %v2152
        %v2245 = vmul.f32 %v1875, %v2167
        %v2246 = vmul.f32 %v1877, %v2182
        %v2247 = vmul.f32 %v1880, %v2197
        %v2248 = vmul.f32 %v1882, %v2212
        %v2249 = vmul.f32 %v1885, %v2227
        %v2250 = vmul.f32 %v1887, %v2242
        %v2251 = vsel %vm638, %v2243, 0.0
        %2252 = vadd.xlane.f32.xlu0 %v2251
        %v2253 = vpop.xlane.xlu0 %2252
        %v2254 = vsel %vm638, %v2244, 0.0
        %2255 = vadd.xlane.f32.xlu0 %v2254
        %v2256 = vpop.xlane.xlu0 %2255
        %v2257 = vsel %vm638, %v2245, 0.0
        %2258 = vadd.xlane.f32.xlu0 %v2257
        %v2259 = vpop.xlane.xlu0 %2258
        %v2260 = vsel %vm638, %v2246, 0.0
        %2261 = vadd.xlane.f32.xlu0 %v2260
        %v2262 = vpop.xlane.xlu0 %2261
        %v2263 = vsel %vm638, %v2247, 0.0
        %2264 = vadd.xlane.f32.xlu0 %v2263
        %v2265 = vpop.xlane.xlu0 %2264
        %v2266 = vsel %vm638, %v2248, 0.0
        %2267 = vadd.xlane.f32.xlu0 %v2266
        %v2268 = vpop.xlane.xlu0 %2267
        %v2269 = vsel %vm638, %v2249, 0.0
        %2270 = vadd.xlane.f32.xlu0 %v2269
        %v2271 = vpop.xlane.xlu0 %2270
        %v2272 = vsel %vm638, %v2250, 0.0
        %2273 = vadd.xlane.f32.xlu0 %v2272
        %v2274 = vpop.xlane.xlu0 %2273
        %v2275 = vmul.f32 %v2253, 0.17677669
        %v2276 = vmul.f32 %v2256, 0.17677669
        %v2277 = vmul.f32 %v2259, 0.17677669
        %v2278 = vmul.f32 %v2262, 0.17677669
        %v2279 = vmul.f32 %v2265, 0.17677669
        %v2280 = vmul.f32 %v2268, 0.17677669
        %v2281 = vmul.f32 %v2271, 0.17677669
        %v2282 = vmul.f32 %v2274, 0.17677669
        %v2283 = vadd.f32 %v2275, %v1906
        %v2284 = vadd.f32 %v2276, %v1907
        %v2285 = vadd.f32 %v2277, %v1908
        %v2286 = vadd.f32 %v2278, %v1909
        %v2287 = vadd.f32 %v2279, %v1910
        %v2288 = vadd.f32 %v2280, %v1911
        %v2289 = vadd.f32 %v2281, %v1912
        %v2290 = vadd.f32 %v2282, %v1913
        %v2291 = vsel %vm1914, %v2283, -inf
        %v2292 = vrot.slane %v2291, 4
        %v2293 = vmax.f32 %v2291, %v2292
        %v2294 = vrot.slane %v2293, 2
        %v2295 = vmax.f32 %v2293, %v2294
        %v2296 = vrot.slane %v2295, 1
        %v2297 = vmax.f32 %v2295, %v2296
        %v2298 = vsel %vm1914, %v2284, -inf
        %v2299 = vrot.slane %v2298, 4
        %v2300 = vmax.f32 %v2298, %v2299
        %v2301 = vrot.slane %v2300, 2
        %v2302 = vmax.f32 %v2300, %v2301
        %v2303 = vrot.slane %v2302, 1
        %v2304 = vmax.f32 %v2302, %v2303
        %v2305 = vsel %vm1914, %v2285, -inf
        %v2306 = vrot.slane %v2305, 4
        %v2307 = vmax.f32 %v2305, %v2306
        %v2308 = vrot.slane %v2307, 2
        %v2309 = vmax.f32 %v2307, %v2308
        %v2310 = vrot.slane %v2309, 1
        %v2311 = vmax.f32 %v2309, %v2310
        %v2312 = vsel %vm1914, %v2286, -inf
        %v2313 = vrot.slane %v2312, 4
        %v2314 = vmax.f32 %v2312, %v2313
        %v2315 = vrot.slane %v2314, 2
        %v2316 = vmax.f32 %v2314, %v2315
        %v2317 = vrot.slane %v2316, 1
        %v2318 = vmax.f32 %v2316, %v2317
        %v2319 = vsel %vm1914, %v2287, -inf
        %v2320 = vrot.slane %v2319, 4
        %v2321 = vmax.f32 %v2319, %v2320
        %v2322 = vrot.slane %v2321, 2
        %v2323 = vmax.f32 %v2321, %v2322
        %v2324 = vrot.slane %v2323, 1
        %v2325 = vmax.f32 %v2323, %v2324
        %v2326 = vsel %vm1914, %v2288, -inf
        %v2327 = vrot.slane %v2326, 4
        %v2328 = vmax.f32 %v2326, %v2327
        %v2329 = vrot.slane %v2328, 2
        %v2330 = vmax.f32 %v2328, %v2329
        %v2331 = vrot.slane %v2330, 1
        %v2332 = vmax.f32 %v2330, %v2331
        %v2333 = vsel %vm1914, %v2289, -inf
        %v2334 = vrot.slane %v2333, 4
        %v2335 = vmax.f32 %v2333, %v2334
        %v2336 = vrot.slane %v2335, 2
        %v2337 = vmax.f32 %v2335, %v2336
        %v2338 = vrot.slane %v2337, 1
        %v2339 = vmax.f32 %v2337, %v2338
        %v2340 = vsel %vm1914, %v2290, -inf
        %v2341 = vrot.slane %v2340, 4
        %v2342 = vmax.f32 %v2340, %v2341
        %v2343 = vrot.slane %v2342, 2
        %v2344 = vmax.f32 %v2342, %v2343
        %v2345 = vrot.slane %v2344, 1
        %v2346 = vmax.f32 %v2344, %v2345
        %v2347 = vsub.f32 %v2283, %v2297
        %v2348 = vsub.f32 %v2284, %v2304
        %v2349 = vsub.f32 %v2285, %v2311
        %v2350 = vsub.f32 %v2286, %v2318
        %v2351 = vsub.f32 %v2287, %v2325
        %v2352 = vsub.f32 %v2288, %v2332
        %v2353 = vsub.f32 %v2289, %v2339
        %v2354 = vsub.f32 %v2290, %v2346
        %v2355 = vmul.f32 %v2347, 1.442695
        %v2356 = vpow.pop %v2355
        %v2357 = vmul.f32 %v2348, 1.442695
        %v2358 = vpow.pop %v2357
        %v2359 = vmul.f32 %v2349, 1.442695
        %v2360 = vpow.pop %v2359
        %v2361 = vmul.f32 %v2350, 1.442695
        %v2362 = vpow.pop %v2361
        %v2363 = vmul.f32 %v2351, 1.442695
        %v2364 = vpow.pop %v2363
        %v2365 = vmul.f32 %v2352, 1.442695
        %v2366 = vpow.pop %v2365
        %v2367 = vmul.f32 %v2353, 1.442695
        %v2368 = vpow.pop %v2367
        %v2369 = vmul.f32 %v2354, 1.442695
        %v2370 = vpow.pop %v2369
        %v2371 = vsel %vm1914, %v2356, 0.0
        %v2372 = vrot.slane %v2371, 4
        %v2373 = vadd.f32 %v2371, %v2372
        %v2374 = vrot.slane %v2373, 2
        %v2375 = vadd.f32 %v2373, %v2374
        %v2376 = vrot.slane %v2375, 1
        %v2377 = vadd.f32 %v2375, %v2376
        %v2378 = vsel %vm1914, %v2358, 0.0
        %v2379 = vrot.slane %v2378, 4
        %v2380 = vadd.f32 %v2378, %v2379
        %v2381 = vrot.slane %v2380, 2
        %v2382 = vadd.f32 %v2380, %v2381
        %v2383 = vrot.slane %v2382, 1
        %v2384 = vadd.f32 %v2382, %v2383
        %v2385 = vsel %vm1914, %v2360, 0.0
        %v2386 = vrot.slane %v2385, 4
        %v2387 = vadd.f32 %v2385, %v2386
        %v2388 = vrot.slane %v2387, 2
        %v2389 = vadd.f32 %v2387, %v2388
        %v2390 = vrot.slane %v2389, 1
        %v2391 = vadd.f32 %v2389, %v2390
        %v2392 = vsel %vm1914, %v2362, 0.0
        %v2393 = vrot.slane %v2392, 4
        %v2394 = vadd.f32 %v2392, %v2393
        %v2395 = vrot.slane %v2394, 2
        %v2396 = vadd.f32 %v2394, %v2395
        %v2397 = vrot.slane %v2396, 1
        %v2398 = vadd.f32 %v2396, %v2397
        %v2399 = vsel %vm1914, %v2364, 0.0
        %v2400 = vrot.slane %v2399, 4
        %v2401 = vadd.f32 %v2399, %v2400
        %v2402 = vrot.slane %v2401, 2
        %v2403 = vadd.f32 %v2401, %v2402
        %v2404 = vrot.slane %v2403, 1
        %v2405 = vadd.f32 %v2403, %v2404
        %v2406 = vsel %vm1914, %v2366, 0.0
        %v2407 = vrot.slane %v2406, 4
        %v2408 = vadd.f32 %v2406, %v2407
        %v2409 = vrot.slane %v2408, 2
        %v2410 = vadd.f32 %v2408, %v2409
        %v2411 = vrot.slane %v2410, 1
        %v2412 = vadd.f32 %v2410, %v2411
        %v2413 = vsel %vm1914, %v2368, 0.0
        %v2414 = vrot.slane %v2413, 4
        %v2415 = vadd.f32 %v2413, %v2414
        %v2416 = vrot.slane %v2415, 2
        %v2417 = vadd.f32 %v2415, %v2416
        %v2418 = vrot.slane %v2417, 1
        %v2419 = vadd.f32 %v2417, %v2418
        %v2420 = vsel %vm1914, %v2370, 0.0
        %v2421 = vrot.slane %v2420, 4
        %v2422 = vadd.f32 %v2420, %v2421
        %v2423 = vrot.slane %v2422, 2
        %v2424 = vadd.f32 %v2422, %v2423
        %v2425 = vrot.slane %v2424, 1
        %v2426 = vadd.f32 %v2424, %v2425
        %v2427 = vrcp.pop %v2377
        %v2428 = vmul.f32 %v2377, %v2427
        %v2429 = vsub.f32 1.0, %v2428
        %v2430 = vmul.f32 %v2427, %v2429
        %v2431 = vadd.f32 %v2427, %v2430
        %vm2432 = vweird.f32 %v2377
        %vm2433 = vweird.f32 %v2427
        %vm2434 = vmor %vm2432, %vm2433
        %v2435 = vsel %vm2434, %v2427, %v2431
        %v2436 = vand.u32 2147483647, %v2377
        %vm2437 = vcmp.eq.f32.partialorder %v2436, 8.507059e+37
        %v2438 = vand.u32 %v2377, 2147483648
        %v2439 = vor.u32 1.1754944e-38, %v2438
        %v2440 = vsel %vm2437, %v2439, %v2435
        %v2441 = vmul.f32 %v2356, %v2440
        %v2442 = vrcp.pop %v2384
        %v2443 = vmul.f32 %v2384, %v2442
        %v2444 = vsub.f32 1.0, %v2443
        %v2445 = vmul.f32 %v2442, %v2444
        %v2446 = vadd.f32 %v2442, %v2445
        %vm2447 = vweird.f32 %v2384
        %vm2448 = vweird.f32 %v2442
        %vm2449 = vmor %vm2447, %vm2448
        %v2450 = vsel %vm2449, %v2442, %v2446
        %v2451 = vand.u32 2147483647, %v2384
        %vm2452 = vcmp.eq.f32.partialorder %v2451, 8.507059e+37
        %v2453 = vand.u32 %v2384, 2147483648
        %v2454 = vor.u32 1.1754944e-38, %v2453
        %v2455 = vsel %vm2452, %v2454, %v2450
        %v2456 = vmul.f32 %v2358, %v2455
        %v2457 = vrcp.pop %v2391
        %v2458 = vmul.f32 %v2391, %v2457
        %v2459 = vsub.f32 1.0, %v2458
        %v2460 = vmul.f32 %v2457, %v2459
        %v2461 = vadd.f32 %v2457, %v2460
        %vm2462 = vweird.f32 %v2391
        %vm2463 = vweird.f32 %v2457
        %vm2464 = vmor %vm2462, %vm2463
        %v2465 = vsel %vm2464, %v2457, %v2461
        %v2466 = vand.u32 2147483647, %v2391
        %vm2467 = vcmp.eq.f32.partialorder %v2466, 8.507059e+37
        %v2468 = vand.u32 %v2391, 2147483648
        %v2469 = vor.u32 1.1754944e-38, %v2468
        %v2470 = vsel %vm2467, %v2469, %v2465
        %v2471 = vmul.f32 %v2360, %v2470
        %v2472 = vrcp.pop %v2398
        %v2473 = vmul.f32 %v2398, %v2472
        %v2474 = vsub.f32 1.0, %v2473
        %v2475 = vmul.f32 %v2472, %v2474
        %v2476 = vadd.f32 %v2472, %v2475
        %vm2477 = vweird.f32 %v2398
        %vm2478 = vweird.f32 %v2472
        %vm2479 = vmor %vm2477, %vm2478
        %v2480 = vsel %vm2479, %v2472, %v2476
        %v2481 = vand.u32 2147483647, %v2398
        %vm2482 = vcmp.eq.f32.partialorder %v2481, 8.507059e+37
        %v2483 = vand.u32 %v2398, 2147483648
        %v2484 = vor.u32 1.1754944e-38, %v2483
        %v2485 = vsel %vm2482, %v2484, %v2480
        %v2486 = vmul.f32 %v2362, %v2485
        %v2487 = vrcp.pop %v2405
        %v2488 = vmul.f32 %v2405, %v2487
        %v2489 = vsub.f32 1.0, %v2488
        %v2490 = vmul.f32 %v2487, %v2489
        %v2491 = vadd.f32 %v2487, %v2490
        %vm2492 = vweird.f32 %v2405
        %vm2493 = vweird.f32 %v2487
        %vm2494 = vmor %vm2492, %vm2493
        %v2495 = vsel %vm2494, %v2487, %v2491
        %v2496 = vand.u32 2147483647, %v2405
        %vm2497 = vcmp.eq.f32.partialorder %v2496, 8.507059e+37
        %v2498 = vand.u32 %v2405, 2147483648
        %v2499 = vor.u32 1.1754944e-38, %v2498
        %v2500 = vsel %vm2497, %v2499, %v2495
        %v2501 = vmul.f32 %v2364, %v2500
        %v2502 = vrcp.pop %v2412
        %v2503 = vmul.f32 %v2412, %v2502
        %v2504 = vsub.f32 1.0, %v2503
        %v2505 = vmul.f32 %v2502, %v2504
        %v2506 = vadd.f32 %v2502, %v2505
        %vm2507 = vweird.f32 %v2412
        %vm2508 = vweird.f32 %v2502
        %vm2509 = vmor %vm2507, %vm2508
        %v2510 = vsel %vm2509, %v2502, %v2506
        %v2511 = vand.u32 2147483647, %v2412
        %vm2512 = vcmp.eq.f32.partialorder %v2511, 8.507059e+37
        %v2513 = vand.u32 %v2412, 2147483648
        %v2514 = vor.u32 1.1754944e-38, %v2513
        %v2515 = vsel %vm2512, %v2514, %v2510
        %v2516 = vmul.f32 %v2366, %v2515
        %v2517 = vrcp.pop %v2419
        %v2518 = vmul.f32 %v2419, %v2517
        %v2519 = vsub.f32 1.0, %v2518
        %v2520 = vmul.f32 %v2517, %v2519
        %v2521 = vadd.f32 %v2517, %v2520
        %vm2522 = vweird.f32 %v2419
        %vm2523 = vweird.f32 %v2517
        %vm2524 = vmor %vm2522, %vm2523
        %v2525 = vsel %vm2524, %v2517, %v2521
        %v2526 = vand.u32 2147483647, %v2419
        %vm2527 = vcmp.eq.f32.partialorder %v2526, 8.507059e+37
        %v2528 = vand.u32 %v2419, 2147483648
        %v2529 = vor.u32 1.1754944e-38, %v2528
        %v2530 = vsel %vm2527, %v2529, %v2525
        %v2531 = vmul.f32 %v2368, %v2530
        %v2532 = vrcp.pop %v2426
        %v2533 = vmul.f32 %v2426, %v2532
        %v2534 = vsub.f32 1.0, %v2533
        %v2535 = vmul.f32 %v2532, %v2534
        %v2536 = vadd.f32 %v2532, %v2535
        %vm2537 = vweird.f32 %v2426
        %vm2538 = vweird.f32 %v2532
        %vm2539 = vmor %vm2537, %vm2538
        %v2540 = vsel %vm2539, %v2532, %v2536
        %v2541 = vand.u32 2147483647, %v2426
        %vm2542 = vcmp.eq.f32.partialorder %v2541, 8.507059e+37
        %v2543 = vand.u32 %v2426, 2147483648
        %v2544 = vor.u32 1.1754944e-38, %v2543
        %v2545 = vsel %vm2542, %v2544, %v2540
        %v2546 = vmul.f32 %v2370, %v2545
        %2548 = vset.pattern.permute.xlu0 0
        %2549 = vperm.xlu0 %2548, %v2441
        %v2550 = vpop.permute.xlu0 %2549
        %2553 = vset.pattern.permute.xlu0 0
        %2554 = vperm.xlu0 %2553, %v2456
        %v2555 = vpop.permute.xlu0 %2554
        %2558 = vset.pattern.permute.xlu0 0
        %2559 = vperm.xlu0 %2558, %v2471
        %v2560 = vpop.permute.xlu0 %2559
        %2563 = vset.pattern.permute.xlu0 0
        %2564 = vperm.xlu0 %2563, %v2486
        %v2565 = vpop.permute.xlu0 %2564
        %2568 = vset.pattern.permute.xlu0 0
        %2569 = vperm.xlu0 %2568, %v2501
        %v2570 = vpop.permute.xlu0 %2569
        %2573 = vset.pattern.permute.xlu0 0
        %2574 = vperm.xlu0 %2573, %v2516
        %v2575 = vpop.permute.xlu0 %2574
        %2578 = vset.pattern.permute.xlu0 0
        %2579 = vperm.xlu0 %2578, %v2531
        %v2580 = vpop.permute.xlu0 %2579
        %2583 = vset.pattern.permute.xlu0 0
        %2584 = vperm.xlu0 %2583, %v2546
        %v2585 = vpop.permute.xlu0 %2584
        %v2587 = vmul.f32 %v1870, %v2550
        %v2588 = vmul.f32 %v1872, %v2555
        %v2589 = vmul.f32 %v1875, %v2560
        %v2590 = vmul.f32 %v1877, %v2565
        %v2591 = vmul.f32 %v1880, %v2570
        %v2592 = vmul.f32 %v1882, %v2575
        %v2593 = vmul.f32 %v1885, %v2580
        %v2594 = vmul.f32 %v1887, %v2585
        %v2595 = vsel %vm638, %v2587, 0.0
        %v2596 = vrot.slane %v2595, 4
        %v2597 = vadd.f32 %v2595, %v2596
        %v2598 = vrot.slane %v2597, 2
        %v2599 = vadd.f32 %v2597, %v2598
        %v2600 = vrot.slane %v2599, 1
        %v2601 = vadd.f32 %v2599, %v2600
        %v2602 = vsel %vm638, %v2588, 0.0
        %v2603 = vrot.slane %v2602, 4
        %v2604 = vadd.f32 %v2602, %v2603
        %v2605 = vrot.slane %v2604, 2
        %v2606 = vadd.f32 %v2604, %v2605
        %v2607 = vrot.slane %v2606, 1
        %v2608 = vadd.f32 %v2606, %v2607
        %v2609 = vsel %vm638, %v2589, 0.0
        %v2610 = vrot.slane %v2609, 4
        %v2611 = vadd.f32 %v2609, %v2610
        %v2612 = vrot.slane %v2611, 2
        %v2613 = vadd.f32 %v2611, %v2612
        %v2614 = vrot.slane %v2613, 1
        %v2615 = vadd.f32 %v2613, %v2614
        %v2616 = vsel %vm638, %v2590, 0.0
        %v2617 = vrot.slane %v2616, 4
        %v2618 = vadd.f32 %v2616, %v2617
        %v2619 = vrot.slane %v2618, 2
        %v2620 = vadd.f32 %v2618, %v2619
        %v2621 = vrot.slane %v2620, 1
        %v2622 = vadd.f32 %v2620, %v2621
        %v2623 = vsel %vm638, %v2591, 0.0
        %v2624 = vrot.slane %v2623, 4
        %v2625 = vadd.f32 %v2623, %v2624
        %v2626 = vrot.slane %v2625, 2
        %v2627 = vadd.f32 %v2625, %v2626
        %v2628 = vrot.slane %v2627, 1
        %v2629 = vadd.f32 %v2627, %v2628
        %v2630 = vsel %vm638, %v2592, 0.0
        %v2631 = vrot.slane %v2630, 4
        %v2632 = vadd.f32 %v2630, %v2631
        %v2633 = vrot.slane %v2632, 2
        %v2634 = vadd.f32 %v2632, %v2633
        %v2635 = vrot.slane %v2634, 1
        %v2636 = vadd.f32 %v2634, %v2635
        %v2637 = vsel %vm638, %v2593, 0.0
        %v2638 = vrot.slane %v2637, 4
        %v2639 = vadd.f32 %v2637, %v2638
        %v2640 = vrot.slane %v2639, 2
        %v2641 = vadd.f32 %v2639, %v2640
        %v2642 = vrot.slane %v2641, 1
        %v2643 = vadd.f32 %v2641, %v2642
        %v2644 = vsel %vm638, %v2594, 0.0
        %v2645 = vrot.slane %v2644, 4
        %v2646 = vadd.f32 %v2644, %v2645
        %v2647 = vrot.slane %v2646, 2
        %v2648 = vadd.f32 %v2646, %v2647
        %v2649 = vrot.slane %v2648, 1
        %v2650 = vadd.f32 %v2648, %v2649
        %v2651 = vpack.c.bf16 %v2601, %v2601
        %v2652 = vpack.c.bf16 %v2608, %v2608
        %v2653 = vpack.c.bf16 %v2615, %v2615
        %v2654 = vpack.c.bf16 %v2622, %v2622
        %v2655 = vpack.c.bf16 %v2629, %v2629
        %v2656 = vpack.c.bf16 %v2636, %v2636
        %v2657 = vpack.c.bf16 %v2643, %v2643
        %v2658 = vpack.c.bf16 %v2650, %v2650
        %v2659 = vld [vmem:[%s12] sm:$0xf]
        %v2660 = vld [vmem:[%s12 + $0x4] sm:$0xf]
        %v2661 = vld [vmem:[%s12 + $0x8] sm:$0xf]
        %v2662 = vld [vmem:[%s12 + $0xc] sm:$0xf]
        %v2663 = vld [vmem:[%s13] sm:$0x1]
        %v2665 = vperm.slane %v2663, 0
        %v2675 = vunpack.c.l.b16 %v2651
        %v2676 = vunpack.c.l.b16 %v2652
        %v2677 = vunpack.c.l.b16 %v2653
        %v2678 = vunpack.c.l.b16 %v2654
        %v2679 = vunpack.c.l.b16 %v2655
        %v2680 = vunpack.c.l.b16 %v2656
        %v2681 = vunpack.c.l.b16 %v2657
        %v2682 = vunpack.c.l.b16 %v2658
        %vm2683 = vcmask 1041409
        %v2684 = vsel %vm2683, %v2676, %v2675
        %vm2685 = vcmask 1042434
        %v2686 = vsel %vm2685, %v2677, %v2684
        %vm2687 = vcmask 1043459
        %v2688 = vsel %vm2687, %v2678, %v2686
        %vm2689 = vcmask 1044484
        %v2690 = vsel %vm2689, %v2679, %v2688
        %vm2691 = vcmask 1045509
        %v2692 = vsel %vm2691, %v2680, %v2690
        %vm2693 = vcmask 1046534
        %v2694 = vsel %vm2693, %v2681, %v2692
        %vm2695 = vcmask 1047559
        %v2696 = vsel %vm2695, %v2682, %v2694
        %v2697 = vpack.c.b16 %v2696, %v2696
        %v2702 = vunpack.c.l.b16 %v2659
        %v2703 = vunpack.c.l.b16 %v2660
        %v2704 = vunpack.c.l.b16 %v2661
        %v2705 = vunpack.c.l.b16 %v2662
        %v2706 = vpack.c.b16 %v2703, %v2702
        %v2707 = vpack.c.b16 %v2705, %v2704
        %v2711 = vsel %vm638, %v2697, 0
        %2713 = vmatpush.bf16.msra.mxu0 0
        %2714 = vmatpush.bf16.msra.mxu0 0
        %2715 = vmatpush.bf16.msra.mxu0 0
        %2716 = vmatpush.bf16.msra.mxu0 0
        %2717 = vmatpush.bf16.msra.mxu0 0
        %2718 = vmatpush.bf16.msra.mxu0 0
        %2719 = vmatpush.bf16.msra.mxu0 %v2707
        %2720 = vmatpush.bf16.msra.mxu0 %v2706
        %2721 = vmatmul.bf16.gmra.mxu0 %v2711
        %v2722 = vpop.f32.mrf.mxu0
        %v2723 = vadd.f32 %v2665, %v2722
        %v2724 = vpop.f32.mrf.mxu0
        %2725 = vdwg.mxu0
        %2726 = vst.msk [vmem:[%s529] sm:$0xff] %vm638, %v2723
        %s2727 = sand.u32 %s350, 1
        %s2728 = scalar_lea.sflag [#allocation3], %s2727
        %s2729 = sand.u32 %s350, 1
        %s2730 = smul.addr %s2729, 32
        %s2731 = scalar_lea.vmem [#allocation2], %s2730
        %s2732 = sand.u32 %s376, 1
        %s2733 = scalar_lea.sflag [#allocation5], %s2732
        %s2734 = sand.u32 %s376, 1
        %s2735 = smul.addr %s2734, 8
        %s2736 = scalar_lea.vmem [#allocation4], %s2735
        // Predicated region
        $region77: #{tpu_custom_call.1} parent=75 // pred_check
          %p2737 = pneg %p360
        $region78: #{tpu_custom_call.1} parent=75 // pred_check_branch
          %2739 = sbr.rel (%p2737) target = $region80
        $region79: #{tpu_custom_call.1} parent=75 // pred_region
          %s2740 = smul.u32 8, %s33
          %2742 = vsyncadd %s2728, 0
          %s2743 = smul.addr %s2740, 4
          %s2744 = scalar_lea.hbm %s14, %s2743
          %s2745 = sshll.u32 %s2731, 4
          %s2746 = int_to_ptr.vmem [resolvable:$true] %s2745
          %s2747 = sshll.u32 %s2744, 4
          %s2748 = int_to_ptr.hbm [resolvable:$true] %s2747
          %2753 = dma.vmem_to_hbm [thread:$0]  %s2746, 512, %s2748, %s2728, 64, 64, 4
        $region80: #{tpu_custom_call.1} parent=75 // pred_fallthru
          _
        // Predicated region
        $region81: #{tpu_custom_call.1} parent=75 // pred_check
          %p2754 = pneg %p386
        $region82: #{tpu_custom_call.1} parent=75 // pred_check_branch
          %2756 = sbr.rel (%p2754) target = $region84
        $region83: #{tpu_custom_call.1} parent=75 // pred_region
          %2758 = vsyncadd %s2733, 0
          %s2759 = smul.addr %s33, 8
          %s2760 = scalar_lea.hbm %s15, %s2759
          %s2762 = sshll.u32 %s2736, 4
          %s2763 = int_to_ptr.vmem [resolvable:$true] %s2762
          %s2764 = sshll.u32 %s2760, 4
          %s2765 = int_to_ptr.hbm [resolvable:$true] %s2764
          %2767 = dma.vmem_to_hbm [thread:$0]  %s2763, 128, %s2765, %s2733
        $region84: #{tpu_custom_call.1} parent=75 // pred_fallthru
          _
      $region76: #{tpu_custom_call.1} parent=5 // pred_fallthru
        _
      %p2768 = scmp.le.s32.totalorder 2, %s28
      // Predicated region
      $region85: #{tpu_custom_call.1} parent=5 // pred_check
        %p2769 = pneg %p2768
      $region86: #{tpu_custom_call.1} parent=5 // pred_check_branch
        %2771 = sbr.rel (%p2769) target = $region88
      $region87: #{tpu_custom_call.1} parent=5 // pred_region
        %s2772 = ssub.s32 %s28, 2
        // Predicated region
        $region89: #{tpu_custom_call.1} parent=87 // pred_check
          %p2773 = pneg %p366
        $region90: #{tpu_custom_call.1} parent=87 // pred_check_branch
          %2775 = sbr.rel (%p2773) target = $region92
        $region91: #{tpu_custom_call.1} parent=87 // pred_region
          %s2776 = sand.u32 %s351, 1
          %s2777 = scalar_lea.sflag [#allocation3], %s2776
          %s2778 = sand.u32 %s351, 1
          %s2779 = smul.addr %s2778, 32
          %s2780 = scalar_lea.vmem [#allocation2], %s2779
          %2782 = dma.done %s2777, 512
        $region92: #{tpu_custom_call.1} parent=87 // pred_fallthru
          _
        // Predicated region
        $region93: #{tpu_custom_call.1} parent=87 // pred_check
          %p2783 = pneg %p392
        $region94: #{tpu_custom_call.1} parent=87 // pred_check_branch
          %2785 = sbr.rel (%p2783) target = $region96
        $region95: #{tpu_custom_call.1} parent=87 // pred_region
          %s2786 = sand.u32 %s377, 1
          %s2787 = scalar_lea.sflag [#allocation5], %s2786
          %s2788 = sand.u32 %s377, 1
          %s2789 = smul.addr %s2788, 8
          %s2790 = scalar_lea.vmem [#allocation4], %s2789
          %2792 = dma.done %s2787, 128
        $region96: #{tpu_custom_call.1} parent=87 // pred_fallthru
          _
      $region88: #{tpu_custom_call.1} parent=5 // pred_fallthru
        _
    $region6: #{tpu_custom_call.1} parent=1 // loop_footer
      %s32 = sadd.s32 1, %s28
    $region7: #{tpu_custom_call.1} parent=1 // loop_footer_branch
      %27 = sbr.rel target = $region3
    $region8: #{tpu_custom_call.1} parent=1 // loop_exit
      _
    %2793 = vsyncpa [#allocation3], 1
    %s2794 = scalar_lea.sflag [#allocation3], 1
    %2795 = vsyncpa %s2794, 1
    %2796 = vsyncpa [#allocation5], 1
    %s2797 = scalar_lea.sflag [#allocation5], 1
    %2798 = vsyncpa %s2797, 1

// kernel: tpu_custom_call.1
$region0: #{tpu_custom_call.1}
  #allocation0 [shape = 'u32[]', space=smem, size = 0x4, offset = 0x4, fixed_abs, tag = 'smem constant byte address 0x4 - core index']
  #allocation1 [shape = 'u32[72,128]{1,0:T(1,128)}', space=vmem, size = 0x9000, scoped, tag = 'internal scratch']
  %s0 = inlined_call_operand.vmem [shape: bf16[16,8,32], index: 0, kind: input, shape index: {}]
  %s1 = inlined_call_operand.vmem [shape: f32[16,1,8], index: 1, kind: input, shape index: {}]
  %s2 = inlined_call_operand.vmem [shape: f32[16,8,1], index: 2, kind: input, shape index: {}]
  %s3 = inlined_call_operand.vmem [shape: bf16[2,8,8], index: 3, kind: input, shape index: {}]
  %s4 = inlined_call_operand.vmem [shape: bf16[32,32], index: 4, kind: input, shape index: {}]
  %s5 = inlined_call_operand.vmem [shape: f32[1,32], index: 5, kind: input, shape index: {}]
  %s6 = inlined_call_operand.vmem [shape: bf16[32,32], index: 6, kind: input, shape index: {}]
  %s7 = inlined_call_operand.vmem [shape: f32[1,32], index: 7, kind: input, shape index: {}]
  %s8 = inlined_call_operand.vmem [shape: bf16[32,32], index: 8, kind: input, shape index: {}]
  %s9 = inlined_call_operand.vmem [shape: f32[1,32], index: 9, kind: input, shape index: {}]
  %s10 = inlined_call_operand.vmem [shape: bf16[32,32], index: 10, kind: input, shape index: {}]
  %s11 = inlined_call_operand.vmem [shape: f32[1,32], index: 11, kind: input, shape index: {}]
  %s12 = inlined_call_operand.vmem [shape: bf16[32,32], index: 12, kind: input, shape index: {}]
  %s13 = inlined_call_operand.vmem [shape: f32[1,32], index: 13, kind: input, shape index: {}]
  %s14 = inlined_call_operand.hbm [shape: bf16[16,8,32], index: 14, kind: output, shape index: {0}]
  %s15 = inlined_call_operand.hbm [shape: f32[16,32], index: 15, kind: output, shape index: {1}]
  %16 = xla_tuple %s14, %s15
  %s17 = sld [smem:[#allocation0]]
  $region97: #{tpu_custom_call.1} parent=0
    _
  %s19 = ssub.s32 1, %s17
  %s20 = scalar_select 0, %s19, %s17
  $region1: #{tpu_custom_call.1} parent=0
    #allocation2 [shape = 'u8[32768]{0}', space=vmem, size = 0x8000, scoped, tag = 'output window, operand 0']
    #allocation3 [shape = 's32[2]{0}', space=sflag, size = 0x8, scoped, tag = 'scoped memory for tpu_custom_call.1']
    #allocation4 [shape = 'u8[8192]{0}', space=vmem, size = 0x2000, scoped, tag = 'output window, operand 1']
    #allocation5 [shape = 's32[2]{0}', space=sflag, size = 0x8, scoped, tag = 'scoped memory for tpu_custom_call.1']
    %21 = vsyncpa [#allocation3], 0
    %s22 = scalar_lea.sflag [#allocation3], 1
    %23 = vsyncpa %s22, 0
    %24 = vsyncpa [#allocation5], 0
    %s25 = scalar_lea.sflag [#allocation5], 1
    %26 = vsyncpa %s25, 0
    loop: start=0, step=1, limit=4
    $region2: #{tpu_custom_call.1} parent=1 // loop_pre_header
      _
    $region3: #{tpu_custom_call.1} parent=1 // loop_header
      %s28 = sphi 0, %s32
      %p29 = scmp.ge.s32.totalorder %s28, 4
      %s38 = sphi 0, %s40
      %s41 = sphi 0, %s38
      %s42 = sphi 0, %s41
      %s58 = sphi 0, %s42
      %s64 = sphi 0, %s66
      %s67 = sphi 0, %s64
      %s68 = sphi 0, %s67
      %s84 = sphi 0, %s68
      %s90 = sphi 0, %s92
      %s93 = sphi 0, %s90
      %s94 = sphi 0, %s93
      %s110 = sphi 0, %s94
      %s114 = sphi 0, %s114
      %s116 = sphi 0, %s114
      %s117 = sphi 0, %s116
      %s131 = sphi 0, %s117
      %s135 = sphi 0, %s135
      %s137 = sphi 0, %s135
      %s138 = sphi 0, %s137
      %s152 = sphi 0, %s138
      %s156 = sphi 0, %s156
      %s158 = sphi 0, %s156
      %s159 = sphi 0, %s158
      %s173 = sphi 0, %s159
      %s177 = sphi 0, %s177
      %s179 = sphi 0, %s177
      %s180 = sphi 0, %s179
      %s194 = sphi 0, %s180
      %s198 = sphi 0, %s198
      %s200 = sphi 0, %s198
      %s201 = sphi 0, %s200
      %s215 = sphi 0, %s201
      %s219 = sphi 0, %s219
      %s221 = sphi 0, %s219
      %s222 = sphi 0, %s221
      %s236 = sphi 0, %s222
      %s240 = sphi 0, %s240
      %s242 = sphi 0, %s240
      %s243 = sphi 0, %s242
      %s257 = sphi 0, %s243
      %s261 = sphi 0, %s261
      %s263 = sphi 0, %s261
      %s264 = sphi 0, %s263
      %s278 = sphi 0, %s264
      %s282 = sphi 0, %s282
      %s284 = sphi 0, %s282
      %s285 = sphi 0, %s284
      %s299 = sphi 0, %s285
      %s303 = sphi 0, %s303
      %s305 = sphi 0, %s303
      %s306 = sphi 0, %s305
      %s320 = sphi 0, %s306
      %s324 = sphi 0, %s324
      %s326 = sphi 0, %s324
      %s327 = sphi 0, %s326
      %s341 = sphi 0, %s327
      %s347 = sphi 0, %s349
      %s350 = sphi 0, %s347
      %s351 = sphi 0, %s350
      %s367 = sphi 0, %s351
      %s373 = sphi 0, %s375
      %s376 = sphi 0, %s373
      %s377 = sphi 0, %s376
      %s393 = sphi 0, %s377
    $region4: #{tpu_custom_call.1} parent=1 // loop_header_branch
      %31 = sbr.rel (%p29) target = $region8
    $region5: #{tpu_custom_call.1} parent=1 // loop_body
      %s33 = ssub.s32 %s28, 1
      %s34 = ssub.s32 %s28, 2
      %s35 = sadd.s32 %s28, 1
      %s36 = ssub.s32 %s28, %s35
      %p37 = scmp.eq.s32.totalorder %s36, 0
      %s39 = sadd.s32 %s38, 1
      %s40 = scalar_select %p37, %s38, %s39
      %p43 = pneg %p37
      %p44 = scmp.eq.s32.totalorder %s28, 1
      %p45 = por %p43, %p44
      %p46 = scmp.ne.s32.totalorder %s38, %s41
      %p47 = scmp.eq.s32.totalorder %s28, 0
      %p48 = por %p46, %p47
      %p49 = scmp.ne.s32.totalorder %s38, %s41
      %p50 = scmp.eq.s32.totalorder %s33, 1
      %p51 = por %p49, %p50
      %p52 = scmp.ne.s32.totalorder %s41, %s42
      %p53 = scmp.eq.s32.totalorder %s33, 0
      %p54 = por %p52, %p53
      %p55 = scmp.ne.s32.totalorder %s41, %s42
      %p56 = scmp.eq.s32.totalorder %s34, 1
      %p57 = por %p55, %p56
      %p59 = scmp.ne.s32.totalorder %s42, %s58
      %p60 = scmp.eq.s32.totalorder %s34, 0
      %p61 = por %p59, %p60
      %s62 = ssub.s32 %s28, %s35
      %p63 = scmp.eq.s32.totalorder %s62, 0
      %s65 = sadd.s32 %s64, 1
      %s66 = scalar_select %p63, %s64, %s65
      %p69 = pneg %p63
      %p70 = scmp.eq.s32.totalorder %s28, 1
      %p71 = por %p69, %p70
      %p72 = scmp.ne.s32.totalorder %s64, %s67
      %p73 = scmp.eq.s32.totalorder %s28, 0
      %p74 = por %p72, %p73
      %p75 = scmp.ne.s32.totalorder %s64, %s67
      %p76 = scmp.eq.s32.totalorder %s33, 1
      %p77 = por %p75, %p76
      %p78 = scmp.ne.s32.totalorder %s67, %s68
      %p79 = scmp.eq.s32.totalorder %s33, 0
      %p80 = por %p78, %p79
      %p81 = scmp.ne.s32.totalorder %s67, %s68
      %p82 = scmp.eq.s32.totalorder %s34, 1
      %p83 = por %p81, %p82
      %p85 = scmp.ne.s32.totalorder %s68, %s84
      %p86 = scmp.eq.s32.totalorder %s34, 0
      %p87 = por %p85, %p86
      %s88 = ssub.s32 %s28, %s35
      %p89 = scmp.eq.s32.totalorder %s88, 0
      %s91 = sadd.s32 %s90, 1
      %s92 = scalar_select %p89, %s90, %s91
      %p95 = pneg %p89
      %p96 = scmp.eq.s32.totalorder %s28, 1
      %p97 = por %p95, %p96
      %p98 = scmp.ne.s32.totalorder %s90, %s93
      %p99 = scmp.eq.s32.totalorder %s28, 0
      %p100 = por %p98, %p99
      %p101 = scmp.ne.s32.totalorder %s90, %s93
      %p102 = scmp.eq.s32.totalorder %s33, 1
      %p103 = por %p101, %p102
      %p104 = scmp.ne.s32.totalorder %s93, %s94
      %p105 = scmp.eq.s32.totalorder %s33, 0
      %p106 = por %p104, %p105
      %p107 = scmp.ne.s32.totalorder %s93, %s94
      %p108 = scmp.eq.s32.totalorder %s34, 1
      %p109 = por %p107, %p108
      %p111 = scmp.ne.s32.totalorder %s94, %s110
      %p112 = scmp.eq.s32.totalorder %s34, 0
      %p113 = por %p111, %p112
      %s115 = sadd.s32 %s114, 1
      %p118 = scmp.eq.s32.totalorder %s28, 1
      %p119 = scmp.ne.s32.totalorder %s114, %s116
      %p120 = scmp.eq.s32.totalorder %s28, 0
      %p121 = por %p119, %p120
      %p122 = scmp.ne.s32.totalorder %s114, %s116
      %p123 = scmp.eq.s32.totalorder %s33, 1
      %p124 = por %p122, %p123
      %p125 = scmp.ne.s32.totalorder %s116, %s117
      %p126 = scmp.eq.s32.totalorder %s33, 0
      %p127 = por %p125, %p126
      %p128 = scmp.ne.s32.totalorder %s116, %s117
      %p129 = scmp.eq.s32.totalorder %s34, 1
      %p130 = por %p128, %p129
      %p132 = scmp.ne.s32.totalorder %s117, %s131
      %p133 = scmp.eq.s32.totalorder %s34, 0
      %p134 = por %p132, %p133
      %s136 = sadd.s32 %s135, 1
      %p139 = scmp.eq.s32.totalorder %s28, 1
      %p140 = scmp.ne.s32.totalorder %s135, %s137
      %p141 = scmp.eq.s32.totalorder %s28, 0
      %p142 = por %p140, %p141
      %p143 = scmp.ne.s32.totalorder %s135, %s137
      %p144 = scmp.eq.s32.totalorder %s33, 1
      %p145 = por %p143, %p144
      %p146 = scmp.ne.s32.totalorder %s137, %s138
      %p147 = scmp.eq.s32.totalorder %s33, 0
      %p148 = por %p146, %p147
      %p149 = scmp.ne.s32.totalorder %s137, %s138
      %p150 = scmp.eq.s32.totalorder %s34, 1
      %p151 = por %p149, %p150
      %p153 = scmp.ne.s32.totalorder %s138, %s152
      %p154 = scmp.eq.s32.totalorder %s34, 0
      %p155 = por %p153, %p154
      %s157 = sadd.s32 %s156, 1
      %p160 = scmp.eq.s32.totalorder %s28, 1
      %p161 = scmp.ne.s32.totalorder %s156, %s158
      %p162 = scmp.eq.s32.totalorder %s28, 0
      %p163 = por %p161, %p162
      %p164 = scmp.ne.s32.totalorder %s156, %s158
      %p165 = scmp.eq.s32.totalorder %s33, 1
      %p166 = por %p164, %p165
      %p167 = scmp.ne.s32.totalorder %s158, %s159
      %p168 = scmp.eq.s32.totalorder %s33, 0
      %p169 = por %p167, %p168
      %p170 = scmp.ne.s32.totalorder %s158, %s159
      %p171 = scmp.eq.s32.totalorder %s34, 1
      %p172 = por %p170, %p171
      %p174 = scmp.ne.s32.totalorder %s159, %s173
      %p175 = scmp.eq.s32.totalorder %s34, 0
      %p176 = por %p174, %p175
      %s178 = sadd.s32 %s177, 1
      %p181 = scmp.eq.s32.totalorder %s28, 1
      %p182 = scmp.ne.s32.totalorder %s177, %s179
      %p183 = scmp.eq.s32.totalorder %s28, 0
      %p184 = por %p182, %p183
      %p185 = scmp.ne.s32.totalorder %s177, %s179
      %p186 = scmp.eq.s32.totalorder %s33, 1
      %p187 = por %p185, %p186
      %p188 = scmp.ne.s32.totalorder %s179, %s180
      %p189 = scmp.eq.s32.totalorder %s33, 0
      %p190 = por %p188, %p189
      %p191 = scmp.ne.s32.totalorder %s179, %s180
      %p192 = scmp.eq.s32.totalorder %s34, 1
      %p193 = por %p191, %p192
      %p195 = scmp.ne.s32.totalorder %s180, %s194
      %p196 = scmp.eq.s32.totalorder %s34, 0
      %p197 = por %p195, %p196
      %s199 = sadd.s32 %s198, 1
      %p202 = scmp.eq.s32.totalorder %s28, 1
      %p203 = scmp.ne.s32.totalorder %s198, %s200
      %p204 = scmp.eq.s32.totalorder %s28, 0
      %p205 = por %p203, %p204
      %p206 = scmp.ne.s32.totalorder %s198, %s200
      %p207 = scmp.eq.s32.totalorder %s33, 1
      %p208 = por %p206, %p207
      %p209 = scmp.ne.s32.totalorder %s200, %s201
      %p210 = scmp.eq.s32.totalorder %s33, 0
      %p211 = por %p209, %p210
      %p212 = scmp.ne.s32.totalorder %s200, %s201
      %p213 = scmp.eq.s32.totalorder %s34, 1
      %p214 = por %p212, %p213
      %p216 = scmp.ne.s32.totalorder %s201, %s215
      %p217 = scmp.eq.s32.totalorder %s34, 0
      %p218 = por %p216, %p217
      %s220 = sadd.s32 %s219, 1
      %p223 = scmp.eq.s32.totalorder %s28, 1
      %p224 = scmp.ne.s32.totalorder %s219, %s221
      %p225 = scmp.eq.s32.totalorder %s28, 0
      %p226 = por %p224, %p225
      %p227 = scmp.ne.s32.totalorder %s219, %s221
      %p228 = scmp.eq.s32.totalorder %s33, 1
      %p229 = por %p227, %p228
      %p230 = scmp.ne.s32.totalorder %s221, %s222
      %p231 = scmp.eq.s32.totalorder %s33, 0
      %p232 = por %p230, %p231
      %p233 = scmp.ne.s32.totalorder %s221, %s222
      %p234 = scmp.eq.s32.totalorder %s34, 1
      %p235 = por %p233, %p234
      %p237 = scmp.ne.s32.totalorder %s222, %s236
      %p238 = scmp.eq.s32.totalorder %s34, 0
      %p239 = por %p237, %p238
      %s241 = sadd.s32 %s240, 1
      %p244 = scmp.eq.s32.totalorder %s28, 1
      %p245 = scmp.ne.s32.totalorder %s240, %s242
      %p246 = scmp.eq.s32.totalorder %s28, 0
      %p247 = por %p245, %p246
      %p248 = scmp.ne.s32.totalorder %s240, %s242
      %p249 = scmp.eq.s32.totalorder %s33, 1
      %p250 = por %p248, %p249
      %p251 = scmp.ne.s32.totalorder %s242, %s243
      %p252 = scmp.eq.s32.totalorder %s33, 0
      %p253 = por %p251, %p252
      %p254 = scmp.ne.s32.totalorder %s242, %s243
      %p255 = scmp.eq.s32.totalorder %s34, 1
      %p256 = por %p254, %p255
      %p258 = scmp.ne.s32.totalorder %s243, %s257
      %p259 = scmp.eq.s32.totalorder %s34, 0
      %p260 = por %p258, %p259
      %s262 = sadd.s32 %s261, 1
      %p265 = scmp.eq.s32.totalorder %s28, 1
      %p266 = scmp.ne.s32.totalorder %s261, %s263
      %p267 = scmp.eq.s32.totalorder %s28, 0
      %p268 = por %p266, %p267
      %p269 = scmp.ne.s32.totalorder %s261, %s263
      %p270 = scmp.eq.s32.totalorder %s33, 1
      %p271 = por %p269, %p270
      %p272 = scmp.ne.s32.totalorder %s263, %s264
      %p273 = scmp.eq.s32.totalorder %s33, 0
      %p274 = por %p272, %p273
      %p275 = scmp.ne.s32.totalorder %s263, %s264
      %p276 = scmp.eq.s32.totalorder %s34, 1
      %p277 = por %p275, %p276
      %p279 = scmp.ne.s32.totalorder %s264, %s278
      %p280 = scmp.eq.s32.totalorder %s34, 0
      %p281 = por %p279, %p280
      %s283 = sadd.s32 %s282, 1
      %p286 = scmp.eq.s32.totalorder %s28, 1
      %p287 = scmp.ne.s32.totalorder %s282, %s284
      %p288 = scmp.eq.s32.totalorder %s28, 0
      %p289 = por %p287, %p288
      %p290 = scmp.ne.s32.totalorder %s282, %s284
      %p291 = scmp.eq.s32.totalorder %s33, 1
      %p292 = por %p290, %p291
      %p293 = scmp.ne.s32.totalorder %s284, %s285
      %p294 = scmp.eq.s32.totalorder %s33, 0
      %p295 = por %p293, %p294
      %p296 = scmp.ne.s32.totalorder %s284, %s285
      %p297 = scmp.eq.s32.totalorder %s34, 1
      %p298 = por %p296, %p297
      %p300 = scmp.ne.s32.totalorder %s285, %s299
      %p301 = scmp.eq.s32.totalorder %s34, 0
      %p302 = por %p300, %p301
      %s304 = sadd.s32 %s303, 1
      %p307 = scmp.eq.s32.totalorder %s28, 1
      %p308 = scmp.ne.s32.totalorder %s303, %s305
      %p309 = scmp.eq.s32.totalorder %s28, 0
      %p310 = por %p308, %p309
      %p311 = scmp.ne.s32.totalorder %s303, %s305
      %p312 = scmp.eq.s32.totalorder %s33, 1
      %p313 = por %p311, %p312
      %p314 = scmp.ne.s32.totalorder %s305, %s306
      %p315 = scmp.eq.s32.totalorder %s33, 0
      %p316 = por %p314, %p315
      %p317 = scmp.ne.s32.totalorder %s305, %s306
      %p318 = scmp.eq.s32.totalorder %s34, 1
      %p319 = por %p317, %p318
      %p321 = scmp.ne.s32.totalorder %s306, %s320
      %p322 = scmp.eq.s32.totalorder %s34, 0
      %p323 = por %p321, %p322
      %s325 = sadd.s32 %s324, 1
      %p328 = scmp.eq.s32.totalorder %s28, 1
      %p329 = scmp.ne.s32.totalorder %s324, %s326
      %p330 = scmp.eq.s32.totalorder %s28, 0
      %p331 = por %p329, %p330
      %p332 = scmp.ne.s32.totalorder %s324, %s326
      %p333 = scmp.eq.s32.totalorder %s33, 1
      %p334 = por %p332, %p333
      %p335 = scmp.ne.s32.totalorder %s326, %s327
      %p336 = scmp.eq.s32.totalorder %s33, 0
      %p337 = por %p335, %p336
      %p338 = scmp.ne.s32.totalorder %s326, %s327
      %p339 = scmp.eq.s32.totalorder %s34, 1
      %p340 = por %p338, %p339
      %p342 = scmp.ne.s32.totalorder %s327, %s341
      %p343 = scmp.eq.s32.totalorder %s34, 0
      %p344 = por %p342, %p343
      %s345 = ssub.s32 %s28, %s35
      %p346 = scmp.eq.s32.totalorder %s345, 0
      %s348 = sadd.s32 %s347, 1
      %s349 = scalar_select %p346, %s347, %s348
      %p352 = pneg %p346
      %p353 = scmp.eq.s32.totalorder %s28, 1
      %p354 = por %p352, %p353
      %p355 = scmp.ne.s32.totalorder %s347, %s350
      %p356 = scmp.eq.s32.totalorder %s28, 0
      %p357 = por %p355, %p356
      %p358 = scmp.ne.s32.totalorder %s347, %s350
      %p359 = scmp.eq.s32.totalorder %s33, 1
      %p360 = por %p358, %p359
      %p361 = scmp.ne.s32.totalorder %s350, %s351
      %p362 = scmp.eq.s32.totalorder %s33, 0
      %p363 = por %p361, %p362
      %p364 = scmp.ne.s32.totalorder %s350, %s351
      %p365 = scmp.eq.s32.totalorder %s34, 1
      %p366 = por %p364, %p365
      %p368 = scmp.ne.s32.totalorder %s351, %s367
      %p369 = scmp.eq.s32.totalorder %s34, 0
      %p370 = por %p368, %p369
      %s371 = ssub.s32 %s28, %s35
      %p372 = scmp.eq.s32.totalorder %s371, 0
      %s374 = sadd.s32 %s373, 1
      %s375 = scalar_select %p372, %s373, %s374
      %p378 = pneg %p372
      %p379 = scmp.eq.s32.totalorder %s28, 1
      %p380 = por %p378, %p379
      %p381 = scmp.ne.s32.totalorder %s373, %s376
      %p382 = scmp.eq.s32.totalorder %s28, 0
      %p383 = por %p381, %p382
      %p384 = scmp.ne.s32.totalorder %s373, %s376
      %p385 = scmp.eq.s32.totalorder %s33, 1
      %p386 = por %p384, %p385
      %p387 = scmp.ne.s32.totalorder %s376, %s377
      %p388 = scmp.eq.s32.totalorder %s33, 0
      %p389 = por %p387, %p388
      %p390 = scmp.ne.s32.totalorder %s376, %s377
      %p391 = scmp.eq.s32.totalorder %s34, 1
      %p392 = por %p390, %p391
      %p394 = scmp.ne.s32.totalorder %s377, %s393
      %p395 = scmp.eq.s32.totalorder %s34, 0
      %p396 = por %p394, %p395
      %p397 = scmp.le.s32.totalorder 1, %s28
      %p398 = scmp.lt.s32.totalorder %s28, 3
      %p399 = pnand %p397, %p398
      %p400 = pneg %p399
      // Predicated region
      $region9: #{tpu_custom_call.1} parent=5 // pred_check
        _
      $region10: #{tpu_custom_call.1} parent=5 // pred_check_branch
        %402 = sbr.rel (%p399) target = $region12
      $region11: #{tpu_custom_call.1} parent=5 // pred_region
        %s403 = ssub.s32 %s28, 1
        // Predicated region
        $region13: #{tpu_custom_call.1} parent=11 // pred_check
          %p404 = pneg %p127
        $region14: #{tpu_custom_call.1} parent=11 // pred_check_branch
          %406 = sbr.rel (%p404) target = $region16
        $region15: #{tpu_custom_call.1} parent=11 // pred_region
          _
        $region16: #{tpu_custom_call.1} parent=11 // pred_fallthru
          _
        // Predicated region
        $region17: #{tpu_custom_call.1} parent=11 // pred_check
          %p407 = pneg %p148
        $region18: #{tpu_custom_call.1} parent=11 // pred_check_branch
          %409 = sbr.rel (%p407) target = $region20
        $region19: #{tpu_custom_call.1} parent=11 // pred_region
          _
        $region20: #{tpu_custom_call.1} parent=11 // pred_fallthru
          _
        // Predicated region
        $region21: #{tpu_custom_call.1} parent=11 // pred_check
          %p410 = pneg %p169
        $region22: #{tpu_custom_call.1} parent=11 // pred_check_branch
          %412 = sbr.rel (%p410) target = $region24
        $region23: #{tpu_custom_call.1} parent=11 // pred_region
          _
        $region24: #{tpu_custom_call.1} parent=11 // pred_fallthru
          _
        // Predicated region
        $region25: #{tpu_custom_call.1} parent=11 // pred_check
          %p413 = pneg %p190
        $region26: #{tpu_custom_call.1} parent=11 // pred_check_branch
          %415 = sbr.rel (%p413) target = $region28
        $region27: #{tpu_custom_call.1} parent=11 // pred_region
          _
        $region28: #{tpu_custom_call.1} parent=11 // pred_fallthru
          _
        // Predicated region
        $region29: #{tpu_custom_call.1} parent=11 // pred_check
          %p416 = pneg %p211
        $region30: #{tpu_custom_call.1} parent=11 // pred_check_branch
          %418 = sbr.rel (%p416) target = $region32
        $region31: #{tpu_custom_call.1} parent=11 // pred_region
          _
        $region32: #{tpu_custom_call.1} parent=11 // pred_fallthru
          _
        // Predicated region
        $region33: #{tpu_custom_call.1} parent=11 // pred_check
          %p419 = pneg %p232
        $region34: #{tpu_custom_call.1} parent=11 // pred_check_branch
          %421 = sbr.rel (%p419) target = $region36
        $region35: #{tpu_custom_call.1} parent=11 // pred_region
          _
        $region36: #{tpu_custom_call.1} parent=11 // pred_fallthru
          _
        // Predicated region
        $region37: #{tpu_custom_call.1} parent=11 // pred_check
          %p422 = pneg %p253
        $region38: #{tpu_custom_call.1} parent=11 // pred_check_branch
          %424 = sbr.rel (%p422) target = $region40
        $region39: #{tpu_custom_call.1} parent=11 // pred_region
          _
        $region40: #{tpu_custom_call.1} parent=11 // pred_fallthru
          _
        // Predicated region
        $region41: #{tpu_custom_call.1} parent=11 // pred_check
          %p425 = pneg %p274
        $region42: #{tpu_custom_call.1} parent=11 // pred_check_branch
          %427 = sbr.rel (%p425) target = $region44
        $region43: #{tpu_custom_call.1} parent=11 // pred_region
          _
        $region44: #{tpu_custom_call.1} parent=11 // pred_fallthru
          _
        // Predicated region
        $region45: #{tpu_custom_call.1} parent=11 // pred_check
          %p428 = pneg %p295
        $region46: #{tpu_custom_call.1} parent=11 // pred_check_branch
          %430 = sbr.rel (%p428) target = $region48
        $region47: #{tpu_custom_call.1} parent=11 // pred_region
          _
        $region48: #{tpu_custom_call.1} parent=11 // pred_fallthru
          _
        // Predicated region
        $region49: #{tpu_custom_call.1} parent=11 // pred_check
          %p431 = pneg %p316
        $region50: #{tpu_custom_call.1} parent=11 // pred_check_branch
          %433 = sbr.rel (%p431) target = $region52
        $region51: #{tpu_custom_call.1} parent=11 // pred_region
          _
        $region52: #{tpu_custom_call.1} parent=11 // pred_fallthru
          _
        // Predicated region
        $region53: #{tpu_custom_call.1} parent=11 // pred_check
          %p434 = pneg %p337
        $region54: #{tpu_custom_call.1} parent=11 // pred_check_branch
          %436 = sbr.rel (%p434) target = $region56
        $region55: #{tpu_custom_call.1} parent=11 // pred_region
          _
        $region56: #{tpu_custom_call.1} parent=11 // pred_fallthru
          _
      $region12: #{tpu_custom_call.1} parent=5 // pred_fallthru
        _
      %p437 = scmp.lt.s32.totalorder %s28, 2
      // Predicated region
      $region57: #{tpu_custom_call.1} parent=5 // pred_check
        %p438 = pneg %p437
      $region58: #{tpu_custom_call.1} parent=5 // pred_check_branch
        %440 = sbr.rel (%p438) target = $region60
      $region59: #{tpu_custom_call.1} parent=5 // pred_region
        // Predicated region
        $region61: #{tpu_custom_call.1} parent=59 // pred_check
          %p441 = pneg %p48
        $region62: #{tpu_custom_call.1} parent=59 // pred_check_branch
          %443 = sbr.rel (%p441) target = $region64
        $region63: #{tpu_custom_call.1} parent=59 // pred_region
          %s444 = smul.u32 8, %s28
          %p445 = scmp.lt.s32.totalorder %s444, 15
          %s446 = scalar_select %p445, %s444, 15
          %s447 = smul.addr %s446, 4
          %s448 = scalar_lea.vmem %s0, %s447
          %s449 = smul.u32 8, %s28
        $region64: #{tpu_custom_call.1} parent=59 // pred_fallthru
          _
        // Predicated region
        $region65: #{tpu_custom_call.1} parent=59 // pred_check
          %p450 = pneg %p74
        $region66: #{tpu_custom_call.1} parent=59 // pred_check_branch
          %452 = sbr.rel (%p450) target = $region68
        $region67: #{tpu_custom_call.1} parent=59 // pred_region
          %s453 = smul.u32 8, %s28
          %p454 = scmp.lt.s32.totalorder %s453, 15
          %s455 = scalar_select %p454, %s453, 15
          %s456 = scalar_lea.vmem %s1, %s455
          %s457 = smul.u32 8, %s28
        $region68: #{tpu_custom_call.1} parent=59 // pred_fallthru
          _
        // Predicated region
        $region69: #{tpu_custom_call.1} parent=59 // pred_check
          %p458 = pneg %p100
        $region70: #{tpu_custom_call.1} parent=59 // pred_check_branch
          %460 = sbr.rel (%p458) target = $region72
        $region71: #{tpu_custom_call.1} parent=59 // pred_region
          %s461 = smul.u32 8, %s28
          %p462 = scmp.lt.s32.totalorder %s461, 15
          %s463 = scalar_select %p462, %s461, 15
          %s464 = smul.addr %s463, 8
          %s465 = scalar_lea.vmem %s2, %s464
          %s466 = smul.u32 8, %s28
        $region72: #{tpu_custom_call.1} parent=59 // pred_fallthru
          _
      $region60: #{tpu_custom_call.1} parent=5 // pred_fallthru
        _
      %p467 = scmp.le.s32.totalorder 1, %s28
      %p468 = scmp.lt.s32.totalorder %s28, 3
      %p469 = pnand %p467, %p468
      %p470 = pneg %p469
      // Predicated region
      $region73: #{tpu_custom_call.1} parent=5 // pred_check
        _
      $region74: #{tpu_custom_call.1} parent=5 // pred_check_branch
        %472 = sbr.rel (%p469) target = $region76
      $region75: #{tpu_custom_call.1} parent=5 // pred_region
        %s473 = ssub.s32 %s28, 1
        %s474 = smul.u32 8, %s33
        %p475 = scmp.lt.s32.totalorder %s474, 15
        %s476 = scalar_select %p475, %s474, 15
        %s477 = smul.addr %s476, 4
        %s478 = scalar_lea.vmem %s0, %s477
        %p479 = pneg %p54
        %p480 = pneg %p51
        %s481 = smul.u32 8, %s33
        %p482 = scmp.lt.s32.totalorder %s481, 15
        %s483 = scalar_select %p482, %s481, 15
        %s484 = scalar_lea.vmem %s1, %s483
        %p485 = pneg %p80
        %p486 = pneg %p77
        %s487 = smul.u32 8, %s33
        %p488 = scmp.lt.s32.totalorder %s487, 15
        %s489 = scalar_select %p488, %s487, 15
        %s490 = smul.addr %s489, 8
        %s491 = scalar_lea.vmem %s2, %s490
        %p492 = pneg %p106
        %p493 = pneg %p103
        %p494 = pneg %p127
        %p495 = pneg %p124
        %p496 = pneg %p148
        %p497 = pneg %p145
        %p498 = pneg %p169
        %p499 = pneg %p166
        %p500 = pneg %p190
        %p501 = pneg %p187
        %p502 = pneg %p211
        %p503 = pneg %p208
        %p504 = pneg %p232
        %p505 = pneg %p229
        %p506 = pneg %p253
        %p507 = pneg %p250
        %p508 = pneg %p274
        %p509 = pneg %p271
        %p510 = pneg %p295
        %p511 = pneg %p292
        %p512 = pneg %p316
        %p513 = pneg %p313
        %p514 = pneg %p337
        %p515 = pneg %p334
        %p516 = pneg %p363
        %p517 = pneg %p360
        %s518 = sand.u32 %s350, 1
        %s519 = scalar_lea.sflag [#allocation3], %s518
        %s520 = sand.u32 %s350, 1
        %s521 = smul.addr %s520, 32
        %s522 = scalar_lea.vmem [#allocation2], %s521
        %p523 = pneg %p389
        %p524 = pneg %p386
        %s525 = sand.u32 %s376, 1
        %s526 = scalar_lea.sflag [#allocation5], %s525
        %s527 = sand.u32 %s376, 1
        %s528 = smul.addr %s527, 8
        %s529 = scalar_lea.vmem [#allocation4], %s528
        %s530 = smul.u32 8, %s33
        %p531 = scmp.lt.s32.totalorder %s530, 15
        %s532 = scalar_select %p531, %s530, 15
        %s533 = smul.addr %s532, 4
        %s534 = scalar_lea.vmem %s0, %s533
        %s535 = smul.u32 8, %s33
        %s536 = smul.u32 8, %s33
        %p537 = scmp.lt.s32.totalorder %s536, 15
        %s538 = scalar_select %p537, %s536, 15
        %s539 = scalar_lea.vmem %s1, %s538
        %s540 = smul.u32 8, %s33
        %s541 = smul.u32 8, %s33
        %p542 = scmp.lt.s32.totalorder %s541, 15
        %s543 = scalar_select %p542, %s541, 15
        %s544 = smul.addr %s543, 8
        %s545 = scalar_lea.vmem %s2, %s544
        %s546 = smul.u32 8, %s33
        %s547 = smul.u32 8, %s33
        %v549 = vld [vmem:[%s534] sm:$0xf]
        %v550 = vld [vmem:[%s534 + $0x4] sm:$0xf]
        %v551 = vld [vmem:[%s534 + $0x8] sm:$0xf]
        %v552 = vld [vmem:[%s534 + $0xc] sm:$0xf]
        %v553 = vld [vmem:[%s534 + $0x10] sm:$0xf]
        %v554 = vld [vmem:[%s534 + $0x14] sm:$0xf]
        %v555 = vld [vmem:[%s534 + $0x18] sm:$0xf]
        %v556 = vld [vmem:[%s534 + $0x1c] sm:$0xf]
        %v557 = vld [vmem:[%s539] sm:$0x1]
        %v558 = vld [vmem:[%s539 + $0x1] sm:$0x1]
        %v559 = vld [vmem:[%s539 + $0x2] sm:$0x1]
        %v560 = vld [vmem:[%s539 + $0x3] sm:$0x1]
        %v561 = vld [vmem:[%s539 + $0x4] sm:$0x1]
        %v562 = vld [vmem:[%s539 + $0x5] sm:$0x1]
        %v563 = vld [vmem:[%s539 + $0x6] sm:$0x1]
        %v564 = vld [vmem:[%s539 + $0x7] sm:$0x1]
        %v565 = vsub.f32 1.0, %v557
        %v566 = vsub.f32 1.0, %v558
        %v567 = vsub.f32 1.0, %v559
        %v568 = vsub.f32 1.0, %v560
        %v569 = vsub.f32 1.0, %v561
        %v570 = vsub.f32 1.0, %v562
        %v571 = vsub.f32 1.0, %v563
        %v572 = vsub.f32 1.0, %v564
        %v573 = vmul.f32 %v565, -10000.0
        %v574 = vmul.f32 %v566, -10000.0
        %v575 = vmul.f32 %v567, -10000.0
        %v576 = vmul.f32 %v568, -10000.0
        %v577 = vmul.f32 %v569, -10000.0
        %v578 = vmul.f32 %v570, -10000.0
        %v579 = vmul.f32 %v571, -10000.0
        %v580 = vmul.f32 %v572, -10000.0
        %v581 = vld [vmem:[%s3] sm:$0xf]
        %v582 = vld [vmem:[%s3 + $0x4] sm:$0xf]
        %v583 = vld [vmem:[%s4] sm:$0xf]
        %v584 = vld [vmem:[%s4 + $0x4] sm:$0xf]
        %v585 = vld [vmem:[%s4 + $0x8] sm:$0xf]
        %v586 = vld [vmem:[%s4 + $0xc] sm:$0xf]
        %v587 = vld [vmem:[%s5] sm:$0x1]
        %v588 = vld [vmem:[%s6] sm:$0xf]
        %v589 = vld [vmem:[%s6 + $0x4] sm:$0xf]
        %v590 = vld [vmem:[%s6 + $0x8] sm:$0xf]
        %v591 = vld [vmem:[%s6 + $0xc] sm:$0xf]
        %v592 = vld [vmem:[%s7] sm:$0x1]
        %v593 = vld [vmem:[%s8] sm:$0xf]
        %v594 = vld [vmem:[%s8 + $0x4] sm:$0xf]
        %v595 = vld [vmem:[%s8 + $0x8] sm:$0xf]
        %v596 = vld [vmem:[%s8 + $0xc] sm:$0xf]
        %v597 = vld [vmem:[%s9] sm:$0x1]
        %v598 = vld [vmem:[%s10] sm:$0xf]
        %v599 = vld [vmem:[%s10 + $0x4] sm:$0xf]
        %v600 = vld [vmem:[%s10 + $0x8] sm:$0xf]
        %v601 = vld [vmem:[%s10 + $0xc] sm:$0xf]
        %v602 = vld [vmem:[%s11] sm:$0x1]
        %v604 = vperm.slane %v587, 0
        %v614 = vunpack.c.l.b16 %v549
        %v615 = vunpack.c.l.b16 %v550
        %v616 = vunpack.c.l.b16 %v551
        %v617 = vunpack.c.l.b16 %v552
        %v618 = vunpack.c.l.b16 %v553
        %v619 = vunpack.c.l.b16 %v554
        %v620 = vunpack.c.l.b16 %v555
        %v621 = vunpack.c.l.b16 %v556
        %v622 = vpack.c.b16 %v615, %v614
        %v623 = vpack.c.b16 %v617, %v616
        %v624 = vpack.c.b16 %v619, %v618
        %v625 = vpack.c.b16 %v621, %v620
        %v630 = vunpack.c.l.b16 %v583
        %v631 = vunpack.c.l.b16 %v584
        %v632 = vunpack.c.l.b16 %v585
        %v633 = vunpack.c.l.b16 %v586
        %v634 = vpack.c.b16 %v631, %v630
        %v635 = vpack.c.b16 %v633, %v632
        %vm638 = vcmask 261120
        %v640 = vsel %vm638, %v622, 0
        %v643 = vsel %vm638, %v623, 0
        %v646 = vsel %vm638, %v624, 0
        %v649 = vsel %vm638, %v625, 0
        %651 = vmatpush.bf16.msra.mxu0 0
        %652 = vmatpush.bf16.msra.mxu0 0
        %653 = vmatpush.bf16.msra.mxu0 0
        %654 = vmatpush.bf16.msra.mxu0 0
        %655 = vmatpush.bf16.msra.mxu0 0
        %656 = vmatpush.bf16.msra.mxu0 0
        %657 = vmatpush.bf16.msra.mxu0 %v635
        %658 = vmatpush.bf16.msra.mxu0 %v634
        %659 = vmatmul.bf16.gmra.mxu0 %v640
        %v660 = vpop.f32.mrf.mxu0
        %v661 = vadd.f32 %v604, %v660
        %v662 = vpop.f32.mrf.mxu0
        %v663 = vadd.f32 %v604, %v662
        %664 = vmatmul.bf16.gmra.mxu0 %v643
        %v665 = vpop.f32.mrf.mxu0
        %v666 = vadd.f32 %v604, %v665
        %v667 = vpop.f32.mrf.mxu0
        %v668 = vadd.f32 %v604, %v667
        %669 = vmatmul.bf16.gmra.mxu0 %v646
        %v670 = vpop.f32.mrf.mxu0
        %v671 = vadd.f32 %v604, %v670
        %v672 = vpop.f32.mrf.mxu0
        %v673 = vadd.f32 %v604, %v672
        %674 = vmatmul.bf16.gmra.mxu0 %v649
        %v675 = vpop.f32.mrf.mxu0
        %v676 = vadd.f32 %v604, %v675
        %v677 = vpop.f32.mrf.mxu0
        %v678 = vadd.f32 %v604, %v677
        %679 = vdwg.mxu0
        %v680 = vpack.c.bf16 %v661, %v661
        %v681 = vpack.c.bf16 %v663, %v663
        %v682 = vpack.c.bf16 %v666, %v666
        %v683 = vpack.c.bf16 %v668, %v668
        %v684 = vpack.c.bf16 %v671, %v671
        %v685 = vpack.c.bf16 %v673, %v673
        %v686 = vpack.c.bf16 %v676, %v676
        %v687 = vpack.c.bf16 %v678, %v678
        %v689 = vperm.slane %v592, 0
        %v695 = vunpack.c.l.b16 %v588
        %v696 = vunpack.c.l.b16 %v589
        %v697 = vunpack.c.l.b16 %v590
        %v698 = vunpack.c.l.b16 %v591
        %v699 = vpack.c.b16 %v696, %v695
        %v700 = vpack.c.b16 %v698, %v697
        %703 = vmatpush.bf16.msra.mxu0 0
        %704 = vmatpush.bf16.msra.mxu0 0
        %705 = vmatpush.bf16.msra.mxu0 0
        %706 = vmatpush.bf16.msra.mxu0 0
        %707 = vmatpush.bf16.msra.mxu0 0
        %708 = vmatpush.bf16.msra.mxu0 0
        %709 = vmatpush.bf16.msra.mxu0 %v700
        %710 = vmatpush.bf16.msra.mxu0 %v699
        %711 = vmatmul.bf16.gmra.mxu0 %v640
        %v712 = vpop.f32.mrf.mxu0
        %v713 = vadd.f32 %v689, %v712
        %v714 = vpop.f32.mrf.mxu0
        %v715 = vadd.f32 %v689, %v714
        %716 = vmatmul.bf16.gmra.mxu0 %v643
        %v717 = vpop.f32.mrf.mxu0
        %v718 = vadd.f32 %v689, %v717
        %v719 = vpop.f32.mrf.mxu0
        %v720 = vadd.f32 %v689, %v719
        %721 = vmatmul.bf16.gmra.mxu0 %v646
        %v722 = vpop.f32.mrf.mxu0
        %v723 = vadd.f32 %v689, %v722
        %v724 = vpop.f32.mrf.mxu0
        %v725 = vadd.f32 %v689, %v724
        %726 = vmatmul.bf16.gmra.mxu0 %v649
        %v727 = vpop.f32.mrf.mxu0
        %v728 = vadd.f32 %v689, %v727
        %v729 = vpop.f32.mrf.mxu0
        %v730 = vadd.f32 %v689, %v729
        %731 = vdwg.mxu0
        %v732 = vpack.c.bf16 %v713, %v713
        %v733 = vpack.c.bf16 %v715, %v715
        %v734 = vpack.c.bf16 %v718, %v718
        %v735 = vpack.c.bf16 %v720, %v720
        %v736 = vpack.c.bf16 %v723, %v723
        %v737 = vpack.c.bf16 %v725, %v725
        %v738 = vpack.c.bf16 %v728, %v728
        %v739 = vpack.c.bf16 %v730, %v730
        %v741 = vperm.slane %v597, 0
        %v747 = vunpack.c.l.b16 %v593
        %v748 = vunpack.c.l.b16 %v594
        %v749 = vunpack.c.l.b16 %v595
        %v750 = vunpack.c.l.b16 %v596
        %v751 = vpack.c.b16 %v748, %v747
        %v752 = vpack.c.b16 %v750, %v749
        %755 = vmatpush.bf16.msra.mxu0 0
        %756 = vmatpush.bf16.msra.mxu0 0
        %757 = vmatpush.bf16.msra.mxu0 0
        %758 = vmatpush.bf16.msra.mxu0 0
        %759 = vmatpush.bf16.msra.mxu0 0
        %760 = vmatpush.bf16.msra.mxu0 0
        %761 = vmatpush.bf16.msra.mxu0 %v752
        %762 = vmatpush.bf16.msra.mxu0 %v751
        %763 = vmatmul.bf16.gmra.mxu0 %v640
        %v764 = vpop.f32.mrf.mxu0
        %v765 = vadd.f32 %v741, %v764
        %v766 = vpop.f32.mrf.mxu0
        %v767 = vadd.f32 %v741, %v766
        %768 = vmatmul.bf16.gmra.mxu0 %v643
        %v769 = vpop.f32.mrf.mxu0
        %v770 = vadd.f32 %v741, %v769
        %v771 = vpop.f32.mrf.mxu0
        %v772 = vadd.f32 %v741, %v771
        %773 = vmatmul.bf16.gmra.mxu0 %v646
        %v774 = vpop.f32.mrf.mxu0
        %v775 = vadd.f32 %v741, %v774
        %v776 = vpop.f32.mrf.mxu0
        %v777 = vadd.f32 %v741, %v776
        %778 = vmatmul.bf16.gmra.mxu0 %v649
        %v779 = vpop.f32.mrf.mxu0
        %v780 = vadd.f32 %v741, %v779
        %v781 = vpop.f32.mrf.mxu0
        %v782 = vadd.f32 %v741, %v781
        %783 = vdwg.mxu0
        %v784 = vpack.c.bf16 %v765, %v765
        %v785 = vpack.c.bf16 %v767, %v767
        %v786 = vpack.c.bf16 %v770, %v770
        %v787 = vpack.c.bf16 %v772, %v772
        %v788 = vpack.c.bf16 %v775, %v775
        %v789 = vpack.c.bf16 %v777, %v777
        %v790 = vpack.c.bf16 %v780, %v780
        %v791 = vpack.c.bf16 %v782, %v782
        %vm792 = vcmask 130048
        %v794 = vsel %vm792, %v680, 0
        %v797 = vsel %vm792, %v732, 0
        %799 = vmatpush.bf16.xpose.msra.mxu0 0
        %800 = vmatpush.bf16.xpose.msra.mxu0 0
        %801 = vmatpush.bf16.xpose.msra.mxu0 0
        %802 = vmatpush.bf16.xpose.msra.mxu0 0
        %803 = vmatpush.bf16.xpose.msra.mxu0 0
        %804 = vmatpush.bf16.xpose.msra.mxu0 0
        %805 = vmatpush.bf16.xpose.msra.mxu0 0
        %806 = vmatpush.bf16.xpose.msra.mxu0 %v797
        %807 = vmatmul.bf16.gmra.mxu0 %v794
        %v808 = vpop.f32.mrf.mxu0
        %v809 = vadd.f32 0.0, %v808
        %v810 = vpop.f32.mrf.mxu0
        %811 = vdwg.mxu0
        %v813 = vsel %vm792, %v681, 0
        %v816 = vsel %vm792, %v733, 0
        %818 = vmatpush.bf16.xpose.msra.mxu0 0
        %819 = vmatpush.bf16.xpose.msra.mxu0 0
        %820 = vmatpush.bf16.xpose.msra.mxu0 0
        %821 = vmatpush.bf16.xpose.msra.mxu0 0
        %822 = vmatpush.bf16.xpose.msra.mxu0 0
        %823 = vmatpush.bf16.xpose.msra.mxu0 0
        %824 = vmatpush.bf16.xpose.msra.mxu0 0
        %825 = vmatpush.bf16.xpose.msra.mxu0 %v816
        %826 = vmatmul.bf16.gmra.mxu0 %v813
        %v827 = vpop.f32.mrf.mxu0
        %v828 = vadd.f32 0.0, %v827
        %v829 = vpop.f32.mrf.mxu0
        %830 = vdwg.mxu0
        %v832 = vsel %vm792, %v682, 0
        %v835 = vsel %vm792, %v734, 0
        %837 = vmatpush.bf16.xpose.msra.mxu0 0
        %838 = vmatpush.bf16.xpose.msra.mxu0 0
        %839 = vmatpush.bf16.xpose.msra.mxu0 0
        %840 = vmatpush.bf16.xpose.msra.mxu0 0
        %841 = vmatpush.bf16.xpose.msra.mxu0 0
        %842 = vmatpush.bf16.xpose.msra.mxu0 0
        %843 = vmatpush.bf16.xpose.msra.mxu0 0
        %844 = vmatpush.bf16.xpose.msra.mxu0 %v835
        %845 = vmatmul.bf16.gmra.mxu0 %v832
        %v846 = vpop.f32.mrf.mxu0
        %v847 = vadd.f32 0.0, %v846
        %v848 = vpop.f32.mrf.mxu0
        %849 = vdwg.mxu0
        %v851 = vsel %vm792, %v683, 0
        %v854 = vsel %vm792, %v735, 0
        %856 = vmatpush.bf16.xpose.msra.mxu0 0
        %857 = vmatpush.bf16.xpose.msra.mxu0 0
        %858 = vmatpush.bf16.xpose.msra.mxu0 0
        %859 = vmatpush.bf16.xpose.msra.mxu0 0
        %860 = vmatpush.bf16.xpose.msra.mxu0 0
        %861 = vmatpush.bf16.xpose.msra.mxu0 0
        %862 = vmatpush.bf16.xpose.msra.mxu0 0
        %863 = vmatpush.bf16.xpose.msra.mxu0 %v854
        %864 = vmatmul.bf16.gmra.mxu0 %v851
        %v865 = vpop.f32.mrf.mxu0
        %v866 = vadd.f32 0.0, %v865
        %v867 = vpop.f32.mrf.mxu0
        %868 = vdwg.mxu0
        %v870 = vsel %vm792, %v684, 0
        %v873 = vsel %vm792, %v736, 0
        %875 = vmatpush.bf16.xpose.msra.mxu0 0
        %876 = vmatpush.bf16.xpose.msra.mxu0 0
        %877 = vmatpush.bf16.xpose.msra.mxu0 0
        %878 = vmatpush.bf16.xpose.msra.mxu0 0
        %879 = vmatpush.bf16.xpose.msra.mxu0 0
        %880 = vmatpush.bf16.xpose.msra.mxu0 0
        %881 = vmatpush.bf16.xpose.msra.mxu0 0
        %882 = vmatpush.bf16.xpose.msra.mxu0 %v873
        %883 = vmatmul.bf16.gmra.mxu0 %v870
        %v884 = vpop.f32.mrf.mxu0
        %v885 = vadd.f32 0.0, %v884
        %v886 = vpop.f32.mrf.mxu0
        %887 = vdwg.mxu0
        %v889 = vsel %vm792, %v685, 0
        %v892 = vsel %vm792, %v737, 0
        %894 = vmatpush.bf16.xpose.msra.mxu0 0
        %895 = vmatpush.bf16.xpose.msra.mxu0 0
        %896 = vmatpush.bf16.xpose.msra.mxu0 0
        %897 = vmatpush.bf16.xpose.msra.mxu0 0
        %898 = vmatpush.bf16.xpose.msra.mxu0 0
        %899 = vmatpush.bf16.xpose.msra.mxu0 0
        %900 = vmatpush.bf16.xpose.msra.mxu0 0
        %901 = vmatpush.bf16.xpose.msra.mxu0 %v892
        %902 = vmatmul.bf16.gmra.mxu0 %v889
        %v903 = vpop.f32.mrf.mxu0
        %v904 = vadd.f32 0.0, %v903
        %v905 = vpop.f32.mrf.mxu0
        %906 = vdwg.mxu0
        %v908 = vsel %vm792, %v686, 0
        %v911 = vsel %vm792, %v738, 0
        %913 = vmatpush.bf16.xpose.msra.mxu0 0
        %914 = vmatpush.bf16.xpose.msra.mxu0 0
        %915 = vmatpush.bf16.xpose.msra.mxu0 0
        %916 = vmatpush.bf16.xpose.msra.mxu0 0
        %917 = vmatpush.bf16.xpose.msra.mxu0 0
        %918 = vmatpush.bf16.xpose.msra.mxu0 0
        %919 = vmatpush.bf16.xpose.msra.mxu0 0
        %920 = vmatpush.bf16.xpose.msra.mxu0 %v911
        %921 = vmatmul.bf16.gmra.mxu0 %v908
        %v922 = vpop.f32.mrf.mxu0
        %v923 = vadd.f32 0.0, %v922
        %v924 = vpop.f32.mrf.mxu0
        %925 = vdwg.mxu0
        %v927 = vsel %vm792, %v687, 0
        %v930 = vsel %vm792, %v739, 0
        %932 = vmatpush.bf16.xpose.msra.mxu0 0
        %933 = vmatpush.bf16.xpose.msra.mxu0 0
        %934 = vmatpush.bf16.xpose.msra.mxu0 0
        %935 = vmatpush.bf16.xpose.msra.mxu0 0
        %936 = vmatpush.bf16.xpose.msra.mxu0 0
        %937 = vmatpush.bf16.xpose.msra.mxu0 0
        %938 = vmatpush.bf16.xpose.msra.mxu0 0
        %939 = vmatpush.bf16.xpose.msra.mxu0 %v930
        %940 = vmatmul.bf16.gmra.mxu0 %v927
        %v941 = vpop.f32.mrf.mxu0
        %v942 = vadd.f32 0.0, %v941
        %v943 = vpop.f32.mrf.mxu0
        %944 = vdwg.mxu0
        %v945 = vmul.f32 %v809, 0.25
        %v946 = vmul.f32 %v828, 0.25
        %v947 = vmul.f32 %v847, 0.25
        %v948 = vmul.f32 %v866, 0.25
        %v949 = vmul.f32 %v885, 0.25
        %v950 = vmul.f32 %v904, 0.25
        %v951 = vmul.f32 %v923, 0.25
        %v952 = vmul.f32 %v942, 0.25
        %v961 = vperm.slane %v573, 0
        %v962 = vperm.slane %v574, 0
        %v963 = vperm.slane %v575, 0
        %v964 = vperm.slane %v576, 0
        %v965 = vperm.slane %v577, 0
        %v966 = vperm.slane %v578, 0
        %v967 = vperm.slane %v579, 0
        %v968 = vperm.slane %v580, 0
        %v977 = vadd.f32 %v945, %v961
        %v978 = vadd.f32 %v946, %v962
        %v979 = vadd.f32 %v947, %v963
        %v980 = vadd.f32 %v948, %v964
        %v981 = vadd.f32 %v949, %v965
        %v982 = vadd.f32 %v950, %v966
        %v983 = vadd.f32 %v951, %v967
        %v984 = vadd.f32 %v952, %v968
        %v985 = vunpack.c.l.bf16 %v581
        %v986 = vadd.f32 %v977, %v985
        %v987 = vadd.f32 %v978, %v985
        %v988 = vadd.f32 %v979, %v985
        %v989 = vadd.f32 %v980, %v985
        %v990 = vadd.f32 %v981, %v985
        %v991 = vadd.f32 %v982, %v985
        %v992 = vadd.f32 %v983, %v985
        %v993 = vadd.f32 %v984, %v985
        %vm994 = vcmask 64512
        %v995 = vsel %vm994, %v986, -inf
        %996 = vmax.xlane.f32.xlu0 %v995
        %v997 = vpop.xlane.xlu0 %996
        %v998 = vsel %vm994, %v987, -inf
        %999 = vmax.xlane.f32.xlu0 %v998
        %v1000 = vpop.xlane.xlu0 %999
        %v1001 = vsel %vm994, %v988, -inf
        %1002 = vmax.xlane.f32.xlu0 %v1001
        %v1003 = vpop.xlane.xlu0 %1002
        %v1004 = vsel %vm994, %v989, -inf
        %1005 = vmax.xlane.f32.xlu0 %v1004
        %v1006 = vpop.xlane.xlu0 %1005
        %v1007 = vsel %vm994, %v990, -inf
        %1008 = vmax.xlane.f32.xlu0 %v1007
        %v1009 = vpop.xlane.xlu0 %1008
        %v1010 = vsel %vm994, %v991, -inf
        %1011 = vmax.xlane.f32.xlu0 %v1010
        %v1012 = vpop.xlane.xlu0 %1011
        %v1013 = vsel %vm994, %v992, -inf
        %1014 = vmax.xlane.f32.xlu0 %v1013
        %v1015 = vpop.xlane.xlu0 %1014
        %v1016 = vsel %vm994, %v993, -inf
        %1017 = vmax.xlane.f32.xlu0 %v1016
        %v1018 = vpop.xlane.xlu0 %1017
        %v1019 = vsub.f32 %v986, %v997
        %v1020 = vsub.f32 %v987, %v1000
        %v1021 = vsub.f32 %v988, %v1003
        %v1022 = vsub.f32 %v989, %v1006
        %v1023 = vsub.f32 %v990, %v1009
        %v1024 = vsub.f32 %v991, %v1012
        %v1025 = vsub.f32 %v992, %v1015
        %v1026 = vsub.f32 %v993, %v1018
        %v1027 = vmul.f32 %v1019, 1.442695
        %v1028 = vpow.pop %v1027
        %v1029 = vmul.f32 %v1020, 1.442695
        %v1030 = vpow.pop %v1029
        %v1031 = vmul.f32 %v1021, 1.442695
        %v1032 = vpow.pop %v1031
        %v1033 = vmul.f32 %v1022, 1.442695
        %v1034 = vpow.pop %v1033
        %v1035 = vmul.f32 %v1023, 1.442695
        %v1036 = vpow.pop %v1035
        %v1037 = vmul.f32 %v1024, 1.442695
        %v1038 = vpow.pop %v1037
        %v1039 = vmul.f32 %v1025, 1.442695
        %v1040 = vpow.pop %v1039
        %v1041 = vmul.f32 %v1026, 1.442695
        %v1042 = vpow.pop %v1041
        %v1043 = vsel %vm994, %v1028, 0.0
        %1044 = vadd.xlane.f32.xlu0 %v1043
        %v1045 = vpop.xlane.xlu0 %1044
        %v1046 = vsel %vm994, %v1030, 0.0
        %1047 = vadd.xlane.f32.xlu0 %v1046
        %v1048 = vpop.xlane.xlu0 %1047
        %v1049 = vsel %vm994, %v1032, 0.0
        %1050 = vadd.xlane.f32.xlu0 %v1049
        %v1051 = vpop.xlane.xlu0 %1050
        %v1052 = vsel %vm994, %v1034, 0.0
        %1053 = vadd.xlane.f32.xlu0 %v1052
        %v1054 = vpop.xlane.xlu0 %1053
        %v1055 = vsel %vm994, %v1036, 0.0
        %1056 = vadd.xlane.f32.xlu0 %v1055
        %v1057 = vpop.xlane.xlu0 %1056
        %v1058 = vsel %vm994, %v1038, 0.0
        %1059 = vadd.xlane.f32.xlu0 %v1058
        %v1060 = vpop.xlane.xlu0 %1059
        %v1061 = vsel %vm994, %v1040, 0.0
        %1062 = vadd.xlane.f32.xlu0 %v1061
        %v1063 = vpop.xlane.xlu0 %1062
        %v1064 = vsel %vm994, %v1042, 0.0
        %1065 = vadd.xlane.f32.xlu0 %v1064
        %v1066 = vpop.xlane.xlu0 %1065
        %v1067 = vrcp.pop %v1045
        %v1068 = vrcp.pop %v1048
        %v1069 = vrcp.pop %v1051
        %v1070 = vrcp.pop %v1054
        %v1071 = vrcp.pop %v1057
        %v1072 = vrcp.pop %v1060
        %v1073 = vrcp.pop %v1063
        %v1074 = vrcp.pop %v1066
        %v1075 = vmul.f32 %v1028, %v1067
        %v1076 = vmul.f32 %v1030, %v1068
        %v1077 = vmul.f32 %v1032, %v1069
        %v1078 = vmul.f32 %v1034, %v1070
        %v1079 = vmul.f32 %v1036, %v1071
        %v1080 = vmul.f32 %v1038, %v1072
        %v1081 = vmul.f32 %v1040, %v1073
        %v1082 = vmul.f32 %v1042, %v1074
        %v1083 = vpack.c.bf16 %v1075, %v1075
        %v1084 = vpack.c.bf16 %v1076, %v1076
        %v1085 = vpack.c.bf16 %v1077, %v1077
        %v1086 = vpack.c.bf16 %v1078, %v1078
        %v1087 = vpack.c.bf16 %v1079, %v1079
        %v1088 = vpack.c.bf16 %v1080, %v1080
        %v1089 = vpack.c.bf16 %v1081, %v1081
        %v1090 = vpack.c.bf16 %v1082, %v1082
        %v1092 = vsel %vm994, %v1083, 0
        %vm1094 = vcmask 1043456
        %v1096 = vsel %vm1094, %v784, 0
        %1098 = vmatpush.bf16.msra.mxu0 0
        %1099 = vmatpush.bf16.msra.mxu0 0
        %1100 = vmatpush.bf16.msra.mxu0 0
        %1101 = vmatpush.bf16.msra.mxu0 0
        %1102 = vmatpush.bf16.msra.mxu0 0
        %1103 = vmatpush.bf16.msra.mxu0 0
        %1104 = vmatpush.bf16.msra.mxu0 0
        %1105 = vmatpush.bf16.msra.mxu0 %v1096
        %1106 = vmatmul.bf16.gmra.mxu0 %v1092
        %v1107 = vpop.f32.mrf.mxu0
        %v1108 = vadd.f32 0.0, %v1107
        %v1109 = vpop.f32.mrf.mxu0
        %1110 = vdwg.mxu0
        %v1112 = vsel %vm994, %v1084, 0
        %v1115 = vsel %vm1094, %v785, 0
        %1117 = vmatpush.bf16.msra.mxu0 0
        %1118 = vmatpush.bf16.msra.mxu0 0
        %1119 = vmatpush.bf16.msra.mxu0 0
        %1120 = vmatpush.bf16.msra.mxu0 0
        %1121 = vmatpush.bf16.msra.mxu0 0
        %1122 = vmatpush.bf16.msra.mxu0 0
        %1123 = vmatpush.bf16.msra.mxu0 0
        %1124 = vmatpush.bf16.msra.mxu0 %v1115
        %1125 = vmatmul.bf16.gmra.mxu0 %v1112
        %v1126 = vpop.f32.mrf.mxu0
        %v1127 = vadd.f32 0.0, %v1126
        %v1128 = vpop.f32.mrf.mxu0
        %1129 = vdwg.mxu0
        %v1131 = vsel %vm994, %v1085, 0
        %v1134 = vsel %vm1094, %v786, 0
        %1136 = vmatpush.bf16.msra.mxu0 0
        %1137 = vmatpush.bf16.msra.mxu0 0
        %1138 = vmatpush.bf16.msra.mxu0 0
        %1139 = vmatpush.bf16.msra.mxu0 0
        %1140 = vmatpush.bf16.msra.mxu0 0
        %1141 = vmatpush.bf16.msra.mxu0 0
        %1142 = vmatpush.bf16.msra.mxu0 0
        %1143 = vmatpush.bf16.msra.mxu0 %v1134
        %1144 = vmatmul.bf16.gmra.mxu0 %v1131
        %v1145 = vpop.f32.mrf.mxu0
        %v1146 = vadd.f32 0.0, %v1145
        %v1147 = vpop.f32.mrf.mxu0
        %1148 = vdwg.mxu0
        %v1150 = vsel %vm994, %v1086, 0
        %v1153 = vsel %vm1094, %v787, 0
        %1155 = vmatpush.bf16.msra.mxu0 0
        %1156 = vmatpush.bf16.msra.mxu0 0
        %1157 = vmatpush.bf16.msra.mxu0 0
        %1158 = vmatpush.bf16.msra.mxu0 0
        %1159 = vmatpush.bf16.msra.mxu0 0
        %1160 = vmatpush.bf16.msra.mxu0 0
        %1161 = vmatpush.bf16.msra.mxu0 0
        %1162 = vmatpush.bf16.msra.mxu0 %v1153
        %1163 = vmatmul.bf16.gmra.mxu0 %v1150
        %v1164 = vpop.f32.mrf.mxu0
        %v1165 = vadd.f32 0.0, %v1164
        %v1166 = vpop.f32.mrf.mxu0
        %1167 = vdwg.mxu0
        %v1169 = vsel %vm994, %v1087, 0
        %v1172 = vsel %vm1094, %v788, 0
        %1174 = vmatpush.bf16.msra.mxu0 0
        %1175 = vmatpush.bf16.msra.mxu0 0
        %1176 = vmatpush.bf16.msra.mxu0 0
        %1177 = vmatpush.bf16.msra.mxu0 0
        %1178 = vmatpush.bf16.msra.mxu0 0
        %1179 = vmatpush.bf16.msra.mxu0 0
        %1180 = vmatpush.bf16.msra.mxu0 0
        %1181 = vmatpush.bf16.msra.mxu0 %v1172
        %1182 = vmatmul.bf16.gmra.mxu0 %v1169
        %v1183 = vpop.f32.mrf.mxu0
        %v1184 = vadd.f32 0.0, %v1183
        %v1185 = vpop.f32.mrf.mxu0
        %1186 = vdwg.mxu0
        %v1188 = vsel %vm994, %v1088, 0
        %v1191 = vsel %vm1094, %v789, 0
        %1193 = vmatpush.bf16.msra.mxu0 0
        %1194 = vmatpush.bf16.msra.mxu0 0
        %1195 = vmatpush.bf16.msra.mxu0 0
        %1196 = vmatpush.bf16.msra.mxu0 0
        %1197 = vmatpush.bf16.msra.mxu0 0
        %1198 = vmatpush.bf16.msra.mxu0 0
        %1199 = vmatpush.bf16.msra.mxu0 0
        %1200 = vmatpush.bf16.msra.mxu0 %v1191
        %1201 = vmatmul.bf16.gmra.mxu0 %v1188
        %v1202 = vpop.f32.mrf.mxu0
        %v1203 = vadd.f32 0.0, %v1202
        %v1204 = vpop.f32.mrf.mxu0
        %1205 = vdwg.mxu0
        %v1207 = vsel %vm994, %v1089, 0
        %v1210 = vsel %vm1094, %v790, 0
        %1212 = vmatpush.bf16.msra.mxu0 0
        %1213 = vmatpush.bf16.msra.mxu0 0
        %1214 = vmatpush.bf16.msra.mxu0 0
        %1215 = vmatpush.bf16.msra.mxu0 0
        %1216 = vmatpush.bf16.msra.mxu0 0
        %1217 = vmatpush.bf16.msra.mxu0 0
        %1218 = vmatpush.bf16.msra.mxu0 0
        %1219 = vmatpush.bf16.msra.mxu0 %v1210
        %1220 = vmatmul.bf16.gmra.mxu0 %v1207
        %v1221 = vpop.f32.mrf.mxu0
        %v1222 = vadd.f32 0.0, %v1221
        %v1223 = vpop.f32.mrf.mxu0
        %1224 = vdwg.mxu0
        %v1226 = vsel %vm994, %v1090, 0
        %v1229 = vsel %vm1094, %v791, 0
        %1231 = vmatpush.bf16.msra.mxu0 0
        %1232 = vmatpush.bf16.msra.mxu0 0
        %1233 = vmatpush.bf16.msra.mxu0 0
        %1234 = vmatpush.bf16.msra.mxu0 0
        %1235 = vmatpush.bf16.msra.mxu0 0
        %1236 = vmatpush.bf16.msra.mxu0 0
        %1237 = vmatpush.bf16.msra.mxu0 0
        %1238 = vmatpush.bf16.msra.mxu0 %v1229
        %1239 = vmatmul.bf16.gmra.mxu0 %v1226
        %v1240 = vpop.f32.mrf.mxu0
        %v1241 = vadd.f32 0.0, %v1240
        %v1242 = vpop.f32.mrf.mxu0
        %1243 = vdwg.mxu0
        %v1245 = vunpack.c.l.b16 %v680
        %v1246 = vpack.c.b16 %v1245, %v1245
        %1247 = vrot.lane.b32.xlu0 %v1246, 112
        %v1248 = vpop.permute.xlu0 %1247
        %v1250 = vunpack.c.l.b16 %v732
        %v1251 = vpack.c.b16 %v1250, %v1250
        %1252 = vrot.lane.b32.xlu0 %v1251, 112
        %v1253 = vpop.permute.xlu0 %1252
        %v1255 = vsel %vm792, %v1248, 0
        %v1258 = vsel %vm792, %v1253, 0
        %1260 = vmatpush.bf16.xpose.msra.mxu0 0
        %1261 = vmatpush.bf16.xpose.msra.mxu0 0
        %1262 = vmatpush.bf16.xpose.msra.mxu0 0
        %1263 = vmatpush.bf16.xpose.msra.mxu0 0
        %1264 = vmatpush.bf16.xpose.msra.mxu0 0
        %1265 = vmatpush.bf16.xpose.msra.mxu0 0
        %1266 = vmatpush.bf16.xpose.msra.mxu0 0
        %1267 = vmatpush.bf16.xpose.msra.mxu0 %v1258
        %1268 = vmatmul.bf16.gmra.mxu0 %v1255
        %v1269 = vpop.f32.mrf.mxu0
        %v1270 = vadd.f32 0.0, %v1269
        %v1271 = vpop.f32.mrf.mxu0
        %1272 = vdwg.mxu0
        %v1274 = vunpack.c.l.b16 %v681
        %v1275 = vpack.c.b16 %v1274, %v1274
        %1276 = vrot.lane.b32.xlu0 %v1275, 112
        %v1277 = vpop.permute.xlu0 %1276
        %v1279 = vunpack.c.l.b16 %v733
        %v1280 = vpack.c.b16 %v1279, %v1279
        %1281 = vrot.lane.b32.xlu0 %v1280, 112
        %v1282 = vpop.permute.xlu0 %1281
        %v1284 = vsel %vm792, %v1277, 0
        %v1287 = vsel %vm792, %v1282, 0
        %1289 = vmatpush.bf16.xpose.msra.mxu0 0
        %1290 = vmatpush.bf16.xpose.msra.mxu0 0
        %1291 = vmatpush.bf16.xpose.msra.mxu0 0
        %1292 = vmatpush.bf16.xpose.msra.mxu0 0
        %1293 = vmatpush.bf16.xpose.msra.mxu0 0
        %1294 = vmatpush.bf16.xpose.msra.mxu0 0
        %1295 = vmatpush.bf16.xpose.msra.mxu0 0
        %1296 = vmatpush.bf16.xpose.msra.mxu0 %v1287
        %1297 = vmatmul.bf16.gmra.mxu0 %v1284
        %v1298 = vpop.f32.mrf.mxu0
        %v1299 = vadd.f32 0.0, %v1298
        %v1300 = vpop.f32.mrf.mxu0
        %1301 = vdwg.mxu0
        %v1303 = vunpack.c.l.b16 %v682
        %v1304 = vpack.c.b16 %v1303, %v1303
        %1305 = vrot.lane.b32.xlu0 %v1304, 112
        %v1306 = vpop.permute.xlu0 %1305
        %v1308 = vunpack.c.l.b16 %v734
        %v1309 = vpack.c.b16 %v1308, %v1308
        %1310 = vrot.lane.b32.xlu0 %v1309, 112
        %v1311 = vpop.permute.xlu0 %1310
        %v1313 = vsel %vm792, %v1306, 0
        %v1316 = vsel %vm792, %v1311, 0
        %1318 = vmatpush.bf16.xpose.msra.mxu0 0
        %1319 = vmatpush.bf16.xpose.msra.mxu0 0
        %1320 = vmatpush.bf16.xpose.msra.mxu0 0
        %1321 = vmatpush.bf16.xpose.msra.mxu0 0
        %1322 = vmatpush.bf16.xpose.msra.mxu0 0
        %1323 = vmatpush.bf16.xpose.msra.mxu0 0
        %1324 = vmatpush.bf16.xpose.msra.mxu0 0
        %1325 = vmatpush.bf16.xpose.msra.mxu0 %v1316
        %1326 = vmatmul.bf16.gmra.mxu0 %v1313
        %v1327 = vpop.f32.mrf.mxu0
        %v1328 = vadd.f32 0.0, %v1327
        %v1329 = vpop.f32.mrf.mxu0
        %1330 = vdwg.mxu0
        %v1332 = vunpack.c.l.b16 %v683
        %v1333 = vpack.c.b16 %v1332, %v1332
        %1334 = vrot.lane.b32.xlu0 %v1333, 112
        %v1335 = vpop.permute.xlu0 %1334
        %v1337 = vunpack.c.l.b16 %v735
        %v1338 = vpack.c.b16 %v1337, %v1337
        %1339 = vrot.lane.b32.xlu0 %v1338, 112
        %v1340 = vpop.permute.xlu0 %1339
        %v1342 = vsel %vm792, %v1335, 0
        %v1345 = vsel %vm792, %v1340, 0
        %1347 = vmatpush.bf16.xpose.msra.mxu0 0
        %1348 = vmatpush.bf16.xpose.msra.mxu0 0
        %1349 = vmatpush.bf16.xpose.msra.mxu0 0
        %1350 = vmatpush.bf16.xpose.msra.mxu0 0
        %1351 = vmatpush.bf16.xpose.msra.mxu0 0
        %1352 = vmatpush.bf16.xpose.msra.mxu0 0
        %1353 = vmatpush.bf16.xpose.msra.mxu0 0
        %1354 = vmatpush.bf16.xpose.msra.mxu0 %v1345
        %1355 = vmatmul.bf16.gmra.mxu0 %v1342
        %v1356 = vpop.f32.mrf.mxu0
        %v1357 = vadd.f32 0.0, %v1356
        %v1358 = vpop.f32.mrf.mxu0
        %1359 = vdwg.mxu0
        %v1361 = vunpack.c.l.b16 %v684
        %v1362 = vpack.c.b16 %v1361, %v1361
        %1363 = vrot.lane.b32.xlu0 %v1362, 112
        %v1364 = vpop.permute.xlu0 %1363
        %v1366 = vunpack.c.l.b16 %v736
        %v1367 = vpack.c.b16 %v1366, %v1366
        %1368 = vrot.lane.b32.xlu0 %v1367, 112
        %v1369 = vpop.permute.xlu0 %1368
        %v1371 = vsel %vm792, %v1364, 0
        %v1374 = vsel %vm792, %v1369, 0
        %1376 = vmatpush.bf16.xpose.msra.mxu0 0
        %1377 = vmatpush.bf16.xpose.msra.mxu0 0
        %1378 = vmatpush.bf16.xpose.msra.mxu0 0
        %1379 = vmatpush.bf16.xpose.msra.mxu0 0
        %1380 = vmatpush.bf16.xpose.msra.mxu0 0
        %1381 = vmatpush.bf16.xpose.msra.mxu0 0
        %1382 = vmatpush.bf16.xpose.msra.mxu0 0
        %1383 = vmatpush.bf16.xpose.msra.mxu0 %v1374
        %1384 = vmatmul.bf16.gmra.mxu0 %v1371
        %v1385 = vpop.f32.mrf.mxu0
        %v1386 = vadd.f32 0.0, %v1385
        %v1387 = vpop.f32.mrf.mxu0
        %1388 = vdwg.mxu0
        %v1390 = vunpack.c.l.b16 %v685
        %v1391 = vpack.c.b16 %v1390, %v1390
        %1392 = vrot.lane.b32.xlu0 %v1391, 112
        %v1393 = vpop.permute.xlu0 %1392
        %v1395 = vunpack.c.l.b16 %v737
        %v1396 = vpack.c.b16 %v1395, %v1395
        %1397 = vrot.lane.b32.xlu0 %v1396, 112
        %v1398 = vpop.permute.xlu0 %1397
        %v1400 = vsel %vm792, %v1393, 0
        %v1403 = vsel %vm792, %v1398, 0
        %1405 = vmatpush.bf16.xpose.msra.mxu0 0
        %1406 = vmatpush.bf16.xpose.msra.mxu0 0
        %1407 = vmatpush.bf16.xpose.msra.mxu0 0
        %1408 = vmatpush.bf16.xpose.msra.mxu0 0
        %1409 = vmatpush.bf16.xpose.msra.mxu0 0
        %1410 = vmatpush.bf16.xpose.msra.mxu0 0
        %1411 = vmatpush.bf16.xpose.msra.mxu0 0
        %1412 = vmatpush.bf16.xpose.msra.mxu0 %v1403
        %1413 = vmatmul.bf16.gmra.mxu0 %v1400
        %v1414 = vpop.f32.mrf.mxu0
        %v1415 = vadd.f32 0.0, %v1414
        %v1416 = vpop.f32.mrf.mxu0
        %1417 = vdwg.mxu0
        %v1419 = vunpack.c.l.b16 %v686
        %v1420 = vpack.c.b16 %v1419, %v1419
        %1421 = vrot.lane.b32.xlu0 %v1420, 112
        %v1422 = vpop.permute.xlu0 %1421
        %v1424 = vunpack.c.l.b16 %v738
        %v1425 = vpack.c.b16 %v1424, %v1424
        %1426 = vrot.lane.b32.xlu0 %v1425, 112
        %v1427 = vpop.permute.xlu0 %1426
        %v1429 = vsel %vm792, %v1422, 0
        %v1432 = vsel %vm792, %v1427, 0
        %1434 = vmatpush.bf16.xpose.msra.mxu0 0
        %1435 = vmatpush.bf16.xpose.msra.mxu0 0
        %1436 = vmatpush.bf16.xpose.msra.mxu0 0
        %1437 = vmatpush.bf16.xpose.msra.mxu0 0
        %1438 = vmatpush.bf16.xpose.msra.mxu0 0
        %1439 = vmatpush.bf16.xpose.msra.mxu0 0
        %1440 = vmatpush.bf16.xpose.msra.mxu0 0
        %1441 = vmatpush.bf16.xpose.msra.mxu0 %v1432
        %1442 = vmatmul.bf16.gmra.mxu0 %v1429
        %v1443 = vpop.f32.mrf.mxu0
        %v1444 = vadd.f32 0.0, %v1443
        %v1445 = vpop.f32.mrf.mxu0
        %1446 = vdwg.mxu0
        %v1448 = vunpack.c.l.b16 %v687
        %v1449 = vpack.c.b16 %v1448, %v1448
        %1450 = vrot.lane.b32.xlu0 %v1449, 112
        %v1451 = vpop.permute.xlu0 %1450
        %v1453 = vunpack.c.l.b16 %v739
        %v1454 = vpack.c.b16 %v1453, %v1453
        %1455 = vrot.lane.b32.xlu0 %v1454, 112
        %v1456 = vpop.permute.xlu0 %1455
        %v1458 = vsel %vm792, %v1451, 0
        %v1461 = vsel %vm792, %v1456, 0
        %1463 = vmatpush.bf16.xpose.msra.mxu0 0
        %1464 = vmatpush.bf16.xpose.msra.mxu0 0
        %1465 = vmatpush.bf16.xpose.msra.mxu0 0
        %1466 = vmatpush.bf16.xpose.msra.mxu0 0
        %1467 = vmatpush.bf16.xpose.msra.mxu0 0
        %1468 = vmatpush.bf16.xpose.msra.mxu0 0
        %1469 = vmatpush.bf16.xpose.msra.mxu0 0
        %1470 = vmatpush.bf16.xpose.msra.mxu0 %v1461
        %1471 = vmatmul.bf16.gmra.mxu0 %v1458
        %v1472 = vpop.f32.mrf.mxu0
        %v1473 = vadd.f32 0.0, %v1472
        %v1474 = vpop.f32.mrf.mxu0
        %1475 = vdwg.mxu0
        %v1476 = vmul.f32 %v1270, 0.25
        %v1477 = vmul.f32 %v1299, 0.25
        %v1478 = vmul.f32 %v1328, 0.25
        %v1479 = vmul.f32 %v1357, 0.25
        %v1480 = vmul.f32 %v1386, 0.25
        %v1481 = vmul.f32 %v1415, 0.25
        %v1482 = vmul.f32 %v1444, 0.25
        %v1483 = vmul.f32 %v1473, 0.25
        %v1484 = vadd.f32 %v1476, %v961
        %v1485 = vadd.f32 %v1477, %v962
        %v1486 = vadd.f32 %v1478, %v963
        %v1487 = vadd.f32 %v1479, %v964
        %v1488 = vadd.f32 %v1480, %v965
        %v1489 = vadd.f32 %v1481, %v966
        %v1490 = vadd.f32 %v1482, %v967
        %v1491 = vadd.f32 %v1483, %v968
        %v1492 = vunpack.c.l.bf16 %v582
        %v1493 = vadd.f32 %v1484, %v1492
        %v1494 = vadd.f32 %v1485, %v1492
        %v1495 = vadd.f32 %v1486, %v1492
        %v1496 = vadd.f32 %v1487, %v1492
        %v1497 = vadd.f32 %v1488, %v1492
        %v1498 = vadd.f32 %v1489, %v1492
        %v1499 = vadd.f32 %v1490, %v1492
        %v1500 = vadd.f32 %v1491, %v1492
        %v1501 = vsel %vm994, %v1493, -inf
        %1502 = vmax.xlane.f32.xlu0 %v1501
        %v1503 = vpop.xlane.xlu0 %1502
        %v1504 = vsel %vm994, %v1494, -inf
        %1505 = vmax.xlane.f32.xlu0 %v1504
        %v1506 = vpop.xlane.xlu0 %1505
        %v1507 = vsel %vm994, %v1495, -inf
        %1508 = vmax.xlane.f32.xlu0 %v1507
        %v1509 = vpop.xlane.xlu0 %1508
        %v1510 = vsel %vm994, %v1496, -inf
        %1511 = vmax.xlane.f32.xlu0 %v1510
        %v1512 = vpop.xlane.xlu0 %1511
        %v1513 = vsel %vm994, %v1497, -inf
        %1514 = vmax.xlane.f32.xlu0 %v1513
        %v1515 = vpop.xlane.xlu0 %1514
        %v1516 = vsel %vm994, %v1498, -inf
        %1517 = vmax.xlane.f32.xlu0 %v1516
        %v1518 = vpop.xlane.xlu0 %1517
        %v1519 = vsel %vm994, %v1499, -inf
        %1520 = vmax.xlane.f32.xlu0 %v1519
        %v1521 = vpop.xlane.xlu0 %1520
        %v1522 = vsel %vm994, %v1500, -inf
        %1523 = vmax.xlane.f32.xlu0 %v1522
        %v1524 = vpop.xlane.xlu0 %1523
        %v1525 = vsub.f32 %v1493, %v1503
        %v1526 = vsub.f32 %v1494, %v1506
        %v1527 = vsub.f32 %v1495, %v1509
        %v1528 = vsub.f32 %v1496, %v1512
        %v1529 = vsub.f32 %v1497, %v1515
        %v1530 = vsub.f32 %v1498, %v1518
        %v1531 = vsub.f32 %v1499, %v1521
        %v1532 = vsub.f32 %v1500, %v1524
        %v1533 = vmul.f32 %v1525, 1.442695
        %v1534 = vpow.pop %v1533
        %v1535 = vmul.f32 %v1526, 1.442695
        %v1536 = vpow.pop %v1535
        %v1537 = vmul.f32 %v1527, 1.442695
        %v1538 = vpow.pop %v1537
        %v1539 = vmul.f32 %v1528, 1.442695
        %v1540 = vpow.pop %v1539
        %v1541 = vmul.f32 %v1529, 1.442695
        %v1542 = vpow.pop %v1541
        %v1543 = vmul.f32 %v1530, 1.442695
        %v1544 = vpow.pop %v1543
        %v1545 = vmul.f32 %v1531, 1.442695
        %v1546 = vpow.pop %v1545
        %v1547 = vmul.f32 %v1532, 1.442695
        %v1548 = vpow.pop %v1547
        %v1549 = vsel %vm994, %v1534, 0.0
        %1550 = vadd.xlane.f32.xlu0 %v1549
        %v1551 = vpop.xlane.xlu0 %1550
        %v1552 = vsel %vm994, %v1536, 0.0
        %1553 = vadd.xlane.f32.xlu0 %v1552
        %v1554 = vpop.xlane.xlu0 %1553
        %v1555 = vsel %vm994, %v1538, 0.0
        %1556 = vadd.xlane.f32.xlu0 %v1555
        %v1557 = vpop.xlane.xlu0 %1556
        %v1558 = vsel %vm994, %v1540, 0.0
        %1559 = vadd.xlane.f32.xlu0 %v1558
        %v1560 = vpop.xlane.xlu0 %1559
        %v1561 = vsel %vm994, %v1542, 0.0
        %1562 = vadd.xlane.f32.xlu0 %v1561
        %v1563 = vpop.xlane.xlu0 %1562
        %v1564 = vsel %vm994, %v1544, 0.0
        %1565 = vadd.xlane.f32.xlu0 %v1564
        %v1566 = vpop.xlane.xlu0 %1565
        %v1567 = vsel %vm994, %v1546, 0.0
        %1568 = vadd.xlane.f32.xlu0 %v1567
        %v1569 = vpop.xlane.xlu0 %1568
        %v1570 = vsel %vm994, %v1548, 0.0
        %1571 = vadd.xlane.f32.xlu0 %v1570
        %v1572 = vpop.xlane.xlu0 %1571
        %v1573 = vrcp.pop %v1551
        %v1574 = vrcp.pop %v1554
        %v1575 = vrcp.pop %v1557
        %v1576 = vrcp.pop %v1560
        %v1577 = vrcp.pop %v1563
        %v1578 = vrcp.pop %v1566
        %v1579 = vrcp.pop %v1569
        %v1580 = vrcp.pop %v1572
        %v1581 = vmul.f32 %v1534, %v1573
        %v1582 = vmul.f32 %v1536, %v1574
        %v1583 = vmul.f32 %v1538, %v1575
        %v1584 = vmul.f32 %v1540, %v1576
        %v1585 = vmul.f32 %v1542, %v1577
        %v1586 = vmul.f32 %v1544, %v1578
        %v1587 = vmul.f32 %v1546, %v1579
        %v1588 = vmul.f32 %v1548, %v1580
        %v1589 = vpack.c.bf16 %v1581, %v1581
        %v1590 = vpack.c.bf16 %v1582, %v1582
        %v1591 = vpack.c.bf16 %v1583, %v1583
        %v1592 = vpack.c.bf16 %v1584, %v1584
        %v1593 = vpack.c.bf16 %v1585, %v1585
        %v1594 = vpack.c.bf16 %v1586, %v1586
        %v1595 = vpack.c.bf16 %v1587, %v1587
        %v1596 = vpack.c.bf16 %v1588, %v1588
        %v1598 = vunpack.c.l.b16 %v784
        %v1599 = vpack.c.b16 %v1598, %v1598
        %1600 = vrot.lane.b32.xlu0 %v1599, 112
        %v1601 = vpop.permute.xlu0 %1600
        %v1603 = vsel %vm994, %v1589, 0
        %v1606 = vsel %vm1094, %v1601, 0
        %1608 = vmatpush.bf16.msra.mxu0 0
        %1609 = vmatpush.bf16.msra.mxu0 0
        %1610 = vmatpush.bf16.msra.mxu0 0
        %1611 = vmatpush.bf16.msra.mxu0 0
        %1612 = vmatpush.bf16.msra.mxu0 0
        %1613 = vmatpush.bf16.msra.mxu0 0
        %1614 = vmatpush.bf16.msra.mxu0 0
        %1615 = vmatpush.bf16.msra.mxu0 %v1606
        %1616 = vmatmul.bf16.gmra.mxu0 %v1603
        %v1617 = vpop.f32.mrf.mxu0
        %v1618 = vadd.f32 0.0, %v1617
        %v1619 = vpop.f32.mrf.mxu0
        %1620 = vdwg.mxu0
        %v1622 = vunpack.c.l.b16 %v785
        %v1623 = vpack.c.b16 %v1622, %v1622
        %1624 = vrot.lane.b32.xlu0 %v1623, 112
        %v1625 = vpop.permute.xlu0 %1624
        %v1627 = vsel %vm994, %v1590, 0
        %v1630 = vsel %vm1094, %v1625, 0
        %1632 = vmatpush.bf16.msra.mxu0 0
        %1633 = vmatpush.bf16.msra.mxu0 0
        %1634 = vmatpush.bf16.msra.mxu0 0
        %1635 = vmatpush.bf16.msra.mxu0 0
        %1636 = vmatpush.bf16.msra.mxu0 0
        %1637 = vmatpush.bf16.msra.mxu0 0
        %1638 = vmatpush.bf16.msra.mxu0 0
        %1639 = vmatpush.bf16.msra.mxu0 %v1630
        %1640 = vmatmul.bf16.gmra.mxu0 %v1627
        %v1641 = vpop.f32.mrf.mxu0
        %v1642 = vadd.f32 0.0, %v1641
        %v1643 = vpop.f32.mrf.mxu0
        %1644 = vdwg.mxu0
        %v1646 = vunpack.c.l.b16 %v786
        %v1647 = vpack.c.b16 %v1646, %v1646
        %1648 = vrot.lane.b32.xlu0 %v1647, 112
        %v1649 = vpop.permute.xlu0 %1648
        %v1651 = vsel %vm994, %v1591, 0
        %v1654 = vsel %vm1094, %v1649, 0
        %1656 = vmatpush.bf16.msra.mxu0 0
        %1657 = vmatpush.bf16.msra.mxu0 0
        %1658 = vmatpush.bf16.msra.mxu0 0
        %1659 = vmatpush.bf16.msra.mxu0 0
        %1660 = vmatpush.bf16.msra.mxu0 0
        %1661 = vmatpush.bf16.msra.mxu0 0
        %1662 = vmatpush.bf16.msra.mxu0 0
        %1663 = vmatpush.bf16.msra.mxu0 %v1654
        %1664 = vmatmul.bf16.gmra.mxu0 %v1651
        %v1665 = vpop.f32.mrf.mxu0
        %v1666 = vadd.f32 0.0, %v1665
        %v1667 = vpop.f32.mrf.mxu0
        %1668 = vdwg.mxu0
        %v1670 = vunpack.c.l.b16 %v787
        %v1671 = vpack.c.b16 %v1670, %v1670
        %1672 = vrot.lane.b32.xlu0 %v1671, 112
        %v1673 = vpop.permute.xlu0 %1672
        %v1675 = vsel %vm994, %v1592, 0
        %v1678 = vsel %vm1094, %v1673, 0
        %1680 = vmatpush.bf16.msra.mxu0 0
        %1681 = vmatpush.bf16.msra.mxu0 0
        %1682 = vmatpush.bf16.msra.mxu0 0
        %1683 = vmatpush.bf16.msra.mxu0 0
        %1684 = vmatpush.bf16.msra.mxu0 0
        %1685 = vmatpush.bf16.msra.mxu0 0
        %1686 = vmatpush.bf16.msra.mxu0 0
        %1687 = vmatpush.bf16.msra.mxu0 %v1678
        %1688 = vmatmul.bf16.gmra.mxu0 %v1675
        %v1689 = vpop.f32.mrf.mxu0
        %v1690 = vadd.f32 0.0, %v1689
        %v1691 = vpop.f32.mrf.mxu0
        %1692 = vdwg.mxu0
        %v1694 = vunpack.c.l.b16 %v788
        %v1695 = vpack.c.b16 %v1694, %v1694
        %1696 = vrot.lane.b32.xlu0 %v1695, 112
        %v1697 = vpop.permute.xlu0 %1696
        %v1699 = vsel %vm994, %v1593, 0
        %v1702 = vsel %vm1094, %v1697, 0
        %1704 = vmatpush.bf16.msra.mxu0 0
        %1705 = vmatpush.bf16.msra.mxu0 0
        %1706 = vmatpush.bf16.msra.mxu0 0
        %1707 = vmatpush.bf16.msra.mxu0 0
        %1708 = vmatpush.bf16.msra.mxu0 0
        %1709 = vmatpush.bf16.msra.mxu0 0
        %1710 = vmatpush.bf16.msra.mxu0 0
        %1711 = vmatpush.bf16.msra.mxu0 %v1702
        %1712 = vmatmul.bf16.gmra.mxu0 %v1699
        %v1713 = vpop.f32.mrf.mxu0
        %v1714 = vadd.f32 0.0, %v1713
        %v1715 = vpop.f32.mrf.mxu0
        %1716 = vdwg.mxu0
        %v1718 = vunpack.c.l.b16 %v789
        %v1719 = vpack.c.b16 %v1718, %v1718
        %1720 = vrot.lane.b32.xlu0 %v1719, 112
        %v1721 = vpop.permute.xlu0 %1720
        %v1723 = vsel %vm994, %v1594, 0
        %v1726 = vsel %vm1094, %v1721, 0
        %1728 = vmatpush.bf16.msra.mxu0 0
        %1729 = vmatpush.bf16.msra.mxu0 0
        %1730 = vmatpush.bf16.msra.mxu0 0
        %1731 = vmatpush.bf16.msra.mxu0 0
        %1732 = vmatpush.bf16.msra.mxu0 0
        %1733 = vmatpush.bf16.msra.mxu0 0
        %1734 = vmatpush.bf16.msra.mxu0 0
        %1735 = vmatpush.bf16.msra.mxu0 %v1726
        %1736 = vmatmul.bf16.gmra.mxu0 %v1723
        %v1737 = vpop.f32.mrf.mxu0
        %v1738 = vadd.f32 0.0, %v1737
        %v1739 = vpop.f32.mrf.mxu0
        %1740 = vdwg.mxu0
        %v1742 = vunpack.c.l.b16 %v790
        %v1743 = vpack.c.b16 %v1742, %v1742
        %1744 = vrot.lane.b32.xlu0 %v1743, 112
        %v1745 = vpop.permute.xlu0 %1744
        %v1747 = vsel %vm994, %v1595, 0
        %v1750 = vsel %vm1094, %v1745, 0
        %1752 = vmatpush.bf16.msra.mxu0 0
        %1753 = vmatpush.bf16.msra.mxu0 0
        %1754 = vmatpush.bf16.msra.mxu0 0
        %1755 = vmatpush.bf16.msra.mxu0 0
        %1756 = vmatpush.bf16.msra.mxu0 0
        %1757 = vmatpush.bf16.msra.mxu0 0
        %1758 = vmatpush.bf16.msra.mxu0 0
        %1759 = vmatpush.bf16.msra.mxu0 %v1750
        %1760 = vmatmul.bf16.gmra.mxu0 %v1747
        %v1761 = vpop.f32.mrf.mxu0
        %v1762 = vadd.f32 0.0, %v1761
        %v1763 = vpop.f32.mrf.mxu0
        %1764 = vdwg.mxu0
        %v1766 = vunpack.c.l.b16 %v791
        %v1767 = vpack.c.b16 %v1766, %v1766
        %1768 = vrot.lane.b32.xlu0 %v1767, 112
        %v1769 = vpop.permute.xlu0 %1768
        %v1771 = vsel %vm994, %v1596, 0
        %v1774 = vsel %vm1094, %v1769, 0
        %1776 = vmatpush.bf16.msra.mxu0 0
        %1777 = vmatpush.bf16.msra.mxu0 0
        %1778 = vmatpush.bf16.msra.mxu0 0
        %1779 = vmatpush.bf16.msra.mxu0 0
        %1780 = vmatpush.bf16.msra.mxu0 0
        %1781 = vmatpush.bf16.msra.mxu0 0
        %1782 = vmatpush.bf16.msra.mxu0 0
        %1783 = vmatpush.bf16.msra.mxu0 %v1774
        %1784 = vmatmul.bf16.gmra.mxu0 %v1771
        %v1785 = vpop.f32.mrf.mxu0
        %v1786 = vadd.f32 0.0, %v1785
        %v1787 = vpop.f32.mrf.mxu0
        %1788 = vdwg.mxu0
        %1797 = vrot.lane.b32.xlu0 %v1618, 16
        %v1798 = vpop.permute.xlu0 %1797
        %1799 = vrot.lane.b32.xlu0 %v1642, 16
        %v1800 = vpop.permute.xlu0 %1799
        %1801 = vrot.lane.b32.xlu0 %v1666, 16
        %v1802 = vpop.permute.xlu0 %1801
        %1803 = vrot.lane.b32.xlu0 %v1690, 16
        %v1804 = vpop.permute.xlu0 %1803
        %1805 = vrot.lane.b32.xlu0 %v1714, 16
        %v1806 = vpop.permute.xlu0 %1805
        %1807 = vrot.lane.b32.xlu0 %v1738, 16
        %v1808 = vpop.permute.xlu0 %1807
        %1809 = vrot.lane.b32.xlu0 %v1762, 16
        %v1810 = vpop.permute.xlu0 %1809
        %1811 = vrot.lane.b32.xlu0 %v1786, 16
        %v1812 = vpop.permute.xlu0 %1811
        %v1821 = vsel %vm792, %v1108, %v1798
        %v1822 = vsel %vm792, %v1127, %v1800
        %v1823 = vsel %vm792, %v1146, %v1802
        %v1824 = vsel %vm792, %v1165, %v1804
        %v1825 = vsel %vm792, %v1184, %v1806
        %v1826 = vsel %vm792, %v1203, %v1808
        %v1827 = vsel %vm792, %v1222, %v1810
        %v1828 = vsel %vm792, %v1241, %v1812
        %v1829 = vpack.c.bf16 %v1822, %v1821
        %v1830 = vpack.c.bf16 %v1824, %v1823
        %v1831 = vpack.c.bf16 %v1826, %v1825
        %v1832 = vpack.c.bf16 %v1828, %v1827
        %v1834 = vperm.slane %v602, 0
        %v1840 = vunpack.c.l.b16 %v598
        %v1841 = vunpack.c.l.b16 %v599
        %v1842 = vunpack.c.l.b16 %v600
        %v1843 = vunpack.c.l.b16 %v601
        %v1844 = vpack.c.b16 %v1841, %v1840
        %v1845 = vpack.c.b16 %v1843, %v1842
        %v1849 = vsel %vm638, %v1829, 0
        %v1852 = vsel %vm638, %v1830, 0
        %v1855 = vsel %vm638, %v1831, 0
        %v1858 = vsel %vm638, %v1832, 0
        %1860 = vmatpush.bf16.msra.mxu0 0
        %1861 = vmatpush.bf16.msra.mxu0 0
        %1862 = vmatpush.bf16.msra.mxu0 0
        %1863 = vmatpush.bf16.msra.mxu0 0
        %1864 = vmatpush.bf16.msra.mxu0 0
        %1865 = vmatpush.bf16.msra.mxu0 0
        %1866 = vmatpush.bf16.msra.mxu0 %v1845
        %1867 = vmatpush.bf16.msra.mxu0 %v1844
        %1868 = vmatmul.bf16.gmra.mxu0 %v1849
        %v1869 = vpop.f32.mrf.mxu0
        %v1870 = vadd.f32 %v1834, %v1869
        %v1871 = vpop.f32.mrf.mxu0
        %v1872 = vadd.f32 %v1834, %v1871
        %1873 = vmatmul.bf16.gmra.mxu0 %v1852
        %v1874 = vpop.f32.mrf.mxu0
        %v1875 = vadd.f32 %v1834, %v1874
        %v1876 = vpop.f32.mrf.mxu0
        %v1877 = vadd.f32 %v1834, %v1876
        %1878 = vmatmul.bf16.gmra.mxu0 %v1855
        %v1879 = vpop.f32.mrf.mxu0
        %v1880 = vadd.f32 %v1834, %v1879
        %v1881 = vpop.f32.mrf.mxu0
        %v1882 = vadd.f32 %v1834, %v1881
        %1883 = vmatmul.bf16.gmra.mxu0 %v1858
        %v1884 = vpop.f32.mrf.mxu0
        %v1885 = vadd.f32 %v1834, %v1884
        %v1886 = vpop.f32.mrf.mxu0
        %v1887 = vadd.f32 %v1834, %v1886
        %1888 = vdwg.mxu0
        %v1889 = vpack.c.bf16 %v1870, %v1870
        %v1890 = vpack.c.bf16 %v1872, %v1872
        %v1891 = vpack.c.bf16 %v1875, %v1875
        %v1892 = vpack.c.bf16 %v1877, %v1877
        %v1893 = vpack.c.bf16 %v1880, %v1880
        %v1894 = vpack.c.bf16 %v1882, %v1882
        %v1895 = vpack.c.bf16 %v1885, %v1885
        %v1896 = vpack.c.bf16 %v1887, %v1887
        %vm1897 = vcmask 257024
        %1898 = vst.msk [vmem:[%s522] sm:$0xf] %vm1897, %v1889
        %1899 = vst.msk [vmem:[%s522 + $0x4] sm:$0xf] %vm1897, %v1890
        %1900 = vst.msk [vmem:[%s522 + $0x8] sm:$0xf] %vm1897, %v1891
        %1901 = vst.msk [vmem:[%s522 + $0xc] sm:$0xf] %vm1897, %v1892
        %1902 = vst.msk [vmem:[%s522 + $0x10] sm:$0xf] %vm1897, %v1893
        %1903 = vst.msk [vmem:[%s522 + $0x14] sm:$0xf] %vm1897, %v1894
        %1904 = vst.msk [vmem:[%s522 + $0x18] sm:$0xf] %vm1897, %v1895
        %1905 = vst.msk [vmem:[%s522 + $0x1c] sm:$0xf] %vm1897, %v1896
        %v1906 = vld [vmem:[%s545] sm:$0xff]
        %v1907 = vld [vmem:[%s545 + $0x8] sm:$0xff]
        %v1908 = vld [vmem:[%s545 + $0x10] sm:$0xff]
        %v1909 = vld [vmem:[%s545 + $0x18] sm:$0xff]
        %v1910 = vld [vmem:[%s545 + $0x20] sm:$0xff]
        %v1911 = vld [vmem:[%s545 + $0x28] sm:$0xff]
        %v1912 = vld [vmem:[%s545 + $0x30] sm:$0xff]
        %v1913 = vld [vmem:[%s545 + $0x38] sm:$0xff]
        %vm1914 = vcmask 7168
        %v1915 = vsel %vm1914, %v1906, 0.0
        %v1916 = vrot.slane %v1915, 4
        %v1917 = vadd.f32 %v1915, %v1916
        %v1918 = vrot.slane %v1917, 2
        %v1919 = vadd.f32 %v1917, %v1918
        %v1920 = vrot.slane %v1919, 1
        %v1921 = vadd.f32 %v1919, %v1920
        %v1922 = vsel %vm1914, %v1907, 0.0
        %v1923 = vrot.slane %v1922, 4
        %v1924 = vadd.f32 %v1922, %v1923
        %v1925 = vrot.slane %v1924, 2
        %v1926 = vadd.f32 %v1924, %v1925
        %v1927 = vrot.slane %v1926, 1
        %v1928 = vadd.f32 %v1926, %v1927
        %v1929 = vsel %vm1914, %v1908, 0.0
        %v1930 = vrot.slane %v1929, 4
        %v1931 = vadd.f32 %v1929, %v1930
        %v1932 = vrot.slane %v1931, 2
        %v1933 = vadd.f32 %v1931, %v1932
        %v1934 = vrot.slane %v1933, 1
        %v1935 = vadd.f32 %v1933, %v1934
        %v1936 = vsel %vm1914, %v1909, 0.0
        %v1937 = vrot.slane %v1936, 4
        %v1938 = vadd.f32 %v1936, %v1937
        %v1939 = vrot.slane %v1938, 2
        %v1940 = vadd.f32 %v1938, %v1939
        %v1941 = vrot.slane %v1940, 1
        %v1942 = vadd.f32 %v1940, %v1941
        %v1943 = vsel %vm1914, %v1910, 0.0
        %v1944 = vrot.slane %v1943, 4
        %v1945 = vadd.f32 %v1943, %v1944
        %v1946 = vrot.slane %v1945, 2
        %v1947 = vadd.f32 %v1945, %v1946
        %v1948 = vrot.slane %v1947, 1
        %v1949 = vadd.f32 %v1947, %v1948
        %v1950 = vsel %vm1914, %v1911, 0.0
        %v1951 = vrot.slane %v1950, 4
        %v1952 = vadd.f32 %v1950, %v1951
        %v1953 = vrot.slane %v1952, 2
        %v1954 = vadd.f32 %v1952, %v1953
        %v1955 = vrot.slane %v1954, 1
        %v1956 = vadd.f32 %v1954, %v1955
        %v1957 = vsel %vm1914, %v1912, 0.0
        %v1958 = vrot.slane %v1957, 4
        %v1959 = vadd.f32 %v1957, %v1958
        %v1960 = vrot.slane %v1959, 2
        %v1961 = vadd.f32 %v1959, %v1960
        %v1962 = vrot.slane %v1961, 1
        %v1963 = vadd.f32 %v1961, %v1962
        %v1964 = vsel %vm1914, %v1913, 0.0
        %v1965 = vrot.slane %v1964, 4
        %v1966 = vadd.f32 %v1964, %v1965
        %v1967 = vrot.slane %v1966, 2
        %v1968 = vadd.f32 %v1966, %v1967
        %v1969 = vrot.slane %v1968, 1
        %v1970 = vadd.f32 %v1968, %v1969
        %v1971 = vadd.f32 %v1921, 1e-06
        %v1972 = vadd.f32 %v1928, 1e-06
        %v1973 = vadd.f32 %v1935, 1e-06
        %v1974 = vadd.f32 %v1942, 1e-06
        %v1975 = vadd.f32 %v1949, 1e-06
        %v1976 = vadd.f32 %v1956, 1e-06
        %v1977 = vadd.f32 %v1963, 1e-06
        %v1978 = vadd.f32 %v1970, 1e-06
        %1980 = vset.pattern.permute.xlu0 0
        %1981 = vperm.xlu0 %1980, %v1906
        %v1982 = vpop.permute.xlu0 %1981
        %1985 = vset.pattern.permute.xlu0 0
        %1986 = vperm.xlu0 %1985, %v1907
        %v1987 = vpop.permute.xlu0 %1986
        %1990 = vset.pattern.permute.xlu0 0
        %1991 = vperm.xlu0 %1990, %v1908
        %v1992 = vpop.permute.xlu0 %1991
        %1995 = vset.pattern.permute.xlu0 0
        %1996 = vperm.xlu0 %1995, %v1909
        %v1997 = vpop.permute.xlu0 %1996
        %2000 = vset.pattern.permute.xlu0 0
        %2001 = vperm.xlu0 %2000, %v1910
        %v2002 = vpop.permute.xlu0 %2001
        %2005 = vset.pattern.permute.xlu0 0
        %2006 = vperm.xlu0 %2005, %v1911
        %v2007 = vpop.permute.xlu0 %2006
        %2010 = vset.pattern.permute.xlu0 0
        %2011 = vperm.xlu0 %2010, %v1912
        %v2012 = vpop.permute.xlu0 %2011
        %2015 = vset.pattern.permute.xlu0 0
        %2016 = vperm.xlu0 %2015, %v1913
        %v2017 = vpop.permute.xlu0 %2016
        %v2019 = vmul.f32 %v1982, %v1870
        %v2020 = vmul.f32 %v1987, %v1872
        %v2021 = vmul.f32 %v1992, %v1875
        %v2022 = vmul.f32 %v1997, %v1877
        %v2023 = vmul.f32 %v2002, %v1880
        %v2024 = vmul.f32 %v2007, %v1882
        %v2025 = vmul.f32 %v2012, %v1885
        %v2026 = vmul.f32 %v2017, %v1887
        %v2027 = vsel %vm638, %v2019, 0.0
        %v2028 = vrot.slane %v2027, 4
        %v2029 = vadd.f32 %v2027, %v2028
        %v2030 = vrot.slane %v2029, 2
        %v2031 = vadd.f32 %v2029, %v2030
        %v2032 = vrot.slane %v2031, 1
        %v2033 = vadd.f32 %v2031, %v2032
        %v2034 = vsel %vm638, %v2020, 0.0
        %v2035 = vrot.slane %v2034, 4
        %v2036 = vadd.f32 %v2034, %v2035
        %v2037 = vrot.slane %v2036, 2
        %v2038 = vadd.f32 %v2036, %v2037
        %v2039 = vrot.slane %v2038, 1
        %v2040 = vadd.f32 %v2038, %v2039
        %v2041 = vsel %vm638, %v2021, 0.0
        %v2042 = vrot.slane %v2041, 4
        %v2043 = vadd.f32 %v2041, %v2042
        %v2044 = vrot.slane %v2043, 2
        %v2045 = vadd.f32 %v2043, %v2044
        %v2046 = vrot.slane %v2045, 1
        %v2047 = vadd.f32 %v2045, %v2046
        %v2048 = vsel %vm638, %v2022, 0.0
        %v2049 = vrot.slane %v2048, 4
        %v2050 = vadd.f32 %v2048, %v2049
        %v2051 = vrot.slane %v2050, 2
        %v2052 = vadd.f32 %v2050, %v2051
        %v2053 = vrot.slane %v2052, 1
        %v2054 = vadd.f32 %v2052, %v2053
        %v2055 = vsel %vm638, %v2023, 0.0
        %v2056 = vrot.slane %v2055, 4
        %v2057 = vadd.f32 %v2055, %v2056
        %v2058 = vrot.slane %v2057, 2
        %v2059 = vadd.f32 %v2057, %v2058
        %v2060 = vrot.slane %v2059, 1
        %v2061 = vadd.f32 %v2059, %v2060
        %v2062 = vsel %vm638, %v2024, 0.0
        %v2063 = vrot.slane %v2062, 4
        %v2064 = vadd.f32 %v2062, %v2063
        %v2065 = vrot.slane %v2064, 2
        %v2066 = vadd.f32 %v2064, %v2065
        %v2067 = vrot.slane %v2066, 1
        %v2068 = vadd.f32 %v2066, %v2067
        %v2069 = vsel %vm638, %v2025, 0.0
        %v2070 = vrot.slane %v2069, 4
        %v2071 = vadd.f32 %v2069, %v2070
        %v2072 = vrot.slane %v2071, 2
        %v2073 = vadd.f32 %v2071, %v2072
        %v2074 = vrot.slane %v2073, 1
        %v2075 = vadd.f32 %v2073, %v2074
        %v2076 = vsel %vm638, %v2026, 0.0
        %v2077 = vrot.slane %v2076, 4
        %v2078 = vadd.f32 %v2076, %v2077
        %v2079 = vrot.slane %v2078, 2
        %v2080 = vadd.f32 %v2078, %v2079
        %v2081 = vrot.slane %v2080, 1
        %v2082 = vadd.f32 %v2080, %v2081
        %2084 = vset.pattern.permute.xlu0 0
        %2085 = vperm.xlu0 %2084, %v1971
        %v2086 = vpop.permute.xlu0 %2085
        %2089 = vset.pattern.permute.xlu0 0
        %2090 = vperm.xlu0 %2089, %v1972
        %v2091 = vpop.permute.xlu0 %2090
        %2094 = vset.pattern.permute.xlu0 0
        %2095 = vperm.xlu0 %2094, %v1973
        %v2096 = vpop.permute.xlu0 %2095
        %2099 = vset.pattern.permute.xlu0 0
        %2100 = vperm.xlu0 %2099, %v1974
        %v2101 = vpop.permute.xlu0 %2100
        %2104 = vset.pattern.permute.xlu0 0
        %2105 = vperm.xlu0 %2104, %v1975
        %v2106 = vpop.permute.xlu0 %2105
        %2109 = vset.pattern.permute.xlu0 0
        %2110 = vperm.xlu0 %2109, %v1976
        %v2111 = vpop.permute.xlu0 %2110
        %2114 = vset.pattern.permute.xlu0 0
        %2115 = vperm.xlu0 %2114, %v1977
        %v2116 = vpop.permute.xlu0 %2115
        %2119 = vset.pattern.permute.xlu0 0
        %2120 = vperm.xlu0 %2119, %v1978
        %v2121 = vpop.permute.xlu0 %2120
        %v2123 = vrcp.pop %v2086
        %v2124 = vmul.f32 %v2086, %v2123
        %v2125 = vsub.f32 1.0, %v2124
        %v2126 = vmul.f32 %v2123, %v2125
        %v2127 = vadd.f32 %v2123, %v2126
        %vm2128 = vweird.f32 %v2086
        %vm2129 = vweird.f32 %v2123
        %vm2130 = vmor %vm2128, %vm2129
        %v2131 = vsel %vm2130, %v2123, %v2127
        %v2132 = vand.u32 2147483647, %v2086
        %vm2133 = vcmp.eq.f32.partialorder %v2132, 8.507059e+37
        %v2134 = vand.u32 %v2086, 2147483648
        %v2135 = vor.u32 1.1754944e-38, %v2134
        %v2136 = vsel %vm2133, %v2135, %v2131
        %v2137 = vmul.f32 %v2033, %v2136
        %v2138 = vrcp.pop %v2091
        %v2139 = vmul.f32 %v2091, %v2138
        %v2140 = vsub.f32 1.0, %v2139
        %v2141 = vmul.f32 %v2138, %v2140
        %v2142 = vadd.f32 %v2138, %v2141
        %vm2143 = vweird.f32 %v2091
        %vm2144 = vweird.f32 %v2138
        %vm2145 = vmor %vm2143, %vm2144
        %v2146 = vsel %vm2145, %v2138, %v2142
        %v2147 = vand.u32 2147483647, %v2091
        %vm2148 = vcmp.eq.f32.partialorder %v2147, 8.507059e+37
        %v2149 = vand.u32 %v2091, 2147483648
        %v2150 = vor.u32 1.1754944e-38, %v2149
        %v2151 = vsel %vm2148, %v2150, %v2146
        %v2152 = vmul.f32 %v2040, %v2151
        %v2153 = vrcp.pop %v2096
        %v2154 = vmul.f32 %v2096, %v2153
        %v2155 = vsub.f32 1.0, %v2154
        %v2156 = vmul.f32 %v2153, %v2155
        %v2157 = vadd.f32 %v2153, %v2156
        %vm2158 = vweird.f32 %v2096
        %vm2159 = vweird.f32 %v2153
        %vm2160 = vmor %vm2158, %vm2159
        %v2161 = vsel %vm2160, %v2153, %v2157
        %v2162 = vand.u32 2147483647, %v2096
        %vm2163 = vcmp.eq.f32.partialorder %v2162, 8.507059e+37
        %v2164 = vand.u32 %v2096, 2147483648
        %v2165 = vor.u32 1.1754944e-38, %v2164
        %v2166 = vsel %vm2163, %v2165, %v2161
        %v2167 = vmul.f32 %v2047, %v2166
        %v2168 = vrcp.pop %v2101
        %v2169 = vmul.f32 %v2101, %v2168
        %v2170 = vsub.f32 1.0, %v2169
        %v2171 = vmul.f32 %v2168, %v2170
        %v2172 = vadd.f32 %v2168, %v2171
        %vm2173 = vweird.f32 %v2101
        %vm2174 = vweird.f32 %v2168
        %vm2175 = vmor %vm2173, %vm2174
        %v2176 = vsel %vm2175, %v2168, %v2172
        %v2177 = vand.u32 2147483647, %v2101
        %vm2178 = vcmp.eq.f32.partialorder %v2177, 8.507059e+37
        %v2179 = vand.u32 %v2101, 2147483648
        %v2180 = vor.u32 1.1754944e-38, %v2179
        %v2181 = vsel %vm2178, %v2180, %v2176
        %v2182 = vmul.f32 %v2054, %v2181
        %v2183 = vrcp.pop %v2106
        %v2184 = vmul.f32 %v2106, %v2183
        %v2185 = vsub.f32 1.0, %v2184
        %v2186 = vmul.f32 %v2183, %v2185
        %v2187 = vadd.f32 %v2183, %v2186
        %vm2188 = vweird.f32 %v2106
        %vm2189 = vweird.f32 %v2183
        %vm2190 = vmor %vm2188, %vm2189
        %v2191 = vsel %vm2190, %v2183, %v2187
        %v2192 = vand.u32 2147483647, %v2106
        %vm2193 = vcmp.eq.f32.partialorder %v2192, 8.507059e+37
        %v2194 = vand.u32 %v2106, 2147483648
        %v2195 = vor.u32 1.1754944e-38, %v2194
        %v2196 = vsel %vm2193, %v2195, %v2191
        %v2197 = vmul.f32 %v2061, %v2196
        %v2198 = vrcp.pop %v2111
        %v2199 = vmul.f32 %v2111, %v2198
        %v2200 = vsub.f32 1.0, %v2199
        %v2201 = vmul.f32 %v2198, %v2200
        %v2202 = vadd.f32 %v2198, %v2201
        %vm2203 = vweird.f32 %v2111
        %vm2204 = vweird.f32 %v2198
        %vm2205 = vmor %vm2203, %vm2204
        %v2206 = vsel %vm2205, %v2198, %v2202
        %v2207 = vand.u32 2147483647, %v2111
        %vm2208 = vcmp.eq.f32.partialorder %v2207, 8.507059e+37
        %v2209 = vand.u32 %v2111, 2147483648
        %v2210 = vor.u32 1.1754944e-38, %v2209
        %v2211 = vsel %vm2208, %v2210, %v2206
        %v2212 = vmul.f32 %v2068, %v2211
        %v2213 = vrcp.pop %v2116
        %v2214 = vmul.f32 %v2116, %v2213
        %v2215 = vsub.f32 1.0, %v2214
        %v2216 = vmul.f32 %v2213, %v2215
        %v2217 = vadd.f32 %v2213, %v2216
        %vm2218 = vweird.f32 %v2116
        %vm2219 = vweird.f32 %v2213
        %vm2220 = vmor %vm2218, %vm2219
        %v2221 = vsel %vm2220, %v2213, %v2217
        %v2222 = vand.u32 2147483647, %v2116
        %vm2223 = vcmp.eq.f32.partialorder %v2222, 8.507059e+37
        %v2224 = vand.u32 %v2116, 2147483648
        %v2225 = vor.u32 1.1754944e-38, %v2224
        %v2226 = vsel %vm2223, %v2225, %v2221
        %v2227 = vmul.f32 %v2075, %v2226
        %v2228 = vrcp.pop %v2121
        %v2229 = vmul.f32 %v2121, %v2228
        %v2230 = vsub.f32 1.0, %v2229
        %v2231 = vmul.f32 %v2228, %v2230
        %v2232 = vadd.f32 %v2228, %v2231
        %vm2233 = vweird.f32 %v2121
        %vm2234 = vweird.f32 %v2228
        %vm2235 = vmor %vm2233, %vm2234
        %v2236 = vsel %vm2235, %v2228, %v2232
        %v2237 = vand.u32 2147483647, %v2121
        %vm2238 = vcmp.eq.f32.partialorder %v2237, 8.507059e+37
        %v2239 = vand.u32 %v2121, 2147483648
        %v2240 = vor.u32 1.1754944e-38, %v2239
        %v2241 = vsel %vm2238, %v2240, %v2236
        %v2242 = vmul.f32 %v2082, %v2241
        %v2243 = vmul.f32 %v1870, %v2137
        %v2244 = vmul.f32 %v1872, %v2152
        %v2245 = vmul.f32 %v1875, %v2167
        %v2246 = vmul.f32 %v1877, %v2182
        %v2247 = vmul.f32 %v1880, %v2197
        %v2248 = vmul.f32 %v1882, %v2212
        %v2249 = vmul.f32 %v1885, %v2227
        %v2250 = vmul.f32 %v1887, %v2242
        %v2251 = vsel %vm638, %v2243, 0.0
        %2252 = vadd.xlane.f32.xlu0 %v2251
        %v2253 = vpop.xlane.xlu0 %2252
        %v2254 = vsel %vm638, %v2244, 0.0
        %2255 = vadd.xlane.f32.xlu0 %v2254
        %v2256 = vpop.xlane.xlu0 %2255
        %v2257 = vsel %vm638, %v2245, 0.0
        %2258 = vadd.xlane.f32.xlu0 %v2257
        %v2259 = vpop.xlane.xlu0 %2258
        %v2260 = vsel %vm638, %v2246, 0.0
        %2261 = vadd.xlane.f32.xlu0 %v2260
        %v2262 = vpop.xlane.xlu0 %2261
        %v2263 = vsel %vm638, %v2247, 0.0
        %2264 = vadd.xlane.f32.xlu0 %v2263
        %v2265 = vpop.xlane.xlu0 %2264
        %v2266 = vsel %vm638, %v2248, 0.0
        %2267 = vadd.xlane.f32.xlu0 %v2266
        %v2268 = vpop.xlane.xlu0 %2267
        %v2269 = vsel %vm638, %v2249, 0.0
        %2270 = vadd.xlane.f32.xlu0 %v2269
        %v2271 = vpop.xlane.xlu0 %2270
        %v2272 = vsel %vm638, %v2250, 0.0
        %2273 = vadd.xlane.f32.xlu0 %v2272
        %v2274 = vpop.xlane.xlu0 %2273
        %v2275 = vmul.f32 %v2253, 0.17677669
        %v2276 = vmul.f32 %v2256, 0.17677669
        %v2277 = vmul.f32 %v2259, 0.17677669
        %v2278 = vmul.f32 %v2262, 0.17677669
        %v2279 = vmul.f32 %v2265, 0.17677669
        %v2280 = vmul.f32 %v2268, 0.17677669
        %v2281 = vmul.f32 %v2271, 0.17677669
        %v2282 = vmul.f32 %v2274, 0.17677669
        %v2283 = vadd.f32 %v2275, %v1906
        %v2284 = vadd.f32 %v2276, %v1907
        %v2285 = vadd.f32 %v2277, %v1908
        %v2286 = vadd.f32 %v2278, %v1909
        %v2287 = vadd.f32 %v2279, %v1910
        %v2288 = vadd.f32 %v2280, %v1911
        %v2289 = vadd.f32 %v2281, %v1912
        %v2290 = vadd.f32 %v2282, %v1913
        %v2291 = vsel %vm1914, %v2283, -inf
        %v2292 = vrot.slane %v2291, 4
        %v2293 = vmax.f32 %v2291, %v2292
        %v2294 = vrot.slane %v2293, 2
        %v2295 = vmax.f32 %v2293, %v2294
        %v2296 = vrot.slane %v2295, 1
        %v2297 = vmax.f32 %v2295, %v2296
        %v2298 = vsel %vm1914, %v2284, -inf
        %v2299 = vrot.slane %v2298, 4
        %v2300 = vmax.f32 %v2298, %v2299
        %v2301 = vrot.slane %v2300, 2
        %v2302 = vmax.f32 %v2300, %v2301
        %v2303 = vrot.slane %v2302, 1
        %v2304 = vmax.f32 %v2302, %v2303
        %v2305 = vsel %vm1914, %v2285, -inf
        %v2306 = vrot.slane %v2305, 4
        %v2307 = vmax.f32 %v2305, %v2306
        %v2308 = vrot.slane %v2307, 2
        %v2309 = vmax.f32 %v2307, %v2308
        %v2310 = vrot.slane %v2309, 1
        %v2311 = vmax.f32 %v2309, %v2310
        %v2312 = vsel %vm1914, %v2286, -inf
        %v2313 = vrot.slane %v2312, 4
        %v2314 = vmax.f32 %v2312, %v2313
        %v2315 = vrot.slane %v2314, 2
        %v2316 = vmax.f32 %v2314, %v2315
        %v2317 = vrot.slane %v2316, 1
        %v2318 = vmax.f32 %v2316, %v2317
        %v2319 = vsel %vm1914, %v2287, -inf
        %v2320 = vrot.slane %v2319, 4
        %v2321 = vmax.f32 %v2319, %v2320
        %v2322 = vrot.slane %v2321, 2
        %v2323 = vmax.f32 %v2321, %v2322
        %v2324 = vrot.slane %v2323, 1
        %v2325 = vmax.f32 %v2323, %v2324
        %v2326 = vsel %vm1914, %v2288, -inf
        %v2327 = vrot.slane %v2326, 4
        %v2328 = vmax.f32 %v2326, %v2327
        %v2329 = vrot.slane %v2328, 2
        %v2330 = vmax.f32 %v2328, %v2329
        %v2331 = vrot.slane %v2330, 1
        %v2332 = vmax.f32 %v2330, %v2331
        %v2333 = vsel %vm1914, %v2289, -inf
        %v2334 = vrot.slane %v2333, 4
        %v2335 = vmax.f32 %v2333, %v2334
        %v2336 = vrot.slane %v2335, 2
        %v2337 = vmax.f32 %v2335, %v2336
        %v2338 = vrot.slane %v2337, 1
        %v2339 = vmax.f32 %v2337, %v2338
        %v2340 = vsel %vm1914, %v2290, -inf
        %v2341 = vrot.slane %v2340, 4
        %v2342 = vmax.f32 %v2340, %v2341
        %v2343 = vrot.slane %v2342, 2
        %v2344 = vmax.f32 %v2342, %v2343
        %v2345 = vrot.slane %v2344, 1
        %v2346 = vmax.f32 %v2344, %v2345
        %v2347 = vsub.f32 %v2283, %v2297
        %v2348 = vsub.f32 %v2284, %v2304
        %v2349 = vsub.f32 %v2285, %v2311
        %v2350 = vsub.f32 %v2286, %v2318
        %v2351 = vsub.f32 %v2287, %v2325
        %v2352 = vsub.f32 %v2288, %v2332
        %v2353 = vsub.f32 %v2289, %v2339
        %v2354 = vsub.f32 %v2290, %v2346
        %v2355 = vmul.f32 %v2347, 1.442695
        %v2356 = vpow.pop %v2355
        %v2357 = vmul.f32 %v2348, 1.442695
        %v2358 = vpow.pop %v2357
        %v2359 = vmul.f32 %v2349, 1.442695
        %v2360 = vpow.pop %v2359
        %v2361 = vmul.f32 %v2350, 1.442695
        %v2362 = vpow.pop %v2361
        %v2363 = vmul.f32 %v2351, 1.442695
        %v2364 = vpow.pop %v2363
        %v2365 = vmul.f32 %v2352, 1.442695
        %v2366 = vpow.pop %v2365
        %v2367 = vmul.f32 %v2353, 1.442695
        %v2368 = vpow.pop %v2367
        %v2369 = vmul.f32 %v2354, 1.442695
        %v2370 = vpow.pop %v2369
        %v2371 = vsel %vm1914, %v2356, 0.0
        %v2372 = vrot.slane %v2371, 4
        %v2373 = vadd.f32 %v2371, %v2372
        %v2374 = vrot.slane %v2373, 2
        %v2375 = vadd.f32 %v2373, %v2374
        %v2376 = vrot.slane %v2375, 1
        %v2377 = vadd.f32 %v2375, %v2376
        %v2378 = vsel %vm1914, %v2358, 0.0
        %v2379 = vrot.slane %v2378, 4
        %v2380 = vadd.f32 %v2378, %v2379
        %v2381 = vrot.slane %v2380, 2
        %v2382 = vadd.f32 %v2380, %v2381
        %v2383 = vrot.slane %v2382, 1
        %v2384 = vadd.f32 %v2382, %v2383
        %v2385 = vsel %vm1914, %v2360, 0.0
        %v2386 = vrot.slane %v2385, 4
        %v2387 = vadd.f32 %v2385, %v2386
        %v2388 = vrot.slane %v2387, 2
        %v2389 = vadd.f32 %v2387, %v2388
        %v2390 = vrot.slane %v2389, 1
        %v2391 = vadd.f32 %v2389, %v2390
        %v2392 = vsel %vm1914, %v2362, 0.0
        %v2393 = vrot.slane %v2392, 4
        %v2394 = vadd.f32 %v2392, %v2393
        %v2395 = vrot.slane %v2394, 2
        %v2396 = vadd.f32 %v2394, %v2395
        %v2397 = vrot.slane %v2396, 1
        %v2398 = vadd.f32 %v2396, %v2397
        %v2399 = vsel %vm1914, %v2364, 0.0
        %v2400 = vrot.slane %v2399, 4
        %v2401 = vadd.f32 %v2399, %v2400
        %v2402 = vrot.slane %v2401, 2
        %v2403 = vadd.f32 %v2401, %v2402
        %v2404 = vrot.slane %v2403, 1
        %v2405 = vadd.f32 %v2403, %v2404
        %v2406 = vsel %vm1914, %v2366, 0.0
        %v2407 = vrot.slane %v2406, 4
        %v2408 = vadd.f32 %v2406, %v2407
        %v2409 = vrot.slane %v2408, 2
        %v2410 = vadd.f32 %v2408, %v2409
        %v2411 = vrot.slane %v2410, 1
        %v2412 = vadd.f32 %v2410, %v2411
        %v2413 = vsel %vm1914, %v2368, 0.0
        %v2414 = vrot.slane %v2413, 4
        %v2415 = vadd.f32 %v2413, %v2414
        %v2416 = vrot.slane %v2415, 2
        %v2417 = vadd.f32 %v2415, %v2416
        %v2418 = vrot.slane %v2417, 1
        %v2419 = vadd.f32 %v2417, %v2418
        %v2420 = vsel %vm1914, %v2370, 0.0
        %v2421 = vrot.slane %v2420, 4
        %v2422 = vadd.f32 %v2420, %v2421
        %v2423 = vrot.slane %v2422, 2
        %v2424 = vadd.f32 %v2422, %v2423
        %v2425 = vrot.slane %v2424, 1
        %v2426 = vadd.f32 %v2424, %v2425
        %v2427 = vrcp.pop %v2377
        %v2428 = vmul.f32 %v2377, %v2427
        %v2429 = vsub.f32 1.0, %v2428
        %v2430 = vmul.f32 %v2427, %v2429
        %v2431 = vadd.f32 %v2427, %v2430
        %vm2432 = vweird.f32 %v2377
        %vm2433 = vweird.f32 %v2427
        %vm2434 = vmor %vm2432, %vm2433
        %v2435 = vsel %vm2434, %v2427, %v2431
        %v2436 = vand.u32 2147483647, %v2377
        %vm2437 = vcmp.eq.f32.partialorder %v2436, 8.507059e+37
        %v2438 = vand.u32 %v2377, 2147483648
        %v2439 = vor.u32 1.1754944e-38, %v2438
        %v2440 = vsel %vm2437, %v2439, %v2435
        %v2441 = vmul.f32 %v2356, %v2440
        %v2442 = vrcp.pop %v2384
        %v2443 = vmul.f32 %v2384, %v2442
        %v2444 = vsub.f32 1.0, %v2443
        %v2445 = vmul.f32 %v2442, %v2444
        %v2446 = vadd.f32 %v2442, %v2445
        %vm2447 = vweird.f32 %v2384
        %vm2448 = vweird.f32 %v2442
        %vm2449 = vmor %vm2447, %vm2448
        %v2450 = vsel %vm2449, %v2442, %v2446
        %v2451 = vand.u32 2147483647, %v2384
        %vm2452 = vcmp.eq.f32.partialorder %v2451, 8.507059e+37
        %v2453 = vand.u32 %v2384, 2147483648
        %v2454 = vor.u32 1.1754944e-38, %v2453
        %v2455 = vsel %vm2452, %v2454, %v2450
        %v2456 = vmul.f32 %v2358, %v2455
        %v2457 = vrcp.pop %v2391
        %v2458 = vmul.f32 %v2391, %v2457
        %v2459 = vsub.f32 1.0, %v2458
        %v2460 = vmul.f32 %v2457, %v2459
        %v2461 = vadd.f32 %v2457, %v2460
        %vm2462 = vweird.f32 %v2391
        %vm2463 = vweird.f32 %v2457
        %vm2464 = vmor %vm2462, %vm2463
        %v2465 = vsel %vm2464, %v2457, %v2461
        %v2466 = vand.u32 2147483647, %v2391
        %vm2467 = vcmp.eq.f32.partialorder %v2466, 8.507059e+37
        %v2468 = vand.u32 %v2391, 2147483648
        %v2469 = vor.u32 1.1754944e-38, %v2468
        %v2470 = vsel %vm2467, %v2469, %v2465
        %v2471 = vmul.f32 %v2360, %v2470
        %v2472 = vrcp.pop %v2398
        %v2473 = vmul.f32 %v2398, %v2472
        %v2474 = vsub.f32 1.0, %v2473
        %v2475 = vmul.f32 %v2472, %v2474
        %v2476 = vadd.f32 %v2472, %v2475
        %vm2477 = vweird.f32 %v2398
        %vm2478 = vweird.f32 %v2472
        %vm2479 = vmor %vm2477, %vm2478
        %v2480 = vsel %vm2479, %v2472, %v2476
        %v2481 = vand.u32 2147483647, %v2398
        %vm2482 = vcmp.eq.f32.partialorder %v2481, 8.507059e+37
        %v2483 = vand.u32 %v2398, 2147483648
        %v2484 = vor.u32 1.1754944e-38, %v2483
        %v2485 = vsel %vm2482, %v2484, %v2480
        %v2486 = vmul.f32 %v2362, %v2485
        %v2487 = vrcp.pop %v2405
        %v2488 = vmul.f32 %v2405, %v2487
        %v2489 = vsub.f32 1.0, %v2488
        %v2490 = vmul.f32 %v2487, %v2489
        %v2491 = vadd.f32 %v2487, %v2490
        %vm2492 = vweird.f32 %v2405
        %vm2493 = vweird.f32 %v2487
        %vm2494 = vmor %vm2492, %vm2493
        %v2495 = vsel %vm2494, %v2487, %v2491
        %v2496 = vand.u32 2147483647, %v2405
        %vm2497 = vcmp.eq.f32.partialorder %v2496, 8.507059e+37
        %v2498 = vand.u32 %v2405, 2147483648
        %v2499 = vor.u32 1.1754944e-38, %v2498
        %v2500 = vsel %vm2497, %v2499, %v2495
        %v2501 = vmul.f32 %v2364, %v2500
        %v2502 = vrcp.pop %v2412
        %v2503 = vmul.f32 %v2412, %v2502
        %v2504 = vsub.f32 1.0, %v2503
        %v2505 = vmul.f32 %v2502, %v2504
        %v2506 = vadd.f32 %v2502, %v2505
        %vm2507 = vweird.f32 %v2412
        %vm2508 = vweird.f32 %v2502
        %vm2509 = vmor %vm2507, %vm2508
        %v2510 = vsel %vm2509, %v2502, %v2506
        %v2511 = vand.u32 2147483647, %v2412
        %vm2512 = vcmp.eq.f32.partialorder %v2511, 8.507059e+37
        %v2513 = vand.u32 %v2412, 2147483648
        %v2514 = vor.u32 1.1754944e-38, %v2513
        %v2515 = vsel %vm2512, %v2514, %v2510
        %v2516 = vmul.f32 %v2366, %v2515
        %v2517 = vrcp.pop %v2419
        %v2518 = vmul.f32 %v2419, %v2517
        %v2519 = vsub.f32 1.0, %v2518
        %v2520 = vmul.f32 %v2517, %v2519
        %v2521 = vadd.f32 %v2517, %v2520
        %vm2522 = vweird.f32 %v2419
        %vm2523 = vweird.f32 %v2517
        %vm2524 = vmor %vm2522, %vm2523
        %v2525 = vsel %vm2524, %v2517, %v2521
        %v2526 = vand.u32 2147483647, %v2419
        %vm2527 = vcmp.eq.f32.partialorder %v2526, 8.507059e+37
        %v2528 = vand.u32 %v2419, 2147483648
        %v2529 = vor.u32 1.1754944e-38, %v2528
        %v2530 = vsel %vm2527, %v2529, %v2525
        %v2531 = vmul.f32 %v2368, %v2530
        %v2532 = vrcp.pop %v2426
        %v2533 = vmul.f32 %v2426, %v2532
        %v2534 = vsub.f32 1.0, %v2533
        %v2535 = vmul.f32 %v2532, %v2534
        %v2536 = vadd.f32 %v2532, %v2535
        %vm2537 = vweird.f32 %v2426
        %vm2538 = vweird.f32 %v2532
        %vm2539 = vmor %vm2537, %vm2538
        %v2540 = vsel %vm2539, %v2532, %v2536
        %v2541 = vand.u32 2147483647, %v2426
        %vm2542 = vcmp.eq.f32.partialorder %v2541, 8.507059e+37
        %v2543 = vand.u32 %v2426, 2147483648
        %v2544 = vor.u32 1.1754944e-38, %v2543
        %v2545 = vsel %vm2542, %v2544, %v2540
        %v2546 = vmul.f32 %v2370, %v2545
        %2548 = vset.pattern.permute.xlu0 0
        %2549 = vperm.xlu0 %2548, %v2441
        %v2550 = vpop.permute.xlu0 %2549
        %2553 = vset.pattern.permute.xlu0 0
        %2554 = vperm.xlu0 %2553, %v2456
        %v2555 = vpop.permute.xlu0 %2554
        %2558 = vset.pattern.permute.xlu0 0
        %2559 = vperm.xlu0 %2558, %v2471
        %v2560 = vpop.permute.xlu0 %2559
        %2563 = vset.pattern.permute.xlu0 0
        %2564 = vperm.xlu0 %2563, %v2486
        %v2565 = vpop.permute.xlu0 %2564
        %2568 = vset.pattern.permute.xlu0 0
        %2569 = vperm.xlu0 %2568, %v2501
        %v2570 = vpop.permute.xlu0 %2569
        %2573 = vset.pattern.permute.xlu0 0
        %2574 = vperm.xlu0 %2573, %v2516
        %v2575 = vpop.permute.xlu0 %2574
        %2578 = vset.pattern.permute.xlu0 0
        %2579 = vperm.xlu0 %2578, %v2531
        %v2580 = vpop.permute.xlu0 %2579
        %2583 = vset.pattern.permute.xlu0 0
        %2584 = vperm.xlu0 %2583, %v2546
        %v2585 = vpop.permute.xlu0 %2584
        %v2587 = vmul.f32 %v1870, %v2550
        %v2588 = vmul.f32 %v1872, %v2555
        %v2589 = vmul.f32 %v1875, %v2560
        %v2590 = vmul.f32 %v1877, %v2565
        %v2591 = vmul.f32 %v1880, %v2570
        %v2592 = vmul.f32 %v1882, %v2575
        %v2593 = vmul.f32 %v1885, %v2580
        %v2594 = vmul.f32 %v1887, %v2585
        %v2595 = vsel %vm638, %v2587, 0.0
        %v2596 = vrot.slane %v2595, 4
        %v2597 = vadd.f32 %v2595, %v2596
        %v2598 = vrot.slane %v2597, 2
        %v2599 = vadd.f32 %v2597, %v2598
        %v2600 = vrot.slane %v2599, 1
        %v2601 = vadd.f32 %v2599, %v2600
        %v2602 = vsel %vm638, %v2588, 0.0
        %v2603 = vrot.slane %v2602, 4
        %v2604 = vadd.f32 %v2602, %v2603
        %v2605 = vrot.slane %v2604, 2
        %v2606 = vadd.f32 %v2604, %v2605
        %v2607 = vrot.slane %v2606, 1
        %v2608 = vadd.f32 %v2606, %v2607
        %v2609 = vsel %vm638, %v2589, 0.0
        %v2610 = vrot.slane %v2609, 4
        %v2611 = vadd.f32 %v2609, %v2610
        %v2612 = vrot.slane %v2611, 2
        %v2613 = vadd.f32 %v2611, %v2612
        %v2614 = vrot.slane %v2613, 1
        %v2615 = vadd.f32 %v2613, %v2614
        %v2616 = vsel %vm638, %v2590, 0.0
        %v2617 = vrot.slane %v2616, 4
        %v2618 = vadd.f32 %v2616, %v2617
        %v2619 = vrot.slane %v2618, 2
        %v2620 = vadd.f32 %v2618, %v2619
        %v2621 = vrot.slane %v2620, 1
        %v2622 = vadd.f32 %v2620, %v2621
        %v2623 = vsel %vm638, %v2591, 0.0
        %v2624 = vrot.slane %v2623, 4
        %v2625 = vadd.f32 %v2623, %v2624
        %v2626 = vrot.slane %v2625, 2
        %v2627 = vadd.f32 %v2625, %v2626
        %v2628 = vrot.slane %v2627, 1
        %v2629 = vadd.f32 %v2627, %v2628
        %v2630 = vsel %vm638, %v2592, 0.0
        %v2631 = vrot.slane %v2630, 4
        %v2632 = vadd.f32 %v2630, %v2631
        %v2633 = vrot.slane %v2632, 2
        %v2634 = vadd.f32 %v2632, %v2633
        %v2635 = vrot.slane %v2634, 1
        %v2636 = vadd.f32 %v2634, %v2635
        %v2637 = vsel %vm638, %v2593, 0.0
        %v2638 = vrot.slane %v2637, 4
        %v2639 = vadd.f32 %v2637, %v2638
        %v2640 = vrot.slane %v2639, 2
        %v2641 = vadd.f32 %v2639, %v2640
        %v2642 = vrot.slane %v2641, 1
        %v2643 = vadd.f32 %v2641, %v2642
        %v2644 = vsel %vm638, %v2594, 0.0
        %v2645 = vrot.slane %v2644, 4
        %v2646 = vadd.f32 %v2644, %v2645
        %v2647 = vrot.slane %v2646, 2
        %v2648 = vadd.f32 %v2646, %v2647
        %v2649 = vrot.slane %v2648, 1
        %v2650 = vadd.f32 %v2648, %v2649
        %v2651 = vpack.c.bf16 %v2601, %v2601
        %v2652 = vpack.c.bf16 %v2608, %v2608
        %v2653 = vpack.c.bf16 %v2615, %v2615
        %v2654 = vpack.c.bf16 %v2622, %v2622
        %v2655 = vpack.c.bf16 %v2629, %v2629
        %v2656 = vpack.c.bf16 %v2636, %v2636
        %v2657 = vpack.c.bf16 %v2643, %v2643
        %v2658 = vpack.c.bf16 %v2650, %v2650
        %v2659 = vld [vmem:[%s12] sm:$0xf]
        %v2660 = vld [vmem:[%s12 + $0x4] sm:$0xf]
        %v2661 = vld [vmem:[%s12 + $0x8] sm:$0xf]
        %v2662 = vld [vmem:[%s12 + $0xc] sm:$0xf]
        %v2663 = vld [vmem:[%s13] sm:$0x1]
        %v2665 = vperm.slane %v2663, 0
        %v2675 = vunpack.c.l.b16 %v2651
        %v2676 = vunpack.c.l.b16 %v2652
        %v2677 = vunpack.c.l.b16 %v2653
        %v2678 = vunpack.c.l.b16 %v2654
        %v2679 = vunpack.c.l.b16 %v2655
        %v2680 = vunpack.c.l.b16 %v2656
        %v2681 = vunpack.c.l.b16 %v2657
        %v2682 = vunpack.c.l.b16 %v2658
        %vm2683 = vcmask 1041409
        %v2684 = vsel %vm2683, %v2676, %v2675
        %vm2685 = vcmask 1042434
        %v2686 = vsel %vm2685, %v2677, %v2684
        %vm2687 = vcmask 1043459
        %v2688 = vsel %vm2687, %v2678, %v2686
        %vm2689 = vcmask 1044484
        %v2690 = vsel %vm2689, %v2679, %v2688
        %vm2691 = vcmask 1045509
        %v2692 = vsel %vm2691, %v2680, %v2690
        %vm2693 = vcmask 1046534
        %v2694 = vsel %vm2693, %v2681, %v2692
        %vm2695 = vcmask 1047559
        %v2696 = vsel %vm2695, %v2682, %v2694
        %v2697 = vpack.c.b16 %v2696, %v2696
        %v2702 = vunpack.c.l.b16 %v2659
        %v2703 = vunpack.c.l.b16 %v2660
        %v2704 = vunpack.c.l.b16 %v2661
        %v2705 = vunpack.c.l.b16 %v2662
        %v2706 = vpack.c.b16 %v2703, %v2702
        %v2707 = vpack.c.b16 %v2705, %v2704
        %v2711 = vsel %vm638, %v2697, 0
        %2713 = vmatpush.bf16.msra.mxu0 0
        %2714 = vmatpush.bf16.msra.mxu0 0
        %2715 = vmatpush.bf16.msra.mxu0 0
        %2716 = vmatpush.bf16.msra.mxu0 0
        %2717 = vmatpush.bf16.msra.mxu0 0
        %2718 = vmatpush.bf16.msra.mxu0 0
        %2719 = vmatpush.bf16.msra.mxu0 %v2707
        %2720 = vmatpush.bf16.msra.mxu0 %v2706
        %2721 = vmatmul.bf16.gmra.mxu0 %v2711
        %v2722 = vpop.f32.mrf.mxu0
        %v2723 = vadd.f32 %v2665, %v2722
        %v2724 = vpop.f32.mrf.mxu0
        %2725 = vdwg.mxu0
        %2726 = vst.msk [vmem:[%s529] sm:$0xff] %vm638, %v2723
        %s2727 = sand.u32 %s350, 1
        %s2728 = scalar_lea.sflag [#allocation3], %s2727
        %s2729 = sand.u32 %s350, 1
        %s2730 = smul.addr %s2729, 32
        %s2731 = scalar_lea.vmem [#allocation2], %s2730
        %s2732 = sand.u32 %s376, 1
        %s2733 = scalar_lea.sflag [#allocation5], %s2732
        %s2734 = sand.u32 %s376, 1
        %s2735 = smul.addr %s2734, 8
        %s2736 = scalar_lea.vmem [#allocation4], %s2735
        // Predicated region
        $region77: #{tpu_custom_call.1} parent=75 // pred_check
          %p2737 = pneg %p360
        $region78: #{tpu_custom_call.1} parent=75 // pred_check_branch
          %2739 = sbr.rel (%p2737) target = $region80
        $region79: #{tpu_custom_call.1} parent=75 // pred_region
          %s2740 = smul.u32 8, %s33
          %2742 = vsyncadd %s2728, 0
          %s2743 = smul.addr %s2740, 4
          %s2744 = scalar_lea.hbm %s14, %s2743
          %s2745 = sshll.u32 %s2731, 4
          %s2746 = int_to_ptr.vmem [resolvable:$true] %s2745
          %s2747 = sshll.u32 %s2744, 4
          %s2748 = int_to_ptr.hbm [resolvable:$true] %s2747
          %2753 = dma.vmem_to_hbm [thread:$0]  %s2746, 512, %s2748, %s2728, 64, 64, 4
        $region80: #{tpu_custom_call.1} parent=75 // pred_fallthru
          _
        // Predicated region
        $region81: #{tpu_custom_call.1} parent=75 // pred_check
          %p2754 = pneg %p386
        $region82: #{tpu_custom_call.1} parent=75 // pred_check_branch
          %2756 = sbr.rel (%p2754) target = $region84
        $region83: #{tpu_custom_call.1} parent=75 // pred_region
          %2758 = vsyncadd %s2733, 0
          %s2759 = smul.addr %s33, 8
          %s2760 = scalar_lea.hbm %s15, %s2759
          %s2762 = sshll.u32 %s2736, 4
          %s2763 = int_to_ptr.vmem [resolvable:$true] %s2762
          %s2764 = sshll.u32 %s2760, 4
          %s2765 = int_to_ptr.hbm [resolvable:$true] %s2764
          %2767 = dma.vmem_to_hbm [thread:$0]  %s2763, 128, %s2765, %s2733
        $region84: #{tpu_custom_call.1} parent=75 // pred_fallthru
          _
      $region76: #{tpu_custom_call.1} parent=5 // pred_fallthru
        _
      %p2768 = scmp.le.s32.totalorder 2, %s28
      // Predicated region
      $region85: #{tpu_custom_call.1} parent=5 // pred_check
        %p2769 = pneg %p2768
      $region86: #{tpu_custom_call.1} parent=5 // pred_check_branch
        %2771 = sbr.rel (%p2769) target = $region88
      $region87: #{tpu_custom_call.1} parent=5 // pred_region
        %s2772 = ssub.s32 %s28, 2
        // Predicated region
        $region89: #{tpu_custom_call.1} parent=87 // pred_check
          %p2773 = pneg %p366
        $region90: #{tpu_custom_call.1} parent=87 // pred_check_branch
          %2775 = sbr.rel (%p2773) target = $region92
        $region91: #{tpu_custom_call.1} parent=87 // pred_region
          %s2776 = sand.u32 %s351, 1
          %s2777 = scalar_lea.sflag [#allocation3], %s2776
          %s2778 = sand.u32 %s351, 1
          %s2779 = smul.addr %s2778, 32
          %s2780 = scalar_lea.vmem [#allocation2], %s2779
          %2782 = dma.done %s2777, 512
        $region92: #{tpu_custom_call.1} parent=87 // pred_fallthru
          _
        // Predicated region
        $region93: #{tpu_custom_call.1} parent=87 // pred_check
          %p2783 = pneg %p392
        $region94: #{tpu_custom_call.1} parent=87 // pred_check_branch
          %2785 = sbr.rel (%p2783) target = $region96
        $region95: #{tpu_custom_call.1} parent=87 // pred_region
          %s2786 = sand.u32 %s377, 1
          %s2787 = scalar_lea.sflag [#allocation5], %s2786
          %s2788 = sand.u32 %s377, 1
          %s2789 = smul.addr %s2788, 8
          %s2790 = scalar_lea.vmem [#allocation4], %s2789
          %2792 = dma.done %s2787, 128
        $region96: #{tpu_custom_call.1} parent=87 // pred_fallthru
          _
      $region88: #{tpu_custom_call.1} parent=5 // pred_fallthru
        _
    $region6: #{tpu_custom_call.1} parent=1 // loop_footer
      %s32 = sadd.s32 1, %s28
    $region7: #{tpu_custom_call.1} parent=1 // loop_footer_branch
      %27 = sbr.rel target = $region3
    $region8: #{tpu_custom_call.1} parent=1 // loop_exit
      _
    %2793 = vsyncpa [#allocation3], 1
    %s2794 = scalar_lea.sflag [#allocation3], 1
    %2795 = vsyncpa %s2794, 1
    %2796 = vsyncpa [#allocation5], 1
    %s2797 = scalar_lea.sflag [#allocation5], 1
    %2798 = vsyncpa %s2797, 1

</llo_original>
